<compile_context>
chip_gen: v7x
topology: tpu7x:2x2x1
jax: 0.10.0
libtpu: 0.0.40
codegen_flags: <defaults>
</compile_context>

<pallas_src>
import functools

import jax
import jax.numpy as jnp
from jax.experimental import pallas as pl
from jax.experimental.pallas import tpu as pltpu


def _mainnet_kernel(w0_ref, b0_ref, x_ref, pool_ref, wh_ref, bh_ref,
                    heads_ref, vl_ref, vt_ref, *,
                    HW, c_in, ch, pp, nc, bit, compute_dtype):
    """One grid step == TB images.

    w0_ref   : SMEM [Cin, ch]       stand-in 1x1-conv weight
    b0_ref   : SMEM [1, ch]
    x_ref    : VMEM [TB, Cin*HW]    NCHW flattened per image (lane-dense)
    pool_ref : VMEM [ch*HW, VLPAD]  block-diagonal part-averaging matrix
    wh_ref   : VMEM [ch, NPAD]      fused (rawcls | hash | identity-for-g)
    bh_ref   : VMEM [1, NPAD]
    heads_ref: VMEM [TB, NPAD]      lanes [0:nc)=y_hat, [nc:nc+bit)=tanh(hash),
                                    [nc+bit:nc+bit+ch)=g
    vl_ref   : VMEM [TB, VLPAD]     part-major local features, lane j=p*ch+c
    vt_ref   : VMEM [TB, ch*HW]     scratch feature map (flat, lane-dense)
    """
    # --- stand-in backbone: 1x1 conv + ReLU, written channel-by-channel into
    #     the flat [TB, ch*HW] layout.  K = Cin is far too small for the MXU,
    #     so this stays on the VPU; weight scalars come from SMEM and ride the
    #     scalar slots.  (With compute_dtype=bf16 on v6e/v7x this halves the
    #     VALU work and vt's VMEM footprint.)
    xs = [x_ref[:, i * HW:(i + 1) * HW] for i in range(c_in)]
    for c in range(ch):
        acc = w0_ref[0, c].astype(compute_dtype) * xs[0]
        for i in range(1, c_in):
            acc = acc + w0_ref[i, c].astype(compute_dtype) * xs[i]
        acc = acc + b0_ref[0, c].astype(compute_dtype)
        vt_ref[:, c * HW:(c + 1) * HW] = jnp.maximum(acc, 0).astype(compute_dtype)

    # --- cal_local_feature: adaptive average pooling into pp parts as ONE MXU
    #     matmul.  The block-diagonal pool matrix directly produces the
    #     part-major, lane-dense [TB, PP*ch] slab (column j = p*ch + c), so no
    #     in-kernel reshuffle/concatenate is needed.
    vl = jnp.dot(vt_ref[...], pool_ref[...],
                 preferred_element_type=jnp.float32)            # [TB, VLPAD]
    vl_ref[...] = vl

    # --- global feature = mean of the part averages (parts tile the image
    #     exactly, so this equals the global average pool).
    g = vl[:, 0:ch]
    for p in range(1, pp):
        g = g + vl[:, p * ch:(p + 1) * ch]
    g = g * (1.0 / float(pp))                                   # [TB, ch] f32

    # --- fused heads: rawcls_net | hash_layer | identity(g) in one lane-dense
    #     matmul; tanh is applied only to the hash lanes via a lane mask.
    heads = jnp.dot(g, wh_ref[...],
                    preferred_element_type=jnp.float32) + bh_ref[...]
    lane = jax.lax.broadcasted_iota(jnp.int32, heads.shape, 1)
    is_hash = (lane >= nc) & (lane < nc + bit)
    heads_ref[...] = jnp.where(is_hash, jnp.tanh(heads), heads)


def mainnet_forward(x_nchw, params, num_parts, *, batch_block=256,
                    compute_dtype=jnp.float32):
    """Train-mode forward: returns (y_hat, hash_code, select_v_l).

    batch_block:   batch-tile upper bound.  256 keeps live VMEM well under
                   v7x's 64 MiB; v5e/v6e (128 MiB) could also take 512.
    compute_dtype: jnp.float32 (safe everywhere) or jnp.bfloat16 (v6e/v7x only;
                   v5e has no bf16 VPU).
    """
    B, Cin, H, W = x_nchw.shape
    w0, b0, wc, bc, wh, bh = params
    ch = w0.shape[1]
    nc = wc.shape[1]
    bit = wh.shape[1]
    P = num_parts
    PP = P * P
    HW = H * W

    # TODO(synk): unequal AdaptiveAvgPool2d cells not supported.
    assert H % P == 0 and W % P == 0, "H, W must be divisible by num_parts"

    itemsize = jnp.dtype(compute_dtype).itemsize
    sublane = max(8, 32 // itemsize)          # 8 for f32, 16 for bf16

    # Balanced batch tiles.  On v7x, B >= 2*batch_block gives >= 2 "parallel"
    # grid steps so both TensorCores are busy.
    n_steps = max(1, -(-B // batch_block))
    TB = -(-B // n_steps)
    if n_steps > 1:
        TB = -(-TB // sublane) * sublane      # sublane-align tiled batch dim
    Bp = n_steps * TB

    # NCHW -> [B, Cin*HW]: contiguous reshape only (lane-dense x tiles).
    x3 = x_nchw.reshape(B, Cin * HW).astype(compute_dtype)
    if Bp != B:
        x3 = jnp.pad(x3, ((0, Bp - B), (0, 0)))

    # Block-diagonal averaging matrix: rows k = c*HW + h, cols j = p*ch + c'.
    # pool[k, j] = 1/cell  iff  c == c' and pixel h lies in part p, else 0.
    cell_h, cell_w = H // P, W // P
    PPch = PP * ch
    VLPAD = ((PPch + 127) // 128) * 128
    k = jnp.arange(ch * HW)
    c_of_k = k // HW
    h_of_k = k % HW
    p_of_k = ((h_of_k // W) // cell_h) * P + (h_of_k % W) // cell_w
    j = jnp.arange(VLPAD)
    c_of_j = j % ch
    p_of_j = j // ch
    valid_j = j < PPch
    pool = jnp.where((c_of_k[:, None] == c_of_j[None, :])
                     & (p_of_k[:, None] == p_of_j[None, :])
                     & valid_j[None, :],
                     1.0 / float(cell_h * cell_w), 0.0).astype(compute_dtype)

    # Fused head weight: columns [0:nc)=rawcls, [nc:nc+bit)=hash,
    # [nc+bit:nc+bit+ch)=identity (packs g into the same lane-dense output).
    n_used = nc + bit + ch
    NPAD = ((n_used + 127) // 128) * 128
    w_heads = jnp.zeros((ch, NPAD), jnp.float32)
    w_heads = w_heads.at[:, :nc].set(wc.astype(jnp.float32))
    w_heads = w_heads.at[:, nc:nc + bit].set(wh.astype(jnp.float32))
    w_heads = w_heads.at[:, nc + bit:n_used].set(jnp.eye(ch, dtype=jnp.float32))
    b_heads = jnp.zeros((1, NPAD), jnp.float32)
    b_heads = b_heads.at[:, :nc].set(bc.astype(jnp.float32))
    b_heads = b_heads.at[:, nc:nc + bit].set(bh.astype(jnp.float32))

    # Tiny conv params -> SMEM (scalar reads in-kernel).
    w0f = w0.astype(jnp.float32)                       # [Cin, ch]
    b0f = b0.reshape(1, ch).astype(jnp.float32)        # [1, ch]

    kernel = functools.partial(_mainnet_kernel, HW=HW, c_in=Cin, ch=ch,
                               pp=PP, nc=nc, bit=bit,
                               compute_dtype=compute_dtype)

    cost = pl.CostEstimate(
        flops=2 * Bp * (Cin * ch * HW + ch * HW * VLPAD + ch * NPAD),
        transcendentals=Bp * NPAD,
        bytes_accessed=(Bp * Cin * HW * itemsize            # x
                        + ch * HW * VLPAD * itemsize        # pool matrix
                        + (ch + 1) * NPAD * 4               # fused heads W/b
                        + (Cin + 1) * ch * 4                # conv W/b
                        + Bp * (NPAD + VLPAD) * 4),         # outputs
    )

    heads, vl = pl.pallas_call(
        kernel,
        out_shape=(
            jax.ShapeDtypeStruct((Bp, NPAD), jnp.float32),
            jax.ShapeDtypeStruct((Bp, VLPAD), jnp.float32),
        ),
        grid_spec=pltpu.PrefetchScalarGridSpec(
            num_scalar_prefetch=0,
            grid=(n_steps,),
            in_specs=[
                pl.BlockSpec(memory_space=pltpu.MemorySpace.SMEM),   # w0
                pl.BlockSpec(memory_space=pltpu.MemorySpace.SMEM),   # b0
                pl.BlockSpec((TB, Cin * HW), lambda b: (b, 0)),      # x tile
                pl.BlockSpec(memory_space=pltpu.MemorySpace.VMEM),   # pool
                pl.BlockSpec(memory_space=pltpu.MemorySpace.VMEM),   # heads W
                pl.BlockSpec(memory_space=pltpu.MemorySpace.VMEM),   # heads b
            ],
            out_specs=[
                pl.BlockSpec((TB, NPAD), lambda b: (b, 0)),          # heads|g
                pl.BlockSpec((TB, VLPAD), lambda b: (b, 0)),         # v_l flat
            ],
            scratch_shapes=[pltpu.VMEM((TB, ch * HW), compute_dtype)],
        ),
        compiler_params=pltpu.CompilerParams(
            dimension_semantics=("parallel",),
            # Above the 16/32 MiB scoped defaults, below v7x's 64 MiB physical.
            vmem_limit_bytes=48 * 1024 * 1024,
        ),
        cost_estimate=cost,
    )(w0f, b0f, x3, pool, w_heads, b_heads)

    # Strip batch padding; unpack the lane-dense slabs (tiny arrays, XLA side).
    heads = heads[:B]
    y_hat = heads[:, :nc]
    hash_code = heads[:, nc:nc + bit]          # tanh already applied in-kernel
    g = heads[:, nc + bit:n_used]
    v_l = vl[:B, :PPch].reshape(B, PP, ch)

    # dis = sum(sqrt((repeat_g - v_l)**2), dim=2)  == L1 distance to g.
    dis = jnp.sum(jnp.abs(g[:, None, :] - v_l), axis=-1)             # [B, PP]

    # TODO(synk): get_index assumed = indices of the num_parts smallest dis.
    select_index = jnp.argsort(dis, axis=1)[:, :num_parts]           # [B, P]
    select_v_l = jnp.take_along_axis(v_l, select_index[:, :, None], axis=1)
    select_v_l = select_v_l.reshape(B, num_parts, -1)

    return y_hat, hash_code, select_v_l


def init_params(key, c_in, channels, num_classes, bit):
    ks = jax.random.split(key, 6)
    w0 = 0.1 * jax.random.normal(ks[0], (c_in, channels), jnp.float32)
    b0 = 0.1 * jax.random.normal(ks[1], (1, channels), jnp.float32)
    wc = 0.1 * jax.random.normal(ks[2], (channels, num_classes), jnp.float32)
    bc = 0.1 * jax.random.normal(ks[3], (1, num_classes), jnp.float32)
    wh = 0.1 * jax.random.normal(ks[4], (channels, bit), jnp.float32)
    bh = 0.1 * jax.random.normal(ks[5], (1, bit), jnp.float32)
    return (w0, b0, wc, bc, wh, bh)


if __name__ == "__main__":
    B, C_IN, H, W = 2, 4, 16, 16
    CHANNELS, NUM_CLASSES, BIT, NUM_PARTS = 32, 5, 16, 2

    key = jax.random.PRNGKey(0)
    kx, kp = jax.random.split(key)
    x = jax.random.normal(kx, (B, C_IN, H, W), jnp.float32)
    params = init_params(kp, C_IN, CHANNELS, NUM_CLASSES, BIT)

    y_hat, hash_code, select_v_l = mainnet_forward(x, params, NUM_PARTS)
    jax.block_until_ready((y_hat, hash_code, select_v_l))

    assert y_hat.shape == (B, NUM_CLASSES)
    assert hash_code.shape == (B, BIT)
    assert select_v_l.shape == (B, NUM_PARTS, CHANNELS)
    assert bool(jnp.all(jnp.abs(hash_code) <= 1.0))
    assert bool(jnp.all(jnp.isfinite(y_hat)))
    assert bool(jnp.all(jnp.isfinite(select_v_l)))

    print("KERNEL_OK")
</pallas_src>

<mosaic_0001>
module attributes {stable_mosaic.version = 11 : i64} {
  func.func @_mainnet_kernel(%arg0: i32, %arg1: memref<4x32xf32, #tpu.memory_space<smem>>, %arg2: memref<1x32xf32, #tpu.memory_space<smem>>, %arg3: memref<2x1024xf32, #tpu.memory_space<vmem>>, %arg4: memref<8192x128xf32, #tpu.memory_space<vmem>>, %arg5: memref<32x128xf32, #tpu.memory_space<vmem>>, %arg6: memref<1x128xf32, #tpu.memory_space<vmem>>, %arg7: memref<2x128xf32, #tpu.memory_space<vmem>>, %arg8: memref<2x128xf32, #tpu.memory_space<vmem>>, %arg9: memref<2x8192xf32, #tpu.memory_space<vmem>>) attributes {dimension_semantics = [#tpu.dimension_semantics<parallel>], iteration_bounds = array<i64: 1>, scalar_prefetch = 0 : i64, scratch_operands = 1 : i64, tpu.core_type = #tpu.core_type<tc>, window_params = [{transform_indices = @transform_0, window_bounds = array<i64: 4, 32>}, {transform_indices = @transform_1, window_bounds = array<i64: 1, 32>}, {transform_indices = @transform_2, window_bounds = array<i64: 2, 1024>}, {pipeline_mode = #tpu.pipeline_mode<synchronous>, transform_indices = @transform_3, window_bounds = array<i64: 8192, 128>}, {pipeline_mode = #tpu.pipeline_mode<synchronous>, transform_indices = @transform_4, window_bounds = array<i64: 32, 128>}, {pipeline_mode = #tpu.pipeline_mode<synchronous>, transform_indices = @transform_5, window_bounds = array<i64: 1, 128>}, {transform_indices = @transform_6, window_bounds = array<i64: 2, 128>}, {transform_indices = @transform_7, window_bounds = array<i64: 2, 128>}]} {
    %c0 = arith.constant 0 : index
    %c0_0 = arith.constant 0 : index
    %0 = vector.load %arg3[%c0, %c0_0] : memref<2x1024xf32, #tpu.memory_space<vmem>>, vector<2x256xf32>
    %c0_1 = arith.constant 0 : index
    %c256 = arith.constant 256 : index
    %1 = vector.load %arg3[%c0_1, %c256] : memref<2x1024xf32, #tpu.memory_space<vmem>>, vector<2x256xf32>
    %c0_2 = arith.constant 0 : index
    %c512 = arith.constant 512 : index
    %2 = vector.load %arg3[%c0_2, %c512] : memref<2x1024xf32, #tpu.memory_space<vmem>>, vector<2x256xf32>
    %c0_3 = arith.constant 0 : index
    %c768 = arith.constant 768 : index
    %3 = vector.load %arg3[%c0_3, %c768] : memref<2x1024xf32, #tpu.memory_space<vmem>>, vector<2x256xf32>
    %c0_4 = arith.constant 0 : index
    %c0_5 = arith.constant 0 : index
    %4 = memref.load %arg1[%c0_4, %c0_5] : memref<4x32xf32, #tpu.memory_space<smem>>
    %5 = vector.broadcast %4 : f32 to vector<2x256xf32>
    %6 = arith.mulf %5, %0 : vector<2x256xf32>
    %c1 = arith.constant 1 : index
    %c0_6 = arith.constant 0 : index
    %7 = memref.load %arg1[%c1, %c0_6] : memref<4x32xf32, #tpu.memory_space<smem>>
    %8 = vector.broadcast %7 : f32 to vector<2x256xf32>
    %9 = arith.mulf %8, %1 : vector<2x256xf32>
    %10 = arith.addf %6, %9 : vector<2x256xf32>
    %c2 = arith.constant 2 : index
    %c0_7 = arith.constant 0 : index
    %11 = memref.load %arg1[%c2, %c0_7] : memref<4x32xf32, #tpu.memory_space<smem>>
    %12 = vector.broadcast %11 : f32 to vector<2x256xf32>
    %13 = arith.mulf %12, %2 : vector<2x256xf32>
    %14 = arith.addf %10, %13 : vector<2x256xf32>
    %c3 = arith.constant 3 : index
    %c0_8 = arith.constant 0 : index
    %15 = memref.load %arg1[%c3, %c0_8] : memref<4x32xf32, #tpu.memory_space<smem>>
    %16 = vector.broadcast %15 : f32 to vector<2x256xf32>
    %17 = arith.mulf %16, %3 : vector<2x256xf32>
    %18 = arith.addf %14, %17 : vector<2x256xf32>
    %c0_9 = arith.constant 0 : index
    %c0_10 = arith.constant 0 : index
    %19 = memref.load %arg2[%c0_9, %c0_10] : memref<1x32xf32, #tpu.memory_space<smem>>
    %20 = vector.broadcast %19 : f32 to vector<2x256xf32>
    %21 = arith.addf %18, %20 : vector<2x256xf32>
    %cst = arith.constant 0.000000e+00 : f32
    %22 = vector.broadcast %cst : f32 to vector<2x256xf32>
    %23 = arith.maximumf %21, %22 : vector<2x256xf32>
    %c0_11 = arith.constant 0 : index
    %c0_12 = arith.constant 0 : index
    %24 = vector.load %arg9[%c0_11, %c0_12] : memref<2x8192xf32, #tpu.memory_space<vmem>>, vector<2x256xf32>
    tpu.vector_store %arg9[%c0_11, %c0_12], %23 {strides = array<i32>} : memref<2x8192xf32, #tpu.memory_space<vmem>>, vector<2x256xf32>,
    %c0_13 = arith.constant 0 : index
    %c1_14 = arith.constant 1 : index
    %25 = memref.load %arg1[%c0_13, %c1_14] : memref<4x32xf32, #tpu.memory_space<smem>>
    %26 = vector.broadcast %25 : f32 to vector<2x256xf32>
    %27 = arith.mulf %26, %0 : vector<2x256xf32>
    %c1_15 = arith.constant 1 : index
    %c1_16 = arith.constant 1 : index
    %28 = memref.load %arg1[%c1_15, %c1_16] : memref<4x32xf32, #tpu.memory_space<smem>>
    %29 = vector.broadcast %28 : f32 to vector<2x256xf32>
    %30 = arith.mulf %29, %1 : vector<2x256xf32>
    %31 = arith.addf %27, %30 : vector<2x256xf32>
    %c2_17 = arith.constant 2 : index
    %c1_18 = arith.constant 1 : index
    %32 = memref.load %arg1[%c2_17, %c1_18] : memref<4x32xf32, #tpu.memory_space<smem>>
    %33 = vector.broadcast %32 : f32 to vector<2x256xf32>
    %34 = arith.mulf %33, %2 : vector<2x256xf32>
    %35 = arith.addf %31, %34 : vector<2x256xf32>
    %c3_19 = arith.constant 3 : index
    %c1_20 = arith.constant 1 : index
    %36 = memref.load %arg1[%c3_19, %c1_20] : memref<4x32xf32, #tpu.memory_space<smem>>
    %37 = vector.broadcast %36 : f32 to vector<2x256xf32>
    %38 = arith.mulf %37, %3 : vector<2x256xf32>
    %39 = arith.addf %35, %38 : vector<2x256xf32>
    %c0_21 = arith.constant 0 : index
    %c1_22 = arith.constant 1 : index
    %40 = memref.load %arg2[%c0_21, %c1_22] : memref<1x32xf32, #tpu.memory_space<smem>>
    %41 = vector.broadcast %40 : f32 to vector<2x256xf32>
    %42 = arith.addf %39, %41 : vector<2x256xf32>
    %cst_23 = arith.constant 0.000000e+00 : f32
    %43 = vector.broadcast %cst_23 : f32 to vector<2x256xf32>
    %44 = arith.maximumf %42, %43 : vector<2x256xf32>
    %c0_24 = arith.constant 0 : index
    %c256_25 = arith.constant 256 : index
    %45 = vector.load %arg9[%c0_24, %c256_25] : memref<2x8192xf32, #tpu.memory_space<vmem>>, vector<2x256xf32>
    tpu.vector_store %arg9[%c0_24, %c256_25], %44 {strides = array<i32>} : memref<2x8192xf32, #tpu.memory_space<vmem>>, vector<2x256xf32>,
    %c0_26 = arith.constant 0 : index
    %c2_27 = arith.constant 2 : index
    %46 = memref.load %arg1[%c0_26, %c2_27] : memref<4x32xf32, #tpu.memory_space<smem>>
    %47 = vector.broadcast %46 : f32 to vector<2x256xf32>
    %48 = arith.mulf %47, %0 : vector<2x256xf32>
    %c1_28 = arith.constant 1 : index
    %c2_29 = arith.constant 2 : index
    %49 = memref.load %arg1[%c1_28, %c2_29] : memref<4x32xf32, #tpu.memory_space<smem>>
    %50 = vector.broadcast %49 : f32 to vector<2x256xf32>
    %51 = arith.mulf %50, %1 : vector<2x256xf32>
    %52 = arith.addf %48, %51 : vector<2x256xf32>
    %c2_30 = arith.constant 2 : index
    %c2_31 = arith.constant 2 : index
    %53 = memref.load %arg1[%c2_30, %c2_31] : memref<4x32xf32, #tpu.memory_space<smem>>
    %54 = vector.broadcast %53 : f32 to vector<2x256xf32>
    %55 = arith.mulf %54, %2 : vector<2x256xf32>
    %56 = arith.addf %52, %55 : vector<2x256xf32>
    %c3_32 = arith.constant 3 : index
    %c2_33 = arith.constant 2 : index
    %57 = memref.load %arg1[%c3_32, %c2_33] : memref<4x32xf32, #tpu.memory_space<smem>>
    %58 = vector.broadcast %57 : f32 to vector<2x256xf32>
    %59 = arith.mulf %58, %3 : vector<2x256xf32>
    %60 = arith.addf %56, %59 : vector<2x256xf32>
    %c0_34 = arith.constant 0 : index
    %c2_35 = arith.constant 2 : index
    %61 = memref.load %arg2[%c0_34, %c2_35] : memref<1x32xf32, #tpu.memory_space<smem>>
    %62 = vector.broadcast %61 : f32 to vector<2x256xf32>
    %63 = arith.addf %60, %62 : vector<2x256xf32>
    %cst_36 = arith.constant 0.000000e+00 : f32
    %64 = vector.broadcast %cst_36 : f32 to vector<2x256xf32>
    %65 = arith.maximumf %63, %64 : vector<2x256xf32>
    %c0_37 = arith.constant 0 : index
    %c512_38 = arith.constant 512 : index
    %66 = vector.load %arg9[%c0_37, %c512_38] : memref<2x8192xf32, #tpu.memory_space<vmem>>, vector<2x256xf32>
    tpu.vector_store %arg9[%c0_37, %c512_38], %65 {strides = array<i32>} : memref<2x8192xf32, #tpu.memory_space<vmem>>, vector<2x256xf32>,
    %c0_39 = arith.constant 0 : index
    %c3_40 = arith.constant 3 : index
    %67 = memref.load %arg1[%c0_39, %c3_40] : memref<4x32xf32, #tpu.memory_space<smem>>
    %68 = vector.broadcast %67 : f32 to vector<2x256xf32>
    %69 = arith.mulf %68, %0 : vector<2x256xf32>
    %c1_41 = arith.constant 1 : index
    %c3_42 = arith.constant 3 : index
    %70 = memref.load %arg1[%c1_41, %c3_42] : memref<4x32xf32, #tpu.memory_space<smem>>
    %71 = vector.broadcast %70 : f32 to vector<2x256xf32>
    %72 = arith.mulf %71, %1 : vector<2x256xf32>
    %73 = arith.addf %69, %72 : vector<2x256xf32>
    %c2_43 = arith.constant 2 : index
    %c3_44 = arith.constant 3 : index
    %74 = memref.load %arg1[%c2_43, %c3_44] : memref<4x32xf32, #tpu.memory_space<smem>>
    %75 = vector.broadcast %74 : f32 to vector<2x256xf32>
    %76 = arith.mulf %75, %2 : vector<2x256xf32>
    %77 = arith.addf %73, %76 : vector<2x256xf32>
    %c3_45 = arith.constant 3 : index
    %c3_46 = arith.constant 3 : index
    %78 = memref.load %arg1[%c3_45, %c3_46] : memref<4x32xf32, #tpu.memory_space<smem>>
    %79 = vector.broadcast %78 : f32 to vector<2x256xf32>
    %80 = arith.mulf %79, %3 : vector<2x256xf32>
    %81 = arith.addf %77, %80 : vector<2x256xf32>
    %c0_47 = arith.constant 0 : index
    %c3_48 = arith.constant 3 : index
    %82 = memref.load %arg2[%c0_47, %c3_48] : memref<1x32xf32, #tpu.memory_space<smem>>
    %83 = vector.broadcast %82 : f32 to vector<2x256xf32>
    %84 = arith.addf %81, %83 : vector<2x256xf32>
    %cst_49 = arith.constant 0.000000e+00 : f32
    %85 = vector.broadcast %cst_49 : f32 to vector<2x256xf32>
    %86 = arith.maximumf %84, %85 : vector<2x256xf32>
    %c0_50 = arith.constant 0 : index
    %c768_51 = arith.constant 768 : index
    %87 = vector.load %arg9[%c0_50, %c768_51] : memref<2x8192xf32, #tpu.memory_space<vmem>>, vector<2x256xf32>
    tpu.vector_store %arg9[%c0_50, %c768_51], %86 {strides = array<i32>} : memref<2x8192xf32, #tpu.memory_space<vmem>>, vector<2x256xf32>,
    %c0_52 = arith.constant 0 : index
    %c4 = arith.constant 4 : index
    %88 = memref.load %arg1[%c0_52, %c4] : memref<4x32xf32, #tpu.memory_space<smem>>
    %89 = vector.broadcast %88 : f32 to vector<2x256xf32>
    %90 = arith.mulf %89, %0 : vector<2x256xf32>
    %c1_53 = arith.constant 1 : index
    %c4_54 = arith.constant 4 : index
    %91 = memref.load %arg1[%c1_53, %c4_54] : memref<4x32xf32, #tpu.memory_space<smem>>
    %92 = vector.broadcast %91 : f32 to vector<2x256xf32>
    %93 = arith.mulf %92, %1 : vector<2x256xf32>
    %94 = arith.addf %90, %93 : vector<2x256xf32>
    %c2_55 = arith.constant 2 : index
    %c4_56 = arith.constant 4 : index
    %95 = memref.load %arg1[%c2_55, %c4_56] : memref<4x32xf32, #tpu.memory_space<smem>>
    %96 = vector.broadcast %95 : f32 to vector<2x256xf32>
    %97 = arith.mulf %96, %2 : vector<2x256xf32>
    %98 = arith.addf %94, %97 : vector<2x256xf32>
    %c3_57 = arith.constant 3 : index
    %c4_58 = arith.constant 4 : index
    %99 = memref.load %arg1[%c3_57, %c4_58] : memref<4x32xf32, #tpu.memory_space<smem>>
    %100 = vector.broadcast %99 : f32 to vector<2x256xf32>
    %101 = arith.mulf %100, %3 : vector<2x256xf32>
    %102 = arith.addf %98, %101 : vector<2x256xf32>
    %c0_59 = arith.constant 0 : index
    %c4_60 = arith.constant 4 : index
    %103 = memref.load %arg2[%c0_59, %c4_60] : memref<1x32xf32, #tpu.memory_space<smem>>
    %104 = vector.broadcast %103 : f32 to vector<2x256xf32>
    %105 = arith.addf %102, %104 : vector<2x256xf32>
    %cst_61 = arith.constant 0.000000e+00 : f32
    %106 = vector.broadcast %cst_61 : f32 to vector<2x256xf32>
    %107 = arith.maximumf %105, %106 : vector<2x256xf32>
    %c0_62 = arith.constant 0 : index
    %c1024 = arith.constant 1024 : index
    %108 = vector.load %arg9[%c0_62, %c1024] : memref<2x8192xf32, #tpu.memory_space<vmem>>, vector<2x256xf32>
    tpu.vector_store %arg9[%c0_62, %c1024], %107 {strides = array<i32>} : memref<2x8192xf32, #tpu.memory_space<vmem>>, vector<2x256xf32>,
    %c0_63 = arith.constant 0 : index
    %c5 = arith.constant 5 : index
    %109 = memref.load %arg1[%c0_63, %c5] : memref<4x32xf32, #tpu.memory_space<smem>>
    %110 = vector.broadcast %109 : f32 to vector<2x256xf32>
    %111 = arith.mulf %110, %0 : vector<2x256xf32>
    %c1_64 = arith.constant 1 : index
    %c5_65 = arith.constant 5 : index
    %112 = memref.load %arg1[%c1_64, %c5_65] : memref<4x32xf32, #tpu.memory_space<smem>>
    %113 = vector.broadcast %112 : f32 to vector<2x256xf32>
    %114 = arith.mulf %113, %1 : vector<2x256xf32>
    %115 = arith.addf %111, %114 : vector<2x256xf32>
    %c2_66 = arith.constant 2 : index
    %c5_67 = arith.constant 5 : index
    %116 = memref.load %arg1[%c2_66, %c5_67] : memref<4x32xf32, #tpu.memory_space<smem>>
    %117 = vector.broadcast %116 : f32 to vector<2x256xf32>
    %118 = arith.mulf %117, %2 : vector<2x256xf32>
    %119 = arith.addf %115, %118 : vector<2x256xf32>
    %c3_68 = arith.constant 3 : index
    %c5_69 = arith.constant 5 : index
    %120 = memref.load %arg1[%c3_68, %c5_69] : memref<4x32xf32, #tpu.memory_space<smem>>
    %121 = vector.broadcast %120 : f32 to vector<2x256xf32>
    %122 = arith.mulf %121, %3 : vector<2x256xf32>
    %123 = arith.addf %119, %122 : vector<2x256xf32>
    %c0_70 = arith.constant 0 : index
    %c5_71 = arith.constant 5 : index
    %124 = memref.load %arg2[%c0_70, %c5_71] : memref<1x32xf32, #tpu.memory_space<smem>>
    %125 = vector.broadcast %124 : f32 to vector<2x256xf32>
    %126 = arith.addf %123, %125 : vector<2x256xf32>
    %cst_72 = arith.constant 0.000000e+00 : f32
    %127 = vector.broadcast %cst_72 : f32 to vector<2x256xf32>
    %128 = arith.maximumf %126, %127 : vector<2x256xf32>
    %c0_73 = arith.constant 0 : index
    %c1280 = arith.constant 1280 : index
    %129 = vector.load %arg9[%c0_73, %c1280] : memref<2x8192xf32, #tpu.memory_space<vmem>>, vector<2x256xf32>
    tpu.vector_store %arg9[%c0_73, %c1280], %128 {strides = array<i32>} : memref<2x8192xf32, #tpu.memory_space<vmem>>, vector<2x256xf32>,
    %c0_74 = arith.constant 0 : index
    %c6 = arith.constant 6 : index
    %130 = memref.load %arg1[%c0_74, %c6] : memref<4x32xf32, #tpu.memory_space<smem>>
    %131 = vector.broadcast %130 : f32 to vector<2x256xf32>
    %132 = arith.mulf %131, %0 : vector<2x256xf32>
    %c1_75 = arith.constant 1 : index
    %c6_76 = arith.constant 6 : index
    %133 = memref.load %arg1[%c1_75, %c6_76] : memref<4x32xf32, #tpu.memory_space<smem>>
    %134 = vector.broadcast %133 : f32 to vector<2x256xf32>
    %135 = arith.mulf %134, %1 : vector<2x256xf32>
    %136 = arith.addf %132, %135 : vector<2x256xf32>
    %c2_77 = arith.constant 2 : index
    %c6_78 = arith.constant 6 : index
    %137 = memref.load %arg1[%c2_77, %c6_78] : memref<4x32xf32, #tpu.memory_space<smem>>
    %138 = vector.broadcast %137 : f32 to vector<2x256xf32>
    %139 = arith.mulf %138, %2 : vector<2x256xf32>
    %140 = arith.addf %136, %139 : vector<2x256xf32>
    %c3_79 = arith.constant 3 : index
    %c6_80 = arith.constant 6 : index
    %141 = memref.load %arg1[%c3_79, %c6_80] : memref<4x32xf32, #tpu.memory_space<smem>>
    %142 = vector.broadcast %141 : f32 to vector<2x256xf32>
    %143 = arith.mulf %142, %3 : vector<2x256xf32>
    %144 = arith.addf %140, %143 : vector<2x256xf32>
    %c0_81 = arith.constant 0 : index
    %c6_82 = arith.constant 6 : index
    %145 = memref.load %arg2[%c0_81, %c6_82] : memref<1x32xf32, #tpu.memory_space<smem>>
    %146 = vector.broadcast %145 : f32 to vector<2x256xf32>
    %147 = arith.addf %144, %146 : vector<2x256xf32>
    %cst_83 = arith.constant 0.000000e+00 : f32
    %148 = vector.broadcast %cst_83 : f32 to vector<2x256xf32>
    %149 = arith.maximumf %147, %148 : vector<2x256xf32>
    %c0_84 = arith.constant 0 : index
    %c1536 = arith.constant 1536 : index
    %150 = vector.load %arg9[%c0_84, %c1536] : memref<2x8192xf32, #tpu.memory_space<vmem>>, vector<2x256xf32>
    tpu.vector_store %arg9[%c0_84, %c1536], %149 {strides = array<i32>} : memref<2x8192xf32, #tpu.memory_space<vmem>>, vector<2x256xf32>,
    %c0_85 = arith.constant 0 : index
    %c7 = arith.constant 7 : index
    %151 = memref.load %arg1[%c0_85, %c7] : memref<4x32xf32, #tpu.memory_space<smem>>
    %152 = vector.broadcast %151 : f32 to vector<2x256xf32>
    %153 = arith.mulf %152, %0 : vector<2x256xf32>
    %c1_86 = arith.constant 1 : index
    %c7_87 = arith.constant 7 : index
    %154 = memref.load %arg1[%c1_86, %c7_87] : memref<4x32xf32, #tpu.memory_space<smem>>
    %155 = vector.broadcast %154 : f32 to vector<2x256xf32>
    %156 = arith.mulf %155, %1 : vector<2x256xf32>
    %157 = arith.addf %153, %156 : vector<2x256xf32>
    %c2_88 = arith.constant 2 : index
    %c7_89 = arith.constant 7 : index
    %158 = memref.load %arg1[%c2_88, %c7_89] : memref<4x32xf32, #tpu.memory_space<smem>>
    %159 = vector.broadcast %158 : f32 to vector<2x256xf32>
    %160 = arith.mulf %159, %2 : vector<2x256xf32>
    %161 = arith.addf %157, %160 : vector<2x256xf32>
    %c3_90 = arith.constant 3 : index
    %c7_91 = arith.constant 7 : index
    %162 = memref.load %arg1[%c3_90, %c7_91] : memref<4x32xf32, #tpu.memory_space<smem>>
    %163 = vector.broadcast %162 : f32 to vector<2x256xf32>
    %164 = arith.mulf %163, %3 : vector<2x256xf32>
    %165 = arith.addf %161, %164 : vector<2x256xf32>
    %c0_92 = arith.constant 0 : index
    %c7_93 = arith.constant 7 : index
    %166 = memref.load %arg2[%c0_92, %c7_93] : memref<1x32xf32, #tpu.memory_space<smem>>
    %167 = vector.broadcast %166 : f32 to vector<2x256xf32>
    %168 = arith.addf %165, %167 : vector<2x256xf32>
    %cst_94 = arith.constant 0.000000e+00 : f32
    %169 = vector.broadcast %cst_94 : f32 to vector<2x256xf32>
    %170 = arith.maximumf %168, %169 : vector<2x256xf32>
    %c0_95 = arith.constant 0 : index
    %c1792 = arith.constant 1792 : index
    %171 = vector.load %arg9[%c0_95, %c1792] : memref<2x8192xf32, #tpu.memory_space<vmem>>, vector<2x256xf32>
    tpu.vector_store %arg9[%c0_95, %c1792], %170 {strides = array<i32>} : memref<2x8192xf32, #tpu.memory_space<vmem>>, vector<2x256xf32>,
    %c0_96 = arith.constant 0 : index
    %c8 = arith.constant 8 : index
    %172 = memref.load %arg1[%c0_96, %c8] : memref<4x32xf32, #tpu.memory_space<smem>>
    %173 = vector.broadcast %172 : f32 to vector<2x256xf32>
    %174 = arith.mulf %173, %0 : vector<2x256xf32>
    %c1_97 = arith.constant 1 : index
    %c8_98 = arith.constant 8 : index
    %175 = memref.load %arg1[%c1_97, %c8_98] : memref<4x32xf32, #tpu.memory_space<smem>>
    %176 = vector.broadcast %175 : f32 to vector<2x256xf32>
    %177 = arith.mulf %176, %1 : vector<2x256xf32>
    %178 = arith.addf %174, %177 : vector<2x256xf32>
    %c2_99 = arith.constant 2 : index
    %c8_100 = arith.constant 8 : index
    %179 = memref.load %arg1[%c2_99, %c8_100] : memref<4x32xf32, #tpu.memory_space<smem>>
    %180 = vector.broadcast %179 : f32 to vector<2x256xf32>
    %181 = arith.mulf %180, %2 : vector<2x256xf32>
    %182 = arith.addf %178, %181 : vector<2x256xf32>
    %c3_101 = arith.constant 3 : index
    %c8_102 = arith.constant 8 : index
    %183 = memref.load %arg1[%c3_101, %c8_102] : memref<4x32xf32, #tpu.memory_space<smem>>
    %184 = vector.broadcast %183 : f32 to vector<2x256xf32>
    %185 = arith.mulf %184, %3 : vector<2x256xf32>
    %186 = arith.addf %182, %185 : vector<2x256xf32>
    %c0_103 = arith.constant 0 : index
    %c8_104 = arith.constant 8 : index
    %187 = memref.load %arg2[%c0_103, %c8_104] : memref<1x32xf32, #tpu.memory_space<smem>>
    %188 = vector.broadcast %187 : f32 to vector<2x256xf32>
    %189 = arith.addf %186, %188 : vector<2x256xf32>
    %cst_105 = arith.constant 0.000000e+00 : f32
    %190 = vector.broadcast %cst_105 : f32 to vector<2x256xf32>
    %191 = arith.maximumf %189, %190 : vector<2x256xf32>
    %c0_106 = arith.constant 0 : index
    %c2048 = arith.constant 2048 : index
    %192 = vector.load %arg9[%c0_106, %c2048] : memref<2x8192xf32, #tpu.memory_space<vmem>>, vector<2x256xf32>
    tpu.vector_store %arg9[%c0_106, %c2048], %191 {strides = array<i32>} : memref<2x8192xf32, #tpu.memory_space<vmem>>, vector<2x256xf32>,
    %c0_107 = arith.constant 0 : index
    %c9 = arith.constant 9 : index
    %193 = memref.load %arg1[%c0_107, %c9] : memref<4x32xf32, #tpu.memory_space<smem>>
    %194 = vector.broadcast %193 : f32 to vector<2x256xf32>
    %195 = arith.mulf %194, %0 : vector<2x256xf32>
    %c1_108 = arith.constant 1 : index
    %c9_109 = arith.constant 9 : index
    %196 = memref.load %arg1[%c1_108, %c9_109] : memref<4x32xf32, #tpu.memory_space<smem>>
    %197 = vector.broadcast %196 : f32 to vector<2x256xf32>
    %198 = arith.mulf %197, %1 : vector<2x256xf32>
    %199 = arith.addf %195, %198 : vector<2x256xf32>
    %c2_110 = arith.constant 2 : index
    %c9_111 = arith.constant 9 : index
    %200 = memref.load %arg1[%c2_110, %c9_111] : memref<4x32xf32, #tpu.memory_space<smem>>
    %201 = vector.broadcast %200 : f32 to vector<2x256xf32>
    %202 = arith.mulf %201, %2 : vector<2x256xf32>
    %203 = arith.addf %199, %202 : vector<2x256xf32>
    %c3_112 = arith.constant 3 : index
    %c9_113 = arith.constant 9 : index
    %204 = memref.load %arg1[%c3_112, %c9_113] : memref<4x32xf32, #tpu.memory_space<smem>>
    %205 = vector.broadcast %204 : f32 to vector<2x256xf32>
    %206 = arith.mulf %205, %3 : vector<2x256xf32>
    %207 = arith.addf %203, %206 : vector<2x256xf32>
    %c0_114 = arith.constant 0 : index
    %c9_115 = arith.constant 9 : index
    %208 = memref.load %arg2[%c0_114, %c9_115] : memref<1x32xf32, #tpu.memory_space<smem>>
    %209 = vector.broadcast %208 : f32 to vector<2x256xf32>
    %210 = arith.addf %207, %209 : vector<2x256xf32>
    %cst_116 = arith.constant 0.000000e+00 : f32
    %211 = vector.broadcast %cst_116 : f32 to vector<2x256xf32>
    %212 = arith.maximumf %210, %211 : vector<2x256xf32>
    %c0_117 = arith.constant 0 : index
    %c2304 = arith.constant 2304 : index
    %213 = vector.load %arg9[%c0_117, %c2304] : memref<2x8192xf32, #tpu.memory_space<vmem>>, vector<2x256xf32>
    tpu.vector_store %arg9[%c0_117, %c2304], %212 {strides = array<i32>} : memref<2x8192xf32, #tpu.memory_space<vmem>>, vector<2x256xf32>,
    %c0_118 = arith.constant 0 : index
    %c10 = arith.constant 10 : index
    %214 = memref.load %arg1[%c0_118, %c10] : memref<4x32xf32, #tpu.memory_space<smem>>
    %215 = vector.broadcast %214 : f32 to vector<2x256xf32>
    %216 = arith.mulf %215, %0 : vector<2x256xf32>
    %c1_119 = arith.constant 1 : index
    %c10_120 = arith.constant 10 : index
    %217 = memref.load %arg1[%c1_119, %c10_120] : memref<4x32xf32, #tpu.memory_space<smem>>
    %218 = vector.broadcast %217 : f32 to vector<2x256xf32>
    %219 = arith.mulf %218, %1 : vector<2x256xf32>
    %220 = arith.addf %216, %219 : vector<2x256xf32>
    %c2_121 = arith.constant 2 : index
    %c10_122 = arith.constant 10 : index
    %221 = memref.load %arg1[%c2_121, %c10_122] : memref<4x32xf32, #tpu.memory_space<smem>>
    %222 = vector.broadcast %221 : f32 to vector<2x256xf32>
    %223 = arith.mulf %222, %2 : vector<2x256xf32>
    %224 = arith.addf %220, %223 : vector<2x256xf32>
    %c3_123 = arith.constant 3 : index
    %c10_124 = arith.constant 10 : index
    %225 = memref.load %arg1[%c3_123, %c10_124] : memref<4x32xf32, #tpu.memory_space<smem>>
    %226 = vector.broadcast %225 : f32 to vector<2x256xf32>
    %227 = arith.mulf %226, %3 : vector<2x256xf32>
    %228 = arith.addf %224, %227 : vector<2x256xf32>
    %c0_125 = arith.constant 0 : index
    %c10_126 = arith.constant 10 : index
    %229 = memref.load %arg2[%c0_125, %c10_126] : memref<1x32xf32, #tpu.memory_space<smem>>
    %230 = vector.broadcast %229 : f32 to vector<2x256xf32>
    %231 = arith.addf %228, %230 : vector<2x256xf32>
    %cst_127 = arith.constant 0.000000e+00 : f32
    %232 = vector.broadcast %cst_127 : f32 to vector<2x256xf32>
    %233 = arith.maximumf %231, %232 : vector<2x256xf32>
    %c0_128 = arith.constant 0 : index
    %c2560 = arith.constant 2560 : index
    %234 = vector.load %arg9[%c0_128, %c2560] : memref<2x8192xf32, #tpu.memory_space<vmem>>, vector<2x256xf32>
    tpu.vector_store %arg9[%c0_128, %c2560], %233 {strides = array<i32>} : memref<2x8192xf32, #tpu.memory_space<vmem>>, vector<2x256xf32>,
    %c0_129 = arith.constant 0 : index
    %c11 = arith.constant 11 : index
    %235 = memref.load %arg1[%c0_129, %c11] : memref<4x32xf32, #tpu.memory_space<smem>>
    %236 = vector.broadcast %235 : f32 to vector<2x256xf32>
    %237 = arith.mulf %236, %0 : vector<2x256xf32>
    %c1_130 = arith.constant 1 : index
    %c11_131 = arith.constant 11 : index
    %238 = memref.load %arg1[%c1_130, %c11_131] : memref<4x32xf32, #tpu.memory_space<smem>>
    %239 = vector.broadcast %238 : f32 to vector<2x256xf32>
    %240 = arith.mulf %239, %1 : vector<2x256xf32>
    %241 = arith.addf %237, %240 : vector<2x256xf32>
    %c2_132 = arith.constant 2 : index
    %c11_133 = arith.constant 11 : index
    %242 = memref.load %arg1[%c2_132, %c11_133] : memref<4x32xf32, #tpu.memory_space<smem>>
    %243 = vector.broadcast %242 : f32 to vector<2x256xf32>
    %244 = arith.mulf %243, %2 : vector<2x256xf32>
    %245 = arith.addf %241, %244 : vector<2x256xf32>
    %c3_134 = arith.constant 3 : index
    %c11_135 = arith.constant 11 : index
    %246 = memref.load %arg1[%c3_134, %c11_135] : memref<4x32xf32, #tpu.memory_space<smem>>
    %247 = vector.broadcast %246 : f32 to vector<2x256xf32>
    %248 = arith.mulf %247, %3 : vector<2x256xf32>
    %249 = arith.addf %245, %248 : vector<2x256xf32>
    %c0_136 = arith.constant 0 : index
    %c11_137 = arith.constant 11 : index
    %250 = memref.load %arg2[%c0_136, %c11_137] : memref<1x32xf32, #tpu.memory_space<smem>>
    %251 = vector.broadcast %250 : f32 to vector<2x256xf32>
    %252 = arith.addf %249, %251 : vector<2x256xf32>
    %cst_138 = arith.constant 0.000000e+00 : f32
    %253 = vector.broadcast %cst_138 : f32 to vector<2x256xf32>
    %254 = arith.maximumf %252, %253 : vector<2x256xf32>
    %c0_139 = arith.constant 0 : index
    %c2816 = arith.constant 2816 : index
    %255 = vector.load %arg9[%c0_139, %c2816] : memref<2x8192xf32, #tpu.memory_space<vmem>>, vector<2x256xf32>
    tpu.vector_store %arg9[%c0_139, %c2816], %254 {strides = array<i32>} : memref<2x8192xf32, #tpu.memory_space<vmem>>, vector<2x256xf32>,
    %c0_140 = arith.constant 0 : index
    %c12 = arith.constant 12 : index
    %256 = memref.load %arg1[%c0_140, %c12] : memref<4x32xf32, #tpu.memory_space<smem>>
    %257 = vector.broadcast %256 : f32 to vector<2x256xf32>
    %258 = arith.mulf %257, %0 : vector<2x256xf32>
    %c1_141 = arith.constant 1 : index
    %c12_142 = arith.constant 12 : index
    %259 = memref.load %arg1[%c1_141, %c12_142] : memref<4x32xf32, #tpu.memory_space<smem>>
    %260 = vector.broadcast %259 : f32 to vector<2x256xf32>
    %261 = arith.mulf %260, %1 : vector<2x256xf32>
    %262 = arith.addf %258, %261 : vector<2x256xf32>
    %c2_143 = arith.constant 2 : index
    %c12_144 = arith.constant 12 : index
    %263 = memref.load %arg1[%c2_143, %c12_144] : memref<4x32xf32, #tpu.memory_space<smem>>
    %264 = vector.broadcast %263 : f32 to vector<2x256xf32>
    %265 = arith.mulf %264, %2 : vector<2x256xf32>
    %266 = arith.addf %262, %265 : vector<2x256xf32>
    %c3_145 = arith.constant 3 : index
    %c12_146 = arith.constant 12 : index
    %267 = memref.load %arg1[%c3_145, %c12_146] : memref<4x32xf32, #tpu.memory_space<smem>>
    %268 = vector.broadcast %267 : f32 to vector<2x256xf32>
    %269 = arith.mulf %268, %3 : vector<2x256xf32>
    %270 = arith.addf %266, %269 : vector<2x256xf32>
    %c0_147 = arith.constant 0 : index
    %c12_148 = arith.constant 12 : index
    %271 = memref.load %arg2[%c0_147, %c12_148] : memref<1x32xf32, #tpu.memory_space<smem>>
    %272 = vector.broadcast %271 : f32 to vector<2x256xf32>
    %273 = arith.addf %270, %272 : vector<2x256xf32>
    %cst_149 = arith.constant 0.000000e+00 : f32
    %274 = vector.broadcast %cst_149 : f32 to vector<2x256xf32>
    %275 = arith.maximumf %273, %274 : vector<2x256xf32>
    %c0_150 = arith.constant 0 : index
    %c3072 = arith.constant 3072 : index
    %276 = vector.load %arg9[%c0_150, %c3072] : memref<2x8192xf32, #tpu.memory_space<vmem>>, vector<2x256xf32>
    tpu.vector_store %arg9[%c0_150, %c3072], %275 {strides = array<i32>} : memref<2x8192xf32, #tpu.memory_space<vmem>>, vector<2x256xf32>,
    %c0_151 = arith.constant 0 : index
    %c13 = arith.constant 13 : index
    %277 = memref.load %arg1[%c0_151, %c13] : memref<4x32xf32, #tpu.memory_space<smem>>
    %278 = vector.broadcast %277 : f32 to vector<2x256xf32>
    %279 = arith.mulf %278, %0 : vector<2x256xf32>
    %c1_152 = arith.constant 1 : index
    %c13_153 = arith.constant 13 : index
    %280 = memref.load %arg1[%c1_152, %c13_153] : memref<4x32xf32, #tpu.memory_space<smem>>
    %281 = vector.broadcast %280 : f32 to vector<2x256xf32>
    %282 = arith.mulf %281, %1 : vector<2x256xf32>
    %283 = arith.addf %279, %282 : vector<2x256xf32>
    %c2_154 = arith.constant 2 : index
    %c13_155 = arith.constant 13 : index
    %284 = memref.load %arg1[%c2_154, %c13_155] : memref<4x32xf32, #tpu.memory_space<smem>>
    %285 = vector.broadcast %284 : f32 to vector<2x256xf32>
    %286 = arith.mulf %285, %2 : vector<2x256xf32>
    %287 = arith.addf %283, %286 : vector<2x256xf32>
    %c3_156 = arith.constant 3 : index
    %c13_157 = arith.constant 13 : index
    %288 = memref.load %arg1[%c3_156, %c13_157] : memref<4x32xf32, #tpu.memory_space<smem>>
    %289 = vector.broadcast %288 : f32 to vector<2x256xf32>
    %290 = arith.mulf %289, %3 : vector<2x256xf32>
    %291 = arith.addf %287, %290 : vector<2x256xf32>
    %c0_158 = arith.constant 0 : index
    %c13_159 = arith.constant 13 : index
    %292 = memref.load %arg2[%c0_158, %c13_159] : memref<1x32xf32, #tpu.memory_space<smem>>
    %293 = vector.broadcast %292 : f32 to vector<2x256xf32>
    %294 = arith.addf %291, %293 : vector<2x256xf32>
    %cst_160 = arith.constant 0.000000e+00 : f32
    %295 = vector.broadcast %cst_160 : f32 to vector<2x256xf32>
    %296 = arith.maximumf %294, %295 : vector<2x256xf32>
    %c0_161 = arith.constant 0 : index
    %c3328 = arith.constant 3328 : index
    %297 = vector.load %arg9[%c0_161, %c3328] : memref<2x8192xf32, #tpu.memory_space<vmem>>, vector<2x256xf32>
    tpu.vector_store %arg9[%c0_161, %c3328], %296 {strides = array<i32>} : memref<2x8192xf32, #tpu.memory_space<vmem>>, vector<2x256xf32>,
    %c0_162 = arith.constant 0 : index
    %c14 = arith.constant 14 : index
    %298 = memref.load %arg1[%c0_162, %c14] : memref<4x32xf32, #tpu.memory_space<smem>>
    %299 = vector.broadcast %298 : f32 to vector<2x256xf32>
    %300 = arith.mulf %299, %0 : vector<2x256xf32>
    %c1_163 = arith.constant 1 : index
    %c14_164 = arith.constant 14 : index
    %301 = memref.load %arg1[%c1_163, %c14_164] : memref<4x32xf32, #tpu.memory_space<smem>>
    %302 = vector.broadcast %301 : f32 to vector<2x256xf32>
    %303 = arith.mulf %302, %1 : vector<2x256xf32>
    %304 = arith.addf %300, %303 : vector<2x256xf32>
    %c2_165 = arith.constant 2 : index
    %c14_166 = arith.constant 14 : index
    %305 = memref.load %arg1[%c2_165, %c14_166] : memref<4x32xf32, #tpu.memory_space<smem>>
    %306 = vector.broadcast %305 : f32 to vector<2x256xf32>
    %307 = arith.mulf %306, %2 : vector<2x256xf32>
    %308 = arith.addf %304, %307 : vector<2x256xf32>
    %c3_167 = arith.constant 3 : index
    %c14_168 = arith.constant 14 : index
    %309 = memref.load %arg1[%c3_167, %c14_168] : memref<4x32xf32, #tpu.memory_space<smem>>
    %310 = vector.broadcast %309 : f32 to vector<2x256xf32>
    %311 = arith.mulf %310, %3 : vector<2x256xf32>
    %312 = arith.addf %308, %311 : vector<2x256xf32>
    %c0_169 = arith.constant 0 : index
    %c14_170 = arith.constant 14 : index
    %313 = memref.load %arg2[%c0_169, %c14_170] : memref<1x32xf32, #tpu.memory_space<smem>>
    %314 = vector.broadcast %313 : f32 to vector<2x256xf32>
    %315 = arith.addf %312, %314 : vector<2x256xf32>
    %cst_171 = arith.constant 0.000000e+00 : f32
    %316 = vector.broadcast %cst_171 : f32 to vector<2x256xf32>
    %317 = arith.maximumf %315, %316 : vector<2x256xf32>
    %c0_172 = arith.constant 0 : index
    %c3584 = arith.constant 3584 : index
    %318 = vector.load %arg9[%c0_172, %c3584] : memref<2x8192xf32, #tpu.memory_space<vmem>>, vector<2x256xf32>
    tpu.vector_store %arg9[%c0_172, %c3584], %317 {strides = array<i32>} : memref<2x8192xf32, #tpu.memory_space<vmem>>, vector<2x256xf32>,
    %c0_173 = arith.constant 0 : index
    %c15 = arith.constant 15 : index
    %319 = memref.load %arg1[%c0_173, %c15] : memref<4x32xf32, #tpu.memory_space<smem>>
    %320 = vector.broadcast %319 : f32 to vector<2x256xf32>
    %321 = arith.mulf %320, %0 : vector<2x256xf32>
    %c1_174 = arith.constant 1 : index
    %c15_175 = arith.constant 15 : index
    %322 = memref.load %arg1[%c1_174, %c15_175] : memref<4x32xf32, #tpu.memory_space<smem>>
    %323 = vector.broadcast %322 : f32 to vector<2x256xf32>
    %324 = arith.mulf %323, %1 : vector<2x256xf32>
    %325 = arith.addf %321, %324 : vector<2x256xf32>
    %c2_176 = arith.constant 2 : index
    %c15_177 = arith.constant 15 : index
    %326 = memref.load %arg1[%c2_176, %c15_177] : memref<4x32xf32, #tpu.memory_space<smem>>
    %327 = vector.broadcast %326 : f32 to vector<2x256xf32>
    %328 = arith.mulf %327, %2 : vector<2x256xf32>
    %329 = arith.addf %325, %328 : vector<2x256xf32>
    %c3_178 = arith.constant 3 : index
    %c15_179 = arith.constant 15 : index
    %330 = memref.load %arg1[%c3_178, %c15_179] : memref<4x32xf32, #tpu.memory_space<smem>>
    %331 = vector.broadcast %330 : f32 to vector<2x256xf32>
    %332 = arith.mulf %331, %3 : vector<2x256xf32>
    %333 = arith.addf %329, %332 : vector<2x256xf32>
    %c0_180 = arith.constant 0 : index
    %c15_181 = arith.constant 15 : index
    %334 = memref.load %arg2[%c0_180, %c15_181] : memref<1x32xf32, #tpu.memory_space<smem>>
    %335 = vector.broadcast %334 : f32 to vector<2x256xf32>
    %336 = arith.addf %333, %335 : vector<2x256xf32>
    %cst_182 = arith.constant 0.000000e+00 : f32
    %337 = vector.broadcast %cst_182 : f32 to vector<2x256xf32>
    %338 = arith.maximumf %336, %337 : vector<2x256xf32>
    %c0_183 = arith.constant 0 : index
    %c3840 = arith.constant 3840 : index
    %339 = vector.load %arg9[%c0_183, %c3840] : memref<2x8192xf32, #tpu.memory_space<vmem>>, vector<2x256xf32>
    tpu.vector_store %arg9[%c0_183, %c3840], %338 {strides = array<i32>} : memref<2x8192xf32, #tpu.memory_space<vmem>>, vector<2x256xf32>,
    %c0_184 = arith.constant 0 : index
    %c16 = arith.constant 16 : index
    %340 = memref.load %arg1[%c0_184, %c16] : memref<4x32xf32, #tpu.memory_space<smem>>
    %341 = vector.broadcast %340 : f32 to vector<2x256xf32>
    %342 = arith.mulf %341, %0 : vector<2x256xf32>
    %c1_185 = arith.constant 1 : index
    %c16_186 = arith.constant 16 : index
    %343 = memref.load %arg1[%c1_185, %c16_186] : memref<4x32xf32, #tpu.memory_space<smem>>
    %344 = vector.broadcast %343 : f32 to vector<2x256xf32>
    %345 = arith.mulf %344, %1 : vector<2x256xf32>
    %346 = arith.addf %342, %345 : vector<2x256xf32>
    %c2_187 = arith.constant 2 : index
    %c16_188 = arith.constant 16 : index
    %347 = memref.load %arg1[%c2_187, %c16_188] : memref<4x32xf32, #tpu.memory_space<smem>>
    %348 = vector.broadcast %347 : f32 to vector<2x256xf32>
    %349 = arith.mulf %348, %2 : vector<2x256xf32>
    %350 = arith.addf %346, %349 : vector<2x256xf32>
    %c3_189 = arith.constant 3 : index
    %c16_190 = arith.constant 16 : index
    %351 = memref.load %arg1[%c3_189, %c16_190] : memref<4x32xf32, #tpu.memory_space<smem>>
    %352 = vector.broadcast %351 : f32 to vector<2x256xf32>
    %353 = arith.mulf %352, %3 : vector<2x256xf32>
    %354 = arith.addf %350, %353 : vector<2x256xf32>
    %c0_191 = arith.constant 0 : index
    %c16_192 = arith.constant 16 : index
    %355 = memref.load %arg2[%c0_191, %c16_192] : memref<1x32xf32, #tpu.memory_space<smem>>
    %356 = vector.broadcast %355 : f32 to vector<2x256xf32>
    %357 = arith.addf %354, %356 : vector<2x256xf32>
    %cst_193 = arith.constant 0.000000e+00 : f32
    %358 = vector.broadcast %cst_193 : f32 to vector<2x256xf32>
    %359 = arith.maximumf %357, %358 : vector<2x256xf32>
    %c0_194 = arith.constant 0 : index
    %c4096 = arith.constant 4096 : index
    %360 = vector.load %arg9[%c0_194, %c4096] : memref<2x8192xf32, #tpu.memory_space<vmem>>, vector<2x256xf32>
    tpu.vector_store %arg9[%c0_194, %c4096], %359 {strides = array<i32>} : memref<2x8192xf32, #tpu.memory_space<vmem>>, vector<2x256xf32>,
    %c0_195 = arith.constant 0 : index
    %c17 = arith.constant 17 : index
    %361 = memref.load %arg1[%c0_195, %c17] : memref<4x32xf32, #tpu.memory_space<smem>>
    %362 = vector.broadcast %361 : f32 to vector<2x256xf32>
    %363 = arith.mulf %362, %0 : vector<2x256xf32>
    %c1_196 = arith.constant 1 : index
    %c17_197 = arith.constant 17 : index
    %364 = memref.load %arg1[%c1_196, %c17_197] : memref<4x32xf32, #tpu.memory_space<smem>>
    %365 = vector.broadcast %364 : f32 to vector<2x256xf32>
    %366 = arith.mulf %365, %1 : vector<2x256xf32>
    %367 = arith.addf %363, %366 : vector<2x256xf32>
    %c2_198 = arith.constant 2 : index
    %c17_199 = arith.constant 17 : index
    %368 = memref.load %arg1[%c2_198, %c17_199] : memref<4x32xf32, #tpu.memory_space<smem>>
    %369 = vector.broadcast %368 : f32 to vector<2x256xf32>
    %370 = arith.mulf %369, %2 : vector<2x256xf32>
    %371 = arith.addf %367, %370 : vector<2x256xf32>
    %c3_200 = arith.constant 3 : index
    %c17_201 = arith.constant 17 : index
    %372 = memref.load %arg1[%c3_200, %c17_201] : memref<4x32xf32, #tpu.memory_space<smem>>
    %373 = vector.broadcast %372 : f32 to vector<2x256xf32>
    %374 = arith.mulf %373, %3 : vector<2x256xf32>
    %375 = arith.addf %371, %374 : vector<2x256xf32>
    %c0_202 = arith.constant 0 : index
    %c17_203 = arith.constant 17 : index
    %376 = memref.load %arg2[%c0_202, %c17_203] : memref<1x32xf32, #tpu.memory_space<smem>>
    %377 = vector.broadcast %376 : f32 to vector<2x256xf32>
    %378 = arith.addf %375, %377 : vector<2x256xf32>
    %cst_204 = arith.constant 0.000000e+00 : f32
    %379 = vector.broadcast %cst_204 : f32 to vector<2x256xf32>
    %380 = arith.maximumf %378, %379 : vector<2x256xf32>
    %c0_205 = arith.constant 0 : index
    %c4352 = arith.constant 4352 : index
    %381 = vector.load %arg9[%c0_205, %c4352] : memref<2x8192xf32, #tpu.memory_space<vmem>>, vector<2x256xf32>
    tpu.vector_store %arg9[%c0_205, %c4352], %380 {strides = array<i32>} : memref<2x8192xf32, #tpu.memory_space<vmem>>, vector<2x256xf32>,
    %c0_206 = arith.constant 0 : index
    %c18 = arith.constant 18 : index
    %382 = memref.load %arg1[%c0_206, %c18] : memref<4x32xf32, #tpu.memory_space<smem>>
    %383 = vector.broadcast %382 : f32 to vector<2x256xf32>
    %384 = arith.mulf %383, %0 : vector<2x256xf32>
    %c1_207 = arith.constant 1 : index
    %c18_208 = arith.constant 18 : index
    %385 = memref.load %arg1[%c1_207, %c18_208] : memref<4x32xf32, #tpu.memory_space<smem>>
    %386 = vector.broadcast %385 : f32 to vector<2x256xf32>
    %387 = arith.mulf %386, %1 : vector<2x256xf32>
    %388 = arith.addf %384, %387 : vector<2x256xf32>
    %c2_209 = arith.constant 2 : index
    %c18_210 = arith.constant 18 : index
    %389 = memref.load %arg1[%c2_209, %c18_210] : memref<4x32xf32, #tpu.memory_space<smem>>
    %390 = vector.broadcast %389 : f32 to vector<2x256xf32>
    %391 = arith.mulf %390, %2 : vector<2x256xf32>
    %392 = arith.addf %388, %391 : vector<2x256xf32>
    %c3_211 = arith.constant 3 : index
    %c18_212 = arith.constant 18 : index
    %393 = memref.load %arg1[%c3_211, %c18_212] : memref<4x32xf32, #tpu.memory_space<smem>>
    %394 = vector.broadcast %393 : f32 to vector<2x256xf32>
    %395 = arith.mulf %394, %3 : vector<2x256xf32>
    %396 = arith.addf %392, %395 : vector<2x256xf32>
    %c0_213 = arith.constant 0 : index
    %c18_214 = arith.constant 18 : index
    %397 = memref.load %arg2[%c0_213, %c18_214] : memref<1x32xf32, #tpu.memory_space<smem>>
    %398 = vector.broadcast %397 : f32 to vector<2x256xf32>
    %399 = arith.addf %396, %398 : vector<2x256xf32>
    %cst_215 = arith.constant 0.000000e+00 : f32
    %400 = vector.broadcast %cst_215 : f32 to vector<2x256xf32>
    %401 = arith.maximumf %399, %400 : vector<2x256xf32>
    %c0_216 = arith.constant 0 : index
    %c4608 = arith.constant 4608 : index
    %402 = vector.load %arg9[%c0_216, %c4608] : memref<2x8192xf32, #tpu.memory_space<vmem>>, vector<2x256xf32>
    tpu.vector_store %arg9[%c0_216, %c4608], %401 {strides = array<i32>} : memref<2x8192xf32, #tpu.memory_space<vmem>>, vector<2x256xf32>,
    %c0_217 = arith.constant 0 : index
    %c19 = arith.constant 19 : index
    %403 = memref.load %arg1[%c0_217, %c19] : memref<4x32xf32, #tpu.memory_space<smem>>
    %404 = vector.broadcast %403 : f32 to vector<2x256xf32>
    %405 = arith.mulf %404, %0 : vector<2x256xf32>
    %c1_218 = arith.constant 1 : index
    %c19_219 = arith.constant 19 : index
    %406 = memref.load %arg1[%c1_218, %c19_219] : memref<4x32xf32, #tpu.memory_space<smem>>
    %407 = vector.broadcast %406 : f32 to vector<2x256xf32>
    %408 = arith.mulf %407, %1 : vector<2x256xf32>
    %409 = arith.addf %405, %408 : vector<2x256xf32>
    %c2_220 = arith.constant 2 : index
    %c19_221 = arith.constant 19 : index
    %410 = memref.load %arg1[%c2_220, %c19_221] : memref<4x32xf32, #tpu.memory_space<smem>>
    %411 = vector.broadcast %410 : f32 to vector<2x256xf32>
    %412 = arith.mulf %411, %2 : vector<2x256xf32>
    %413 = arith.addf %409, %412 : vector<2x256xf32>
    %c3_222 = arith.constant 3 : index
    %c19_223 = arith.constant 19 : index
    %414 = memref.load %arg1[%c3_222, %c19_223] : memref<4x32xf32, #tpu.memory_space<smem>>
    %415 = vector.broadcast %414 : f32 to vector<2x256xf32>
    %416 = arith.mulf %415, %3 : vector<2x256xf32>
    %417 = arith.addf %413, %416 : vector<2x256xf32>
    %c0_224 = arith.constant 0 : index
    %c19_225 = arith.constant 19 : index
    %418 = memref.load %arg2[%c0_224, %c19_225] : memref<1x32xf32, #tpu.memory_space<smem>>
    %419 = vector.broadcast %418 : f32 to vector<2x256xf32>
    %420 = arith.addf %417, %419 : vector<2x256xf32>
    %cst_226 = arith.constant 0.000000e+00 : f32
    %421 = vector.broadcast %cst_226 : f32 to vector<2x256xf32>
    %422 = arith.maximumf %420, %421 : vector<2x256xf32>
    %c0_227 = arith.constant 0 : index
    %c4864 = arith.constant 4864 : index
    %423 = vector.load %arg9[%c0_227, %c4864] : memref<2x8192xf32, #tpu.memory_space<vmem>>, vector<2x256xf32>
    tpu.vector_store %arg9[%c0_227, %c4864], %422 {strides = array<i32>} : memref<2x8192xf32, #tpu.memory_space<vmem>>, vector<2x256xf32>,
    %c0_228 = arith.constant 0 : index
    %c20 = arith.constant 20 : index
    %424 = memref.load %arg1[%c0_228, %c20] : memref<4x32xf32, #tpu.memory_space<smem>>
    %425 = vector.broadcast %424 : f32 to vector<2x256xf32>
    %426 = arith.mulf %425, %0 : vector<2x256xf32>
    %c1_229 = arith.constant 1 : index
    %c20_230 = arith.constant 20 : index
    %427 = memref.load %arg1[%c1_229, %c20_230] : memref<4x32xf32, #tpu.memory_space<smem>>
    %428 = vector.broadcast %427 : f32 to vector<2x256xf32>
    %429 = arith.mulf %428, %1 : vector<2x256xf32>
    %430 = arith.addf %426, %429 : vector<2x256xf32>
    %c2_231 = arith.constant 2 : index
    %c20_232 = arith.constant 20 : index
    %431 = memref.load %arg1[%c2_231, %c20_232] : memref<4x32xf32, #tpu.memory_space<smem>>
    %432 = vector.broadcast %431 : f32 to vector<2x256xf32>
    %433 = arith.mulf %432, %2 : vector<2x256xf32>
    %434 = arith.addf %430, %433 : vector<2x256xf32>
    %c3_233 = arith.constant 3 : index
    %c20_234 = arith.constant 20 : index
    %435 = memref.load %arg1[%c3_233, %c20_234] : memref<4x32xf32, #tpu.memory_space<smem>>
    %436 = vector.broadcast %435 : f32 to vector<2x256xf32>
    %437 = arith.mulf %436, %3 : vector<2x256xf32>
    %438 = arith.addf %434, %437 : vector<2x256xf32>
    %c0_235 = arith.constant 0 : index
    %c20_236 = arith.constant 20 : index
    %439 = memref.load %arg2[%c0_235, %c20_236] : memref<1x32xf32, #tpu.memory_space<smem>>
    %440 = vector.broadcast %439 : f32 to vector<2x256xf32>
    %441 = arith.addf %438, %440 : vector<2x256xf32>
    %cst_237 = arith.constant 0.000000e+00 : f32
    %442 = vector.broadcast %cst_237 : f32 to vector<2x256xf32>
    %443 = arith.maximumf %441, %442 : vector<2x256xf32>
    %c0_238 = arith.constant 0 : index
    %c5120 = arith.constant 5120 : index
    %444 = vector.load %arg9[%c0_238, %c5120] : memref<2x8192xf32, #tpu.memory_space<vmem>>, vector<2x256xf32>
    tpu.vector_store %arg9[%c0_238, %c5120], %443 {strides = array<i32>} : memref<2x8192xf32, #tpu.memory_space<vmem>>, vector<2x256xf32>,
    %c0_239 = arith.constant 0 : index
    %c21 = arith.constant 21 : index
    %445 = memref.load %arg1[%c0_239, %c21] : memref<4x32xf32, #tpu.memory_space<smem>>
    %446 = vector.broadcast %445 : f32 to vector<2x256xf32>
    %447 = arith.mulf %446, %0 : vector<2x256xf32>
    %c1_240 = arith.constant 1 : index
    %c21_241 = arith.constant 21 : index
    %448 = memref.load %arg1[%c1_240, %c21_241] : memref<4x32xf32, #tpu.memory_space<smem>>
    %449 = vector.broadcast %448 : f32 to vector<2x256xf32>
    %450 = arith.mulf %449, %1 : vector<2x256xf32>
    %451 = arith.addf %447, %450 : vector<2x256xf32>
    %c2_242 = arith.constant 2 : index
    %c21_243 = arith.constant 21 : index
    %452 = memref.load %arg1[%c2_242, %c21_243] : memref<4x32xf32, #tpu.memory_space<smem>>
    %453 = vector.broadcast %452 : f32 to vector<2x256xf32>
    %454 = arith.mulf %453, %2 : vector<2x256xf32>
    %455 = arith.addf %451, %454 : vector<2x256xf32>
    %c3_244 = arith.constant 3 : index
    %c21_245 = arith.constant 21 : index
    %456 = memref.load %arg1[%c3_244, %c21_245] : memref<4x32xf32, #tpu.memory_space<smem>>
    %457 = vector.broadcast %456 : f32 to vector<2x256xf32>
    %458 = arith.mulf %457, %3 : vector<2x256xf32>
    %459 = arith.addf %455, %458 : vector<2x256xf32>
    %c0_246 = arith.constant 0 : index
    %c21_247 = arith.constant 21 : index
    %460 = memref.load %arg2[%c0_246, %c21_247] : memref<1x32xf32, #tpu.memory_space<smem>>
    %461 = vector.broadcast %460 : f32 to vector<2x256xf32>
    %462 = arith.addf %459, %461 : vector<2x256xf32>
    %cst_248 = arith.constant 0.000000e+00 : f32
    %463 = vector.broadcast %cst_248 : f32 to vector<2x256xf32>
    %464 = arith.maximumf %462, %463 : vector<2x256xf32>
    %c0_249 = arith.constant 0 : index
    %c5376 = arith.constant 5376 : index
    %465 = vector.load %arg9[%c0_249, %c5376] : memref<2x8192xf32, #tpu.memory_space<vmem>>, vector<2x256xf32>
    tpu.vector_store %arg9[%c0_249, %c5376], %464 {strides = array<i32>} : memref<2x8192xf32, #tpu.memory_space<vmem>>, vector<2x256xf32>,
    %c0_250 = arith.constant 0 : index
    %c22 = arith.constant 22 : index
    %466 = memref.load %arg1[%c0_250, %c22] : memref<4x32xf32, #tpu.memory_space<smem>>
    %467 = vector.broadcast %466 : f32 to vector<2x256xf32>
    %468 = arith.mulf %467, %0 : vector<2x256xf32>
    %c1_251 = arith.constant 1 : index
    %c22_252 = arith.constant 22 : index
    %469 = memref.load %arg1[%c1_251, %c22_252] : memref<4x32xf32, #tpu.memory_space<smem>>
    %470 = vector.broadcast %469 : f32 to vector<2x256xf32>
    %471 = arith.mulf %470, %1 : vector<2x256xf32>
    %472 = arith.addf %468, %471 : vector<2x256xf32>
    %c2_253 = arith.constant 2 : index
    %c22_254 = arith.constant 22 : index
    %473 = memref.load %arg1[%c2_253, %c22_254] : memref<4x32xf32, #tpu.memory_space<smem>>
    %474 = vector.broadcast %473 : f32 to vector<2x256xf32>
    %475 = arith.mulf %474, %2 : vector<2x256xf32>
    %476 = arith.addf %472, %475 : vector<2x256xf32>
    %c3_255 = arith.constant 3 : index
    %c22_256 = arith.constant 22 : index
    %477 = memref.load %arg1[%c3_255, %c22_256] : memref<4x32xf32, #tpu.memory_space<smem>>
    %478 = vector.broadcast %477 : f32 to vector<2x256xf32>
    %479 = arith.mulf %478, %3 : vector<2x256xf32>
    %480 = arith.addf %476, %479 : vector<2x256xf32>
    %c0_257 = arith.constant 0 : index
    %c22_258 = arith.constant 22 : index
    %481 = memref.load %arg2[%c0_257, %c22_258] : memref<1x32xf32, #tpu.memory_space<smem>>
    %482 = vector.broadcast %481 : f32 to vector<2x256xf32>
    %483 = arith.addf %480, %482 : vector<2x256xf32>
    %cst_259 = arith.constant 0.000000e+00 : f32
    %484 = vector.broadcast %cst_259 : f32 to vector<2x256xf32>
    %485 = arith.maximumf %483, %484 : vector<2x256xf32>
    %c0_260 = arith.constant 0 : index
    %c5632 = arith.constant 5632 : index
    %486 = vector.load %arg9[%c0_260, %c5632] : memref<2x8192xf32, #tpu.memory_space<vmem>>, vector<2x256xf32>
    tpu.vector_store %arg9[%c0_260, %c5632], %485 {strides = array<i32>} : memref<2x8192xf32, #tpu.memory_space<vmem>>, vector<2x256xf32>,
    %c0_261 = arith.constant 0 : index
    %c23 = arith.constant 23 : index
    %487 = memref.load %arg1[%c0_261, %c23] : memref<4x32xf32, #tpu.memory_space<smem>>
    %488 = vector.broadcast %487 : f32 to vector<2x256xf32>
    %489 = arith.mulf %488, %0 : vector<2x256xf32>
    %c1_262 = arith.constant 1 : index
    %c23_263 = arith.constant 23 : index
    %490 = memref.load %arg1[%c1_262, %c23_263] : memref<4x32xf32, #tpu.memory_space<smem>>
    %491 = vector.broadcast %490 : f32 to vector<2x256xf32>
    %492 = arith.mulf %491, %1 : vector<2x256xf32>
    %493 = arith.addf %489, %492 : vector<2x256xf32>
    %c2_264 = arith.constant 2 : index
    %c23_265 = arith.constant 23 : index
    %494 = memref.load %arg1[%c2_264, %c23_265] : memref<4x32xf32, #tpu.memory_space<smem>>
    %495 = vector.broadcast %494 : f32 to vector<2x256xf32>
    %496 = arith.mulf %495, %2 : vector<2x256xf32>
    %497 = arith.addf %493, %496 : vector<2x256xf32>
    %c3_266 = arith.constant 3 : index
    %c23_267 = arith.constant 23 : index
    %498 = memref.load %arg1[%c3_266, %c23_267] : memref<4x32xf32, #tpu.memory_space<smem>>
    %499 = vector.broadcast %498 : f32 to vector<2x256xf32>
    %500 = arith.mulf %499, %3 : vector<2x256xf32>
    %501 = arith.addf %497, %500 : vector<2x256xf32>
    %c0_268 = arith.constant 0 : index
    %c23_269 = arith.constant 23 : index
    %502 = memref.load %arg2[%c0_268, %c23_269] : memref<1x32xf32, #tpu.memory_space<smem>>
    %503 = vector.broadcast %502 : f32 to vector<2x256xf32>
    %504 = arith.addf %501, %503 : vector<2x256xf32>
    %cst_270 = arith.constant 0.000000e+00 : f32
    %505 = vector.broadcast %cst_270 : f32 to vector<2x256xf32>
    %506 = arith.maximumf %504, %505 : vector<2x256xf32>
    %c0_271 = arith.constant 0 : index
    %c5888 = arith.constant 5888 : index
    %507 = vector.load %arg9[%c0_271, %c5888] : memref<2x8192xf32, #tpu.memory_space<vmem>>, vector<2x256xf32>
    tpu.vector_store %arg9[%c0_271, %c5888], %506 {strides = array<i32>} : memref<2x8192xf32, #tpu.memory_space<vmem>>, vector<2x256xf32>,
    %c0_272 = arith.constant 0 : index
    %c24 = arith.constant 24 : index
    %508 = memref.load %arg1[%c0_272, %c24] : memref<4x32xf32, #tpu.memory_space<smem>>
    %509 = vector.broadcast %508 : f32 to vector<2x256xf32>
    %510 = arith.mulf %509, %0 : vector<2x256xf32>
    %c1_273 = arith.constant 1 : index
    %c24_274 = arith.constant 24 : index
    %511 = memref.load %arg1[%c1_273, %c24_274] : memref<4x32xf32, #tpu.memory_space<smem>>
    %512 = vector.broadcast %511 : f32 to vector<2x256xf32>
    %513 = arith.mulf %512, %1 : vector<2x256xf32>
    %514 = arith.addf %510, %513 : vector<2x256xf32>
    %c2_275 = arith.constant 2 : index
    %c24_276 = arith.constant 24 : index
    %515 = memref.load %arg1[%c2_275, %c24_276] : memref<4x32xf32, #tpu.memory_space<smem>>
    %516 = vector.broadcast %515 : f32 to vector<2x256xf32>
    %517 = arith.mulf %516, %2 : vector<2x256xf32>
    %518 = arith.addf %514, %517 : vector<2x256xf32>
    %c3_277 = arith.constant 3 : index
    %c24_278 = arith.constant 24 : index
    %519 = memref.load %arg1[%c3_277, %c24_278] : memref<4x32xf32, #tpu.memory_space<smem>>
    %520 = vector.broadcast %519 : f32 to vector<2x256xf32>
    %521 = arith.mulf %520, %3 : vector<2x256xf32>
    %522 = arith.addf %518, %521 : vector<2x256xf32>
    %c0_279 = arith.constant 0 : index
    %c24_280 = arith.constant 24 : index
    %523 = memref.load %arg2[%c0_279, %c24_280] : memref<1x32xf32, #tpu.memory_space<smem>>
    %524 = vector.broadcast %523 : f32 to vector<2x256xf32>
    %525 = arith.addf %522, %524 : vector<2x256xf32>
    %cst_281 = arith.constant 0.000000e+00 : f32
    %526 = vector.broadcast %cst_281 : f32 to vector<2x256xf32>
    %527 = arith.maximumf %525, %526 : vector<2x256xf32>
    %c0_282 = arith.constant 0 : index
    %c6144 = arith.constant 6144 : index
    %528 = vector.load %arg9[%c0_282, %c6144] : memref<2x8192xf32, #tpu.memory_space<vmem>>, vector<2x256xf32>
    tpu.vector_store %arg9[%c0_282, %c6144], %527 {strides = array<i32>} : memref<2x8192xf32, #tpu.memory_space<vmem>>, vector<2x256xf32>,
    %c0_283 = arith.constant 0 : index
    %c25 = arith.constant 25 : index
    %529 = memref.load %arg1[%c0_283, %c25] : memref<4x32xf32, #tpu.memory_space<smem>>
    %530 = vector.broadcast %529 : f32 to vector<2x256xf32>
    %531 = arith.mulf %530, %0 : vector<2x256xf32>
    %c1_284 = arith.constant 1 : index
    %c25_285 = arith.constant 25 : index
    %532 = memref.load %arg1[%c1_284, %c25_285] : memref<4x32xf32, #tpu.memory_space<smem>>
    %533 = vector.broadcast %532 : f32 to vector<2x256xf32>
    %534 = arith.mulf %533, %1 : vector<2x256xf32>
    %535 = arith.addf %531, %534 : vector<2x256xf32>
    %c2_286 = arith.constant 2 : index
    %c25_287 = arith.constant 25 : index
    %536 = memref.load %arg1[%c2_286, %c25_287] : memref<4x32xf32, #tpu.memory_space<smem>>
    %537 = vector.broadcast %536 : f32 to vector<2x256xf32>
    %538 = arith.mulf %537, %2 : vector<2x256xf32>
    %539 = arith.addf %535, %538 : vector<2x256xf32>
    %c3_288 = arith.constant 3 : index
    %c25_289 = arith.constant 25 : index
    %540 = memref.load %arg1[%c3_288, %c25_289] : memref<4x32xf32, #tpu.memory_space<smem>>
    %541 = vector.broadcast %540 : f32 to vector<2x256xf32>
    %542 = arith.mulf %541, %3 : vector<2x256xf32>
    %543 = arith.addf %539, %542 : vector<2x256xf32>
    %c0_290 = arith.constant 0 : index
    %c25_291 = arith.constant 25 : index
    %544 = memref.load %arg2[%c0_290, %c25_291] : memref<1x32xf32, #tpu.memory_space<smem>>
    %545 = vector.broadcast %544 : f32 to vector<2x256xf32>
    %546 = arith.addf %543, %545 : vector<2x256xf32>
    %cst_292 = arith.constant 0.000000e+00 : f32
    %547 = vector.broadcast %cst_292 : f32 to vector<2x256xf32>
    %548 = arith.maximumf %546, %547 : vector<2x256xf32>
    %c0_293 = arith.constant 0 : index
    %c6400 = arith.constant 6400 : index
    %549 = vector.load %arg9[%c0_293, %c6400] : memref<2x8192xf32, #tpu.memory_space<vmem>>, vector<2x256xf32>
    tpu.vector_store %arg9[%c0_293, %c6400], %548 {strides = array<i32>} : memref<2x8192xf32, #tpu.memory_space<vmem>>, vector<2x256xf32>,
    %c0_294 = arith.constant 0 : index
    %c26 = arith.constant 26 : index
    %550 = memref.load %arg1[%c0_294, %c26] : memref<4x32xf32, #tpu.memory_space<smem>>
    %551 = vector.broadcast %550 : f32 to vector<2x256xf32>
    %552 = arith.mulf %551, %0 : vector<2x256xf32>
    %c1_295 = arith.constant 1 : index
    %c26_296 = arith.constant 26 : index
    %553 = memref.load %arg1[%c1_295, %c26_296] : memref<4x32xf32, #tpu.memory_space<smem>>
    %554 = vector.broadcast %553 : f32 to vector<2x256xf32>
    %555 = arith.mulf %554, %1 : vector<2x256xf32>
    %556 = arith.addf %552, %555 : vector<2x256xf32>
    %c2_297 = arith.constant 2 : index
    %c26_298 = arith.constant 26 : index
    %557 = memref.load %arg1[%c2_297, %c26_298] : memref<4x32xf32, #tpu.memory_space<smem>>
    %558 = vector.broadcast %557 : f32 to vector<2x256xf32>
    %559 = arith.mulf %558, %2 : vector<2x256xf32>
    %560 = arith.addf %556, %559 : vector<2x256xf32>
    %c3_299 = arith.constant 3 : index
    %c26_300 = arith.constant 26 : index
    %561 = memref.load %arg1[%c3_299, %c26_300] : memref<4x32xf32, #tpu.memory_space<smem>>
    %562 = vector.broadcast %561 : f32 to vector<2x256xf32>
    %563 = arith.mulf %562, %3 : vector<2x256xf32>
    %564 = arith.addf %560, %563 : vector<2x256xf32>
    %c0_301 = arith.constant 0 : index
    %c26_302 = arith.constant 26 : index
    %565 = memref.load %arg2[%c0_301, %c26_302] : memref<1x32xf32, #tpu.memory_space<smem>>
    %566 = vector.broadcast %565 : f32 to vector<2x256xf32>
    %567 = arith.addf %564, %566 : vector<2x256xf32>
    %cst_303 = arith.constant 0.000000e+00 : f32
    %568 = vector.broadcast %cst_303 : f32 to vector<2x256xf32>
    %569 = arith.maximumf %567, %568 : vector<2x256xf32>
    %c0_304 = arith.constant 0 : index
    %c6656 = arith.constant 6656 : index
    %570 = vector.load %arg9[%c0_304, %c6656] : memref<2x8192xf32, #tpu.memory_space<vmem>>, vector<2x256xf32>
    tpu.vector_store %arg9[%c0_304, %c6656], %569 {strides = array<i32>} : memref<2x8192xf32, #tpu.memory_space<vmem>>, vector<2x256xf32>,
    %c0_305 = arith.constant 0 : index
    %c27 = arith.constant 27 : index
    %571 = memref.load %arg1[%c0_305, %c27] : memref<4x32xf32, #tpu.memory_space<smem>>
    %572 = vector.broadcast %571 : f32 to vector<2x256xf32>
    %573 = arith.mulf %572, %0 : vector<2x256xf32>
    %c1_306 = arith.constant 1 : index
    %c27_307 = arith.constant 27 : index
    %574 = memref.load %arg1[%c1_306, %c27_307] : memref<4x32xf32, #tpu.memory_space<smem>>
    %575 = vector.broadcast %574 : f32 to vector<2x256xf32>
    %576 = arith.mulf %575, %1 : vector<2x256xf32>
    %577 = arith.addf %573, %576 : vector<2x256xf32>
    %c2_308 = arith.constant 2 : index
    %c27_309 = arith.constant 27 : index
    %578 = memref.load %arg1[%c2_308, %c27_309] : memref<4x32xf32, #tpu.memory_space<smem>>
    %579 = vector.broadcast %578 : f32 to vector<2x256xf32>
    %580 = arith.mulf %579, %2 : vector<2x256xf32>
    %581 = arith.addf %577, %580 : vector<2x256xf32>
    %c3_310 = arith.constant 3 : index
    %c27_311 = arith.constant 27 : index
    %582 = memref.load %arg1[%c3_310, %c27_311] : memref<4x32xf32, #tpu.memory_space<smem>>
    %583 = vector.broadcast %582 : f32 to vector<2x256xf32>
    %584 = arith.mulf %583, %3 : vector<2x256xf32>
    %585 = arith.addf %581, %584 : vector<2x256xf32>
    %c0_312 = arith.constant 0 : index
    %c27_313 = arith.constant 27 : index
    %586 = memref.load %arg2[%c0_312, %c27_313] : memref<1x32xf32, #tpu.memory_space<smem>>
    %587 = vector.broadcast %586 : f32 to vector<2x256xf32>
    %588 = arith.addf %585, %587 : vector<2x256xf32>
    %cst_314 = arith.constant 0.000000e+00 : f32
    %589 = vector.broadcast %cst_314 : f32 to vector<2x256xf32>
    %590 = arith.maximumf %588, %589 : vector<2x256xf32>
    %c0_315 = arith.constant 0 : index
    %c6912 = arith.constant 6912 : index
    %591 = vector.load %arg9[%c0_315, %c6912] : memref<2x8192xf32, #tpu.memory_space<vmem>>, vector<2x256xf32>
    tpu.vector_store %arg9[%c0_315, %c6912], %590 {strides = array<i32>} : memref<2x8192xf32, #tpu.memory_space<vmem>>, vector<2x256xf32>,
    %c0_316 = arith.constant 0 : index
    %c28 = arith.constant 28 : index
    %592 = memref.load %arg1[%c0_316, %c28] : memref<4x32xf32, #tpu.memory_space<smem>>
    %593 = vector.broadcast %592 : f32 to vector<2x256xf32>
    %594 = arith.mulf %593, %0 : vector<2x256xf32>
    %c1_317 = arith.constant 1 : index
    %c28_318 = arith.constant 28 : index
    %595 = memref.load %arg1[%c1_317, %c28_318] : memref<4x32xf32, #tpu.memory_space<smem>>
    %596 = vector.broadcast %595 : f32 to vector<2x256xf32>
    %597 = arith.mulf %596, %1 : vector<2x256xf32>
    %598 = arith.addf %594, %597 : vector<2x256xf32>
    %c2_319 = arith.constant 2 : index
    %c28_320 = arith.constant 28 : index
    %599 = memref.load %arg1[%c2_319, %c28_320] : memref<4x32xf32, #tpu.memory_space<smem>>
    %600 = vector.broadcast %599 : f32 to vector<2x256xf32>
    %601 = arith.mulf %600, %2 : vector<2x256xf32>
    %602 = arith.addf %598, %601 : vector<2x256xf32>
    %c3_321 = arith.constant 3 : index
    %c28_322 = arith.constant 28 : index
    %603 = memref.load %arg1[%c3_321, %c28_322] : memref<4x32xf32, #tpu.memory_space<smem>>
    %604 = vector.broadcast %603 : f32 to vector<2x256xf32>
    %605 = arith.mulf %604, %3 : vector<2x256xf32>
    %606 = arith.addf %602, %605 : vector<2x256xf32>
    %c0_323 = arith.constant 0 : index
    %c28_324 = arith.constant 28 : index
    %607 = memref.load %arg2[%c0_323, %c28_324] : memref<1x32xf32, #tpu.memory_space<smem>>
    %608 = vector.broadcast %607 : f32 to vector<2x256xf32>
    %609 = arith.addf %606, %608 : vector<2x256xf32>
    %cst_325 = arith.constant 0.000000e+00 : f32
    %610 = vector.broadcast %cst_325 : f32 to vector<2x256xf32>
    %611 = arith.maximumf %609, %610 : vector<2x256xf32>
    %c0_326 = arith.constant 0 : index
    %c7168 = arith.constant 7168 : index
    %612 = vector.load %arg9[%c0_326, %c7168] : memref<2x8192xf32, #tpu.memory_space<vmem>>, vector<2x256xf32>
    tpu.vector_store %arg9[%c0_326, %c7168], %611 {strides = array<i32>} : memref<2x8192xf32, #tpu.memory_space<vmem>>, vector<2x256xf32>,
    %c0_327 = arith.constant 0 : index
    %c29 = arith.constant 29 : index
    %613 = memref.load %arg1[%c0_327, %c29] : memref<4x32xf32, #tpu.memory_space<smem>>
    %614 = vector.broadcast %613 : f32 to vector<2x256xf32>
    %615 = arith.mulf %614, %0 : vector<2x256xf32>
    %c1_328 = arith.constant 1 : index
    %c29_329 = arith.constant 29 : index
    %616 = memref.load %arg1[%c1_328, %c29_329] : memref<4x32xf32, #tpu.memory_space<smem>>
    %617 = vector.broadcast %616 : f32 to vector<2x256xf32>
    %618 = arith.mulf %617, %1 : vector<2x256xf32>
    %619 = arith.addf %615, %618 : vector<2x256xf32>
    %c2_330 = arith.constant 2 : index
    %c29_331 = arith.constant 29 : index
    %620 = memref.load %arg1[%c2_330, %c29_331] : memref<4x32xf32, #tpu.memory_space<smem>>
    %621 = vector.broadcast %620 : f32 to vector<2x256xf32>
    %622 = arith.mulf %621, %2 : vector<2x256xf32>
    %623 = arith.addf %619, %622 : vector<2x256xf32>
    %c3_332 = arith.constant 3 : index
    %c29_333 = arith.constant 29 : index
    %624 = memref.load %arg1[%c3_332, %c29_333] : memref<4x32xf32, #tpu.memory_space<smem>>
    %625 = vector.broadcast %624 : f32 to vector<2x256xf32>
    %626 = arith.mulf %625, %3 : vector<2x256xf32>
    %627 = arith.addf %623, %626 : vector<2x256xf32>
    %c0_334 = arith.constant 0 : index
    %c29_335 = arith.constant 29 : index
    %628 = memref.load %arg2[%c0_334, %c29_335] : memref<1x32xf32, #tpu.memory_space<smem>>
    %629 = vector.broadcast %628 : f32 to vector<2x256xf32>
    %630 = arith.addf %627, %629 : vector<2x256xf32>
    %cst_336 = arith.constant 0.000000e+00 : f32
    %631 = vector.broadcast %cst_336 : f32 to vector<2x256xf32>
    %632 = arith.maximumf %630, %631 : vector<2x256xf32>
    %c0_337 = arith.constant 0 : index
    %c7424 = arith.constant 7424 : index
    %633 = vector.load %arg9[%c0_337, %c7424] : memref<2x8192xf32, #tpu.memory_space<vmem>>, vector<2x256xf32>
    tpu.vector_store %arg9[%c0_337, %c7424], %632 {strides = array<i32>} : memref<2x8192xf32, #tpu.memory_space<vmem>>, vector<2x256xf32>,
    %c0_338 = arith.constant 0 : index
    %c30 = arith.constant 30 : index
    %634 = memref.load %arg1[%c0_338, %c30] : memref<4x32xf32, #tpu.memory_space<smem>>
    %635 = vector.broadcast %634 : f32 to vector<2x256xf32>
    %636 = arith.mulf %635, %0 : vector<2x256xf32>
    %c1_339 = arith.constant 1 : index
    %c30_340 = arith.constant 30 : index
    %637 = memref.load %arg1[%c1_339, %c30_340] : memref<4x32xf32, #tpu.memory_space<smem>>
    %638 = vector.broadcast %637 : f32 to vector<2x256xf32>
    %639 = arith.mulf %638, %1 : vector<2x256xf32>
    %640 = arith.addf %636, %639 : vector<2x256xf32>
    %c2_341 = arith.constant 2 : index
    %c30_342 = arith.constant 30 : index
    %641 = memref.load %arg1[%c2_341, %c30_342] : memref<4x32xf32, #tpu.memory_space<smem>>
    %642 = vector.broadcast %641 : f32 to vector<2x256xf32>
    %643 = arith.mulf %642, %2 : vector<2x256xf32>
    %644 = arith.addf %640, %643 : vector<2x256xf32>
    %c3_343 = arith.constant 3 : index
    %c30_344 = arith.constant 30 : index
    %645 = memref.load %arg1[%c3_343, %c30_344] : memref<4x32xf32, #tpu.memory_space<smem>>
    %646 = vector.broadcast %645 : f32 to vector<2x256xf32>
    %647 = arith.mulf %646, %3 : vector<2x256xf32>
    %648 = arith.addf %644, %647 : vector<2x256xf32>
    %c0_345 = arith.constant 0 : index
    %c30_346 = arith.constant 30 : index
    %649 = memref.load %arg2[%c0_345, %c30_346] : memref<1x32xf32, #tpu.memory_space<smem>>
    %650 = vector.broadcast %649 : f32 to vector<2x256xf32>
    %651 = arith.addf %648, %650 : vector<2x256xf32>
    %cst_347 = arith.constant 0.000000e+00 : f32
    %652 = vector.broadcast %cst_347 : f32 to vector<2x256xf32>
    %653 = arith.maximumf %651, %652 : vector<2x256xf32>
    %c0_348 = arith.constant 0 : index
    %c7680 = arith.constant 7680 : index
    %654 = vector.load %arg9[%c0_348, %c7680] : memref<2x8192xf32, #tpu.memory_space<vmem>>, vector<2x256xf32>
    tpu.vector_store %arg9[%c0_348, %c7680], %653 {strides = array<i32>} : memref<2x8192xf32, #tpu.memory_space<vmem>>, vector<2x256xf32>,
    %c0_349 = arith.constant 0 : index
    %c31 = arith.constant 31 : index
    %655 = memref.load %arg1[%c0_349, %c31] : memref<4x32xf32, #tpu.memory_space<smem>>
    %656 = vector.broadcast %655 : f32 to vector<2x256xf32>
    %657 = arith.mulf %656, %0 : vector<2x256xf32>
    %c1_350 = arith.constant 1 : index
    %c31_351 = arith.constant 31 : index
    %658 = memref.load %arg1[%c1_350, %c31_351] : memref<4x32xf32, #tpu.memory_space<smem>>
    %659 = vector.broadcast %658 : f32 to vector<2x256xf32>
    %660 = arith.mulf %659, %1 : vector<2x256xf32>
    %661 = arith.addf %657, %660 : vector<2x256xf32>
    %c2_352 = arith.constant 2 : index
    %c31_353 = arith.constant 31 : index
    %662 = memref.load %arg1[%c2_352, %c31_353] : memref<4x32xf32, #tpu.memory_space<smem>>
    %663 = vector.broadcast %662 : f32 to vector<2x256xf32>
    %664 = arith.mulf %663, %2 : vector<2x256xf32>
    %665 = arith.addf %661, %664 : vector<2x256xf32>
    %c3_354 = arith.constant 3 : index
    %c31_355 = arith.constant 31 : index
    %666 = memref.load %arg1[%c3_354, %c31_355] : memref<4x32xf32, #tpu.memory_space<smem>>
    %667 = vector.broadcast %666 : f32 to vector<2x256xf32>
    %668 = arith.mulf %667, %3 : vector<2x256xf32>
    %669 = arith.addf %665, %668 : vector<2x256xf32>
    %c0_356 = arith.constant 0 : index
    %c31_357 = arith.constant 31 : index
    %670 = memref.load %arg2[%c0_356, %c31_357] : memref<1x32xf32, #tpu.memory_space<smem>>
    %671 = vector.broadcast %670 : f32 to vector<2x256xf32>
    %672 = arith.addf %669, %671 : vector<2x256xf32>
    %cst_358 = arith.constant 0.000000e+00 : f32
    %673 = vector.broadcast %cst_358 : f32 to vector<2x256xf32>
    %674 = arith.maximumf %672, %673 : vector<2x256xf32>
    %c0_359 = arith.constant 0 : index
    %c7936 = arith.constant 7936 : index
    %675 = vector.load %arg9[%c0_359, %c7936] : memref<2x8192xf32, #tpu.memory_space<vmem>>, vector<2x256xf32>
    tpu.vector_store %arg9[%c0_359, %c7936], %674 {strides = array<i32>} : memref<2x8192xf32, #tpu.memory_space<vmem>>, vector<2x256xf32>,
    %c0_360 = arith.constant 0 : index
    %c0_361 = arith.constant 0 : index
    %676 = vector.load %arg9[%c0_360, %c0_361] : memref<2x8192xf32, #tpu.memory_space<vmem>>, vector<2x8192xf32>
    %c0_362 = arith.constant 0 : index
    %c0_363 = arith.constant 0 : index
    %677 = vector.load %arg4[%c0_362, %c0_363] : memref<8192x128xf32, #tpu.memory_space<vmem>>, vector<8192x128xf32>
    %cst_364 = arith.constant dense<0.000000e+00> : vector<2x128xf32>
    %678 = tpu.matmul %676, %677, %cst_364 {dimension_numbers = #tpu.dot_dimension_numbers<[1], [0], [0], [1], [0, 0, 1, 1], [], []>} : vector<2x8192xf32>, vector<8192x128xf32>, vector<2x128xf32> -> vector<2x128xf32>
    %c0_365 = arith.constant 0 : index
    %c0_366 = arith.constant 0 : index
    %679 = vector.load %arg8[%c0_365, %c0_366] : memref<2x128xf32, #tpu.memory_space<vmem>>, vector<2x128xf32>
    tpu.vector_store %arg8[%c0_365, %c0_366], %678 {strides = array<i32>} : memref<2x128xf32, #tpu.memory_space<vmem>>, vector<2x128xf32>,
    %680 = vector.extract_strided_slice %678 {offsets = [0, 0], sizes = [2, 32], strides = [1, 1]} : vector<2x128xf32> to vector<2x32xf32>
    %681 = vector.extract_strided_slice %678 {offsets = [0, 32], sizes = [2, 32], strides = [1, 1]} : vector<2x128xf32> to vector<2x32xf32>
    %682 = arith.addf %680, %681 : vector<2x32xf32>
    %683 = vector.extract_strided_slice %678 {offsets = [0, 64], sizes = [2, 32], strides = [1, 1]} : vector<2x128xf32> to vector<2x32xf32>
    %684 = arith.addf %682, %683 : vector<2x32xf32>
    %685 = vector.extract_strided_slice %678 {offsets = [0, 96], sizes = [2, 32], strides = [1, 1]} : vector<2x128xf32> to vector<2x32xf32>
    %686 = arith.addf %684, %685 : vector<2x32xf32>
    %cst_367 = arith.constant 2.500000e-01 : f32
    %687 = vector.broadcast %cst_367 : f32 to vector<2x32xf32>
    %688 = arith.mulf %686, %687 : vector<2x32xf32>
    %c0_368 = arith.constant 0 : index
    %c0_369 = arith.constant 0 : index
    %689 = vector.load %arg5[%c0_368, %c0_369] : memref<32x128xf32, #tpu.memory_space<vmem>>, vector<32x128xf32>
    %cst_370 = arith.constant dense<0.000000e+00> : vector<2x128xf32>
    %690 = tpu.matmul %688, %689, %cst_370 {dimension_numbers = #tpu.dot_dimension_numbers<[1], [0], [0], [1], [0, 0, 1, 1], [], []>} : vector<2x32xf32>, vector<32x128xf32>, vector<2x128xf32> -> vector<2x128xf32>
    %c0_371 = arith.constant 0 : index
    %c0_372 = arith.constant 0 : index
    %691 = vector.load %arg6[%c0_371, %c0_372] : memref<1x128xf32, #tpu.memory_space<vmem>>, vector<1x128xf32>
    %692 = vector.broadcast %691 : vector<1x128xf32> to vector<2x128xf32>
    %693 = arith.addf %690, %692 : vector<2x128xf32>
    %694 = tpu.iota {dimensions = array<i32: 1>} : vector<2x128xi32>
    %c5_i32 = arith.constant 5 : i32
    %695 = vector.broadcast %c5_i32 : i32 to vector<2x128xi32>
    %696 = arith.cmpi sge, %694, %695 : vector<2x128xi32>
    %c21_i32 = arith.constant 21 : i32
    %697 = vector.broadcast %c21_i32 : i32 to vector<2x128xi32>
    %698 = arith.cmpi slt, %694, %697 : vector<2x128xi32>
    %699 = arith.andi %696, %698 : vector<2x128xi1>
    %700 = math.tanh %693 : vector<2x128xf32>
    %701 = arith.select %699, %700, %693 : vector<2x128xi1>, vector<2x128xf32>
    %c0_373 = arith.constant 0 : index
    %c0_374 = arith.constant 0 : index
    %702 = vector.load %arg7[%c0_373, %c0_374] : memref<2x128xf32, #tpu.memory_space<vmem>>, vector<2x128xf32>
    tpu.vector_store %arg7[%c0_373, %c0_374], %701 {strides = array<i32>} : memref<2x128xf32, #tpu.memory_space<vmem>>, vector<2x128xf32>,
    return
  }
  func.func @transform_0(%arg0: i32) -> (i32, i32) {
    %c0_i32 = arith.constant 0 : i32
    %c0_i32_0 = arith.constant 0 : i32
    %c0_i32_1 = arith.constant 0 : i32
    return %c0_i32, %c0_i32_0 : i32, i32
  }
  func.func @transform_1(%arg0: i32) -> (i32, i32) {
    %c0_i32 = arith.constant 0 : i32
    %c0_i32_0 = arith.constant 0 : i32
    %c0_i32_1 = arith.constant 0 : i32
    return %c0_i32, %c0_i32_0 : i32, i32
  }
  func.func @transform_2(%arg0: i32) -> (i32, i32) {
    %c0_i32 = arith.constant 0 : i32
    %c0_i32_0 = arith.constant 0 : i32
    return %arg0, %c0_i32 : i32, i32
  }
  func.func @transform_3(%arg0: i32) -> (i32, i32) {
    %c0_i32 = arith.constant 0 : i32
    %c0_i32_0 = arith.constant 0 : i32
    %c0_i32_1 = arith.constant 0 : i32
    return %c0_i32, %c0_i32_0 : i32, i32
  }
  func.func @transform_4(%arg0: i32) -> (i32, i32) {
    %c0_i32 = arith.constant 0 : i32
    %c0_i32_0 = arith.constant 0 : i32
    %c0_i32_1 = arith.constant 0 : i32
    return %c0_i32, %c0_i32_0 : i32, i32
  }
  func.func @transform_5(%arg0: i32) -> (i32, i32) {
    %c0_i32 = arith.constant 0 : i32
    %c0_i32_0 = arith.constant 0 : i32
    %c0_i32_1 = arith.constant 0 : i32
    return %c0_i32, %c0_i32_0 : i32, i32
  }
  func.func @transform_6(%arg0: i32) -> (i32, i32) {
    %c0_i32 = arith.constant 0 : i32
    %c0_i32_0 = arith.constant 0 : i32
    return %arg0, %c0_i32 : i32, i32
  }
  func.func @transform_7(%arg0: i32) -> (i32, i32) {
    %c0_i32 = arith.constant 0 : i32
    %c0_i32_0 = arith.constant 0 : i32
    return %arg0, %c0_i32 : i32, i32
  }
}

</mosaic_0001>

<llo_original>
// kernel: tpu_custom_call.1
$region0: #{tpu_custom_call.1}
  #allocation0 [shape = 'u32[]', space=smem, size = 0x4, offset = 0x4, fixed_abs, tag = 'smem constant byte address 0x4 - core index']
  #allocation1 [shape = 'u32[144,128]{1,0:T(1,128)}', space=vmem, size = 0x12000, scoped, tag = 'internal scratch']
  #allocation2 [shape = 'f32[2,8192]{1,0:T(2,128)}', space=vmem, size = 0x10000, scoped, tag = 'scratch operand']
  %s0 = inlined_call_operand.hbm [shape: f32[4,32], index: 0, kind: input, shape index: {}]
  %s1 = inlined_call_operand.hbm [shape: f32[1,32], index: 1, kind: input, shape index: {}]
  %s2 = inlined_call_operand.hbm [shape: f32[2,1024], index: 2, kind: input, shape index: {}]
  %s3 = inlined_call_operand.hbm [shape: f32[8192,128], index: 3, kind: input, shape index: {}]
  %s4 = inlined_call_operand.hbm [shape: f32[32,128], index: 4, kind: input, shape index: {}]
  %s5 = inlined_call_operand.hbm [shape: f32[1,128], index: 5, kind: input, shape index: {}]
  %s6 = inlined_call_operand.hbm [shape: f32[2,128], index: 6, kind: output, shape index: {0}]
  %s7 = inlined_call_operand.hbm [shape: f32[2,128], index: 7, kind: output, shape index: {1}]
  %8 = xla_tuple %s6, %s7
  %s9 = sld [smem:[#allocation0]]
  $region66: #{tpu_custom_call.1} parent=0
    _
  %s11 = ssub.s32 1, %s9
  %s12 = scalar_select 0, %s11, %s9
  $region1: #{tpu_custom_call.1} parent=0
    #allocation3 [shape = 'u8[2048]{0}', space=smem, size = 0x800, scoped, tag = 'input window, operand 0, single buffered']
    #allocation4 [shape = 's32[1]{0}', space=sflag, size = 0x4, scoped, tag = 'scoped memory for tpu_custom_call.1']
    #allocation5 [shape = 's32[1]{0}', space=sflag, size = 0x4, scoped, tag = 'scoped memory for tpu_custom_call.1']
    #allocation6 [shape = 's32[1]{0}', space=sflag, size = 0x4, scoped, tag = 'scoped memory for tpu_custom_call.1']
    #allocation7 [shape = 'u8[512]{0}', space=smem, size = 0x200, scoped, tag = 'input window, operand 1, single buffered']
    #allocation8 [shape = 's32[1]{0}', space=sflag, size = 0x4, scoped, tag = 'scoped memory for tpu_custom_call.1']
    #allocation9 [shape = 'u8[8192]{0}', space=vmem, size = 0x2000, scoped, tag = 'input window, operand 2, single buffered']
    #allocation10 [shape = 'u8[4194304]{0}', space=vmem, size = 0x400000, scoped, tag = 'input window, operand 3, single buffered']
    #allocation11 [shape = 's32[1]{0}', space=sflag, size = 0x4, scoped, tag = 'scoped memory for tpu_custom_call.1']
    #allocation12 [shape = 'u8[16384]{0}', space=vmem, size = 0x4000, scoped, tag = 'input window, operand 4, single buffered']
    #allocation13 [shape = 'u8[512]{0}', space=vmem, size = 0x400, scoped, tag = 'input window, operand 5, single buffered']
    #allocation14 [shape = 's32[1]{0}', space=sflag, size = 0x4, scoped, tag = 'scoped memory for tpu_custom_call.1']
    #allocation15 [shape = 'u8[1024]{0}', space=vmem, size = 0x400, scoped, tag = 'output window, operand 0, single buffered']
    #allocation16 [shape = 'u8[1024]{0}', space=vmem, size = 0x400, scoped, tag = 'output window, operand 1, single buffered']
    #allocation17 [shape = 's32[1]{0}', space=sflag, size = 0x4, scoped, tag = 'scoped memory for tpu_custom_call.1']
    %13 = vsyncpa [#allocation6], 0
    %14 = vsyncpa [#allocation8], 0
    %15 = vsyncpa [#allocation4], 0
    %16 = vsyncpa [#allocation11], 0
    %17 = vsyncpa [#allocation14], 0
    %18 = vsyncpa [#allocation5], 0
    %19 = vsyncpa [#allocation17], 0
    // Predicated region
    $region2: #{tpu_custom_call.1} parent=1 // pred_check
      _
    $region3: #{tpu_custom_call.1} parent=1 // pred_check_branch
      %21 = sbr.rel (0) target = $region5
    $region4: #{tpu_custom_call.1} parent=1 // pred_region
      %s23 = ssub.s32 64, 64
      %24 = vsyncadd [#allocation6], %s23
      %27 = dma.hbm_to_smem %s0, 64, [#allocation3], [#allocation6]
    $region5: #{tpu_custom_call.1} parent=1 // pred_fallthru
      _
    // Predicated region
    $region6: #{tpu_custom_call.1} parent=1 // pred_check
      _
    $region7: #{tpu_custom_call.1} parent=1 // pred_check_branch
      %29 = sbr.rel (0) target = $region9
    $region8: #{tpu_custom_call.1} parent=1 // pred_region
      %s31 = ssub.s32 16, 16
      %32 = vsyncadd [#allocation8], %s31
      %35 = dma.hbm_to_smem %s1, 16, [#allocation7], [#allocation8]
    $region9: #{tpu_custom_call.1} parent=1 // pred_fallthru
      _
    // Predicated region
    $region10: #{tpu_custom_call.1} parent=1 // pred_check
      _
    $region11: #{tpu_custom_call.1} parent=1 // pred_check_branch
      %37 = sbr.rel (0) target = $region13
    $region12: #{tpu_custom_call.1} parent=1 // pred_region
      %s39 = ssub.s32 256, 256
      %40 = vsyncadd [#allocation4], %s39
      %s42 = sshll.u32 [#allocation9], 4
      %s43 = int_to_ptr.vmem [resolvable:$true] %s42
      %45 = dma.hbm_to_vmem [thread:$0]  %s2, 256, %s43, [#allocation4]
    $region13: #{tpu_custom_call.1} parent=1 // pred_fallthru
      _
    // Predicated region
    $region14: #{tpu_custom_call.1} parent=1 // pred_check
      _
    $region15: #{tpu_custom_call.1} parent=1 // pred_check_branch
      %47 = sbr.rel (0) target = $region17
    $region16: #{tpu_custom_call.1} parent=1 // pred_region
      %s49 = ssub.s32 131072, 131072
      %50 = vsyncadd [#allocation11], %s49
      %s51 = sshll.u32 [#allocation10], 4
      %s52 = int_to_ptr.vmem [resolvable:$true] %s51
      %57 = dma.hbm_to_vmem [thread:$0]  %s3, 131072, %s52, [#allocation11], 128, 128, 8
    $region17: #{tpu_custom_call.1} parent=1 // pred_fallthru
      _
    // Predicated region
    $region18: #{tpu_custom_call.1} parent=1 // pred_check
      _
    $region19: #{tpu_custom_call.1} parent=1 // pred_check_branch
      %59 = sbr.rel (0) target = $region21
    $region20: #{tpu_custom_call.1} parent=1 // pred_region
      %s61 = ssub.s32 512, 512
      %62 = vsyncadd [#allocation11], %s61
      %s63 = sshll.u32 [#allocation12], 4
      %s64 = int_to_ptr.vmem [resolvable:$true] %s63
      %69 = dma.hbm_to_vmem [thread:$0]  %s4, 512, %s64, [#allocation11], 128, 128, 8
    $region21: #{tpu_custom_call.1} parent=1 // pred_fallthru
      _
    // Predicated region
    $region22: #{tpu_custom_call.1} parent=1 // pred_check
      _
    $region23: #{tpu_custom_call.1} parent=1 // pred_check_branch
      %71 = sbr.rel (0) target = $region25
    $region24: #{tpu_custom_call.1} parent=1 // pred_region
      %s73 = ssub.s32 16, 16
      %74 = vsyncadd [#allocation14], %s73
      %s76 = sshll.u32 [#allocation13], 4
      %s77 = int_to_ptr.vmem [resolvable:$true] %s76
      %79 = dma.hbm_to_vmem [thread:$0]  %s5, 16, %s77, [#allocation14]
    $region25: #{tpu_custom_call.1} parent=1 // pred_fallthru
      _
    // Predicated region
    $region26: #{tpu_custom_call.1} parent=1 // pred_check
      _
    $region27: #{tpu_custom_call.1} parent=1 // pred_check_branch
      %81 = sbr.rel (0) target = $region29
    $region28: #{tpu_custom_call.1} parent=1 // pred_region
      %82 = dma.done [#allocation6], 64
    $region29: #{tpu_custom_call.1} parent=1 // pred_fallthru
      _
    // Predicated region
    $region30: #{tpu_custom_call.1} parent=1 // pred_check
      _
    $region31: #{tpu_custom_call.1} parent=1 // pred_check_branch
      %84 = sbr.rel (0) target = $region33
    $region32: #{tpu_custom_call.1} parent=1 // pred_region
      %85 = dma.done [#allocation8], 16
    $region33: #{tpu_custom_call.1} parent=1 // pred_fallthru
      _
    // Predicated region
    $region34: #{tpu_custom_call.1} parent=1 // pred_check
      _
    $region35: #{tpu_custom_call.1} parent=1 // pred_check_branch
      %87 = sbr.rel (0) target = $region37
    $region36: #{tpu_custom_call.1} parent=1 // pred_region
      %88 = dma.done [#allocation4], 256
    $region37: #{tpu_custom_call.1} parent=1 // pred_fallthru
      _
    // Predicated region
    $region38: #{tpu_custom_call.1} parent=1 // pred_check
      _
    $region39: #{tpu_custom_call.1} parent=1 // pred_check_branch
      %90 = sbr.rel (0) target = $region41
    $region40: #{tpu_custom_call.1} parent=1 // pred_region
      %91 = dma.done [#allocation11], 131072
    $region41: #{tpu_custom_call.1} parent=1 // pred_fallthru
      _
    // Predicated region
    $region42: #{tpu_custom_call.1} parent=1 // pred_check
      _
    $region43: #{tpu_custom_call.1} parent=1 // pred_check_branch
      %93 = sbr.rel (0) target = $region45
    $region44: #{tpu_custom_call.1} parent=1 // pred_region
      %94 = dma.done [#allocation11], 512
    $region45: #{tpu_custom_call.1} parent=1 // pred_fallthru
      _
    // Predicated region
    $region46: #{tpu_custom_call.1} parent=1 // pred_check
      _
    $region47: #{tpu_custom_call.1} parent=1 // pred_check_branch
      %96 = sbr.rel (0) target = $region49
    $region48: #{tpu_custom_call.1} parent=1 // pred_region
      %97 = dma.done [#allocation14], 16
    $region49: #{tpu_custom_call.1} parent=1 // pred_fallthru
      _
    %98 = sfence
    %v99 = vld [vmem:[#allocation9] sm:$0xf]
    %v100 = vld [vmem:[#allocation9 + $0x4] sm:$0xf]
    %v101 = vld [vmem:[#allocation9 + $0x8] sm:$0xf]
    %v102 = vld [vmem:[#allocation9 + $0xc] sm:$0xf]
    %s103 = sld [smem:[#allocation3]]
    %v104 = vstv %s103
    %v105 = vmul.f32 %v104, %v99
    %s106 = sld [smem:[#allocation3 + $0x80]]
    %v107 = vstv %s106
    %v108 = vmul.f32 %v107, %v100
    %v109 = vadd.f32 %v105, %v108
    %s110 = sld [smem:[#allocation3 + $0x100]]
    %v111 = vstv %s110
    %v112 = vmul.f32 %v111, %v101
    %v113 = vadd.f32 %v109, %v112
    %s114 = sld [smem:[#allocation3 + $0x180]]
    %v115 = vstv %s114
    %v116 = vmul.f32 %v115, %v102
    %v117 = vadd.f32 %v113, %v116
    %s118 = sld [smem:[#allocation7]]
    %v119 = vstv %s118
    %v120 = vadd.f32 %v117, %v119
    %v121 = vmax.f32 %v120, 0.0
    %122 = vst [vmem:[#allocation2] sm:$0xf] %v121
    %s123 = sld [smem:[#allocation3 + $0x1]]
    %v124 = vstv %s123
    %v125 = vmul.f32 %v124, %v99
    %s126 = sld [smem:[#allocation3 + $0x81]]
    %v127 = vstv %s126
    %v128 = vmul.f32 %v127, %v100
    %v129 = vadd.f32 %v125, %v128
    %s130 = sld [smem:[#allocation3 + $0x101]]
    %v131 = vstv %s130
    %v132 = vmul.f32 %v131, %v101
    %v133 = vadd.f32 %v129, %v132
    %s134 = sld [smem:[#allocation3 + $0x181]]
    %v135 = vstv %s134
    %v136 = vmul.f32 %v135, %v102
    %v137 = vadd.f32 %v133, %v136
    %s138 = sld [smem:[#allocation7 + $0x1]]
    %v139 = vstv %s138
    %v140 = vadd.f32 %v137, %v139
    %v141 = vmax.f32 %v140, 0.0
    %142 = vst [vmem:[#allocation2 + $0x4] sm:$0xf] %v141
    %s143 = sld [smem:[#allocation3 + $0x2]]
    %v144 = vstv %s143
    %v145 = vmul.f32 %v144, %v99
    %s146 = sld [smem:[#allocation3 + $0x82]]
    %v147 = vstv %s146
    %v148 = vmul.f32 %v147, %v100
    %v149 = vadd.f32 %v145, %v148
    %s150 = sld [smem:[#allocation3 + $0x102]]
    %v151 = vstv %s150
    %v152 = vmul.f32 %v151, %v101
    %v153 = vadd.f32 %v149, %v152
    %s154 = sld [smem:[#allocation3 + $0x182]]
    %v155 = vstv %s154
    %v156 = vmul.f32 %v155, %v102
    %v157 = vadd.f32 %v153, %v156
    %s158 = sld [smem:[#allocation7 + $0x2]]
    %v159 = vstv %s158
    %v160 = vadd.f32 %v157, %v159
    %v161 = vmax.f32 %v160, 0.0
    %162 = vst [vmem:[#allocation2 + $0x8] sm:$0xf] %v161
    %s163 = sld [smem:[#allocation3 + $0x3]]
    %v164 = vstv %s163
    %v165 = vmul.f32 %v164, %v99
    %s166 = sld [smem:[#allocation3 + $0x83]]
    %v167 = vstv %s166
    %v168 = vmul.f32 %v167, %v100
    %v169 = vadd.f32 %v165, %v168
    %s170 = sld [smem:[#allocation3 + $0x103]]
    %v171 = vstv %s170
    %v172 = vmul.f32 %v171, %v101
    %v173 = vadd.f32 %v169, %v172
    %s174 = sld [smem:[#allocation3 + $0x183]]
    %v175 = vstv %s174
    %v176 = vmul.f32 %v175, %v102
    %v177 = vadd.f32 %v173, %v176
    %s178 = sld [smem:[#allocation7 + $0x3]]
    %v179 = vstv %s178
    %v180 = vadd.f32 %v177, %v179
    %v181 = vmax.f32 %v180, 0.0
    %182 = vst [vmem:[#allocation2 + $0xc] sm:$0xf] %v181
    %s183 = sld [smem:[#allocation3 + $0x4]]
    %v184 = vstv %s183
    %v185 = vmul.f32 %v184, %v99
    %s186 = sld [smem:[#allocation3 + $0x84]]
    %v187 = vstv %s186
    %v188 = vmul.f32 %v187, %v100
    %v189 = vadd.f32 %v185, %v188
    %s190 = sld [smem:[#allocation3 + $0x104]]
    %v191 = vstv %s190
    %v192 = vmul.f32 %v191, %v101
    %v193 = vadd.f32 %v189, %v192
    %s194 = sld [smem:[#allocation3 + $0x184]]
    %v195 = vstv %s194
    %v196 = vmul.f32 %v195, %v102
    %v197 = vadd.f32 %v193, %v196
    %s198 = sld [smem:[#allocation7 + $0x4]]
    %v199 = vstv %s198
    %v200 = vadd.f32 %v197, %v199
    %v201 = vmax.f32 %v200, 0.0
    %202 = vst [vmem:[#allocation2 + $0x10] sm:$0xf] %v201
    %s203 = sld [smem:[#allocation3 + $0x5]]
    %v204 = vstv %s203
    %v205 = vmul.f32 %v204, %v99
    %s206 = sld [smem:[#allocation3 + $0x85]]
    %v207 = vstv %s206
    %v208 = vmul.f32 %v207, %v100
    %v209 = vadd.f32 %v205, %v208
    %s210 = sld [smem:[#allocation3 + $0x105]]
    %v211 = vstv %s210
    %v212 = vmul.f32 %v211, %v101
    %v213 = vadd.f32 %v209, %v212
    %s214 = sld [smem:[#allocation3 + $0x185]]
    %v215 = vstv %s214
    %v216 = vmul.f32 %v215, %v102
    %v217 = vadd.f32 %v213, %v216
    %s218 = sld [smem:[#allocation7 + $0x5]]
    %v219 = vstv %s218
    %v220 = vadd.f32 %v217, %v219
    %v221 = vmax.f32 %v220, 0.0
    %222 = vst [vmem:[#allocation2 + $0x14] sm:$0xf] %v221
    %s223 = sld [smem:[#allocation3 + $0x6]]
    %v224 = vstv %s223
    %v225 = vmul.f32 %v224, %v99
    %s226 = sld [smem:[#allocation3 + $0x86]]
    %v227 = vstv %s226
    %v228 = vmul.f32 %v227, %v100
    %v229 = vadd.f32 %v225, %v228
    %s230 = sld [smem:[#allocation3 + $0x106]]
    %v231 = vstv %s230
    %v232 = vmul.f32 %v231, %v101
    %v233 = vadd.f32 %v229, %v232
    %s234 = sld [smem:[#allocation3 + $0x186]]
    %v235 = vstv %s234
    %v236 = vmul.f32 %v235, %v102
    %v237 = vadd.f32 %v233, %v236
    %s238 = sld [smem:[#allocation7 + $0x6]]
    %v239 = vstv %s238
    %v240 = vadd.f32 %v237, %v239
    %v241 = vmax.f32 %v240, 0.0
    %242 = vst [vmem:[#allocation2 + $0x18] sm:$0xf] %v241
    %s243 = sld [smem:[#allocation3 + $0x7]]
    %v244 = vstv %s243
    %v245 = vmul.f32 %v244, %v99
    %s246 = sld [smem:[#allocation3 + $0x87]]
    %v247 = vstv %s246
    %v248 = vmul.f32 %v247, %v100
    %v249 = vadd.f32 %v245, %v248
    %s250 = sld [smem:[#allocation3 + $0x107]]
    %v251 = vstv %s250
    %v252 = vmul.f32 %v251, %v101
    %v253 = vadd.f32 %v249, %v252
    %s254 = sld [smem:[#allocation3 + $0x187]]
    %v255 = vstv %s254
    %v256 = vmul.f32 %v255, %v102
    %v257 = vadd.f32 %v253, %v256
    %s258 = sld [smem:[#allocation7 + $0x7]]
    %v259 = vstv %s258
    %v260 = vadd.f32 %v257, %v259
    %v261 = vmax.f32 %v260, 0.0
    %262 = vst [vmem:[#allocation2 + $0x1c] sm:$0xf] %v261
    %s263 = sld [smem:[#allocation3 + $0x8]]
    %v264 = vstv %s263
    %v265 = vmul.f32 %v264, %v99
    %s266 = sld [smem:[#allocation3 + $0x88]]
    %v267 = vstv %s266
    %v268 = vmul.f32 %v267, %v100
    %v269 = vadd.f32 %v265, %v268
    %s270 = sld [smem:[#allocation3 + $0x108]]
    %v271 = vstv %s270
    %v272 = vmul.f32 %v271, %v101
    %v273 = vadd.f32 %v269, %v272
    %s274 = sld [smem:[#allocation3 + $0x188]]
    %v275 = vstv %s274
    %v276 = vmul.f32 %v275, %v102
    %v277 = vadd.f32 %v273, %v276
    %s278 = sld [smem:[#allocation7 + $0x8]]
    %v279 = vstv %s278
    %v280 = vadd.f32 %v277, %v279
    %v281 = vmax.f32 %v280, 0.0
    %282 = vst [vmem:[#allocation2 + $0x20] sm:$0xf] %v281
    %s283 = sld [smem:[#allocation3 + $0x9]]
    %v284 = vstv %s283
    %v285 = vmul.f32 %v284, %v99
    %s286 = sld [smem:[#allocation3 + $0x89]]
    %v287 = vstv %s286
    %v288 = vmul.f32 %v287, %v100
    %v289 = vadd.f32 %v285, %v288
    %s290 = sld [smem:[#allocation3 + $0x109]]
    %v291 = vstv %s290
    %v292 = vmul.f32 %v291, %v101
    %v293 = vadd.f32 %v289, %v292
    %s294 = sld [smem:[#allocation3 + $0x189]]
    %v295 = vstv %s294
    %v296 = vmul.f32 %v295, %v102
    %v297 = vadd.f32 %v293, %v296
    %s298 = sld [smem:[#allocation7 + $0x9]]
    %v299 = vstv %s298
    %v300 = vadd.f32 %v297, %v299
    %v301 = vmax.f32 %v300, 0.0
    %302 = vst [vmem:[#allocation2 + $0x24] sm:$0xf] %v301
    %s303 = sld [smem:[#allocation3 + $0xa]]
    %v304 = vstv %s303
    %v305 = vmul.f32 %v304, %v99
    %s306 = sld [smem:[#allocation3 + $0x8a]]
    %v307 = vstv %s306
    %v308 = vmul.f32 %v307, %v100
    %v309 = vadd.f32 %v305, %v308
    %s310 = sld [smem:[#allocation3 + $0x10a]]
    %v311 = vstv %s310
    %v312 = vmul.f32 %v311, %v101
    %v313 = vadd.f32 %v309, %v312
    %s314 = sld [smem:[#allocation3 + $0x18a]]
    %v315 = vstv %s314
    %v316 = vmul.f32 %v315, %v102
    %v317 = vadd.f32 %v313, %v316
    %s318 = sld [smem:[#allocation7 + $0xa]]
    %v319 = vstv %s318
    %v320 = vadd.f32 %v317, %v319
    %v321 = vmax.f32 %v320, 0.0
    %322 = vst [vmem:[#allocation2 + $0x28] sm:$0xf] %v321
    %s323 = sld [smem:[#allocation3 + $0xb]]
    %v324 = vstv %s323
    %v325 = vmul.f32 %v324, %v99
    %s326 = sld [smem:[#allocation3 + $0x8b]]
    %v327 = vstv %s326
    %v328 = vmul.f32 %v327, %v100
    %v329 = vadd.f32 %v325, %v328
    %s330 = sld [smem:[#allocation3 + $0x10b]]
    %v331 = vstv %s330
    %v332 = vmul.f32 %v331, %v101
    %v333 = vadd.f32 %v329, %v332
    %s334 = sld [smem:[#allocation3 + $0x18b]]
    %v335 = vstv %s334
    %v336 = vmul.f32 %v335, %v102
    %v337 = vadd.f32 %v333, %v336
    %s338 = sld [smem:[#allocation7 + $0xb]]
    %v339 = vstv %s338
    %v340 = vadd.f32 %v337, %v339
    %v341 = vmax.f32 %v340, 0.0
    %342 = vst [vmem:[#allocation2 + $0x2c] sm:$0xf] %v341
    %s343 = sld [smem:[#allocation3 + $0xc]]
    %v344 = vstv %s343
    %v345 = vmul.f32 %v344, %v99
    %s346 = sld [smem:[#allocation3 + $0x8c]]
    %v347 = vstv %s346
    %v348 = vmul.f32 %v347, %v100
    %v349 = vadd.f32 %v345, %v348
    %s350 = sld [smem:[#allocation3 + $0x10c]]
    %v351 = vstv %s350
    %v352 = vmul.f32 %v351, %v101
    %v353 = vadd.f32 %v349, %v352
    %s354 = sld [smem:[#allocation3 + $0x18c]]
    %v355 = vstv %s354
    %v356 = vmul.f32 %v355, %v102
    %v357 = vadd.f32 %v353, %v356
    %s358 = sld [smem:[#allocation7 + $0xc]]
    %v359 = vstv %s358
    %v360 = vadd.f32 %v357, %v359
    %v361 = vmax.f32 %v360, 0.0
    %362 = vst [vmem:[#allocation2 + $0x30] sm:$0xf] %v361
    %s363 = sld [smem:[#allocation3 + $0xd]]
    %v364 = vstv %s363
    %v365 = vmul.f32 %v364, %v99
    %s366 = sld [smem:[#allocation3 + $0x8d]]
    %v367 = vstv %s366
    %v368 = vmul.f32 %v367, %v100
    %v369 = vadd.f32 %v365, %v368
    %s370 = sld [smem:[#allocation3 + $0x10d]]
    %v371 = vstv %s370
    %v372 = vmul.f32 %v371, %v101
    %v373 = vadd.f32 %v369, %v372
    %s374 = sld [smem:[#allocation3 + $0x18d]]
    %v375 = vstv %s374
    %v376 = vmul.f32 %v375, %v102
    %v377 = vadd.f32 %v373, %v376
    %s378 = sld [smem:[#allocation7 + $0xd]]
    %v379 = vstv %s378
    %v380 = vadd.f32 %v377, %v379
    %v381 = vmax.f32 %v380, 0.0
    %382 = vst [vmem:[#allocation2 + $0x34] sm:$0xf] %v381
    %s383 = sld [smem:[#allocation3 + $0xe]]
    %v384 = vstv %s383
    %v385 = vmul.f32 %v384, %v99
    %s386 = sld [smem:[#allocation3 + $0x8e]]
    %v387 = vstv %s386
    %v388 = vmul.f32 %v387, %v100
    %v389 = vadd.f32 %v385, %v388
    %s390 = sld [smem:[#allocation3 + $0x10e]]
    %v391 = vstv %s390
    %v392 = vmul.f32 %v391, %v101
    %v393 = vadd.f32 %v389, %v392
    %s394 = sld [smem:[#allocation3 + $0x18e]]
    %v395 = vstv %s394
    %v396 = vmul.f32 %v395, %v102
    %v397 = vadd.f32 %v393, %v396
    %s398 = sld [smem:[#allocation7 + $0xe]]
    %v399 = vstv %s398
    %v400 = vadd.f32 %v397, %v399
    %v401 = vmax.f32 %v400, 0.0
    %402 = vst [vmem:[#allocation2 + $0x38] sm:$0xf] %v401
    %s403 = sld [smem:[#allocation3 + $0xf]]
    %v404 = vstv %s403
    %v405 = vmul.f32 %v404, %v99
    %s406 = sld [smem:[#allocation3 + $0x8f]]
    %v407 = vstv %s406
    %v408 = vmul.f32 %v407, %v100
    %v409 = vadd.f32 %v405, %v408
    %s410 = sld [smem:[#allocation3 + $0x10f]]
    %v411 = vstv %s410
    %v412 = vmul.f32 %v411, %v101
    %v413 = vadd.f32 %v409, %v412
    %s414 = sld [smem:[#allocation3 + $0x18f]]
    %v415 = vstv %s414
    %v416 = vmul.f32 %v415, %v102
    %v417 = vadd.f32 %v413, %v416
    %s418 = sld [smem:[#allocation7 + $0xf]]
    %v419 = vstv %s418
    %v420 = vadd.f32 %v417, %v419
    %v421 = vmax.f32 %v420, 0.0
    %422 = vst [vmem:[#allocation2 + $0x3c] sm:$0xf] %v421
    %s423 = sld [smem:[#allocation3 + $0x10]]
    %v424 = vstv %s423
    %v425 = vmul.f32 %v424, %v99
    %s426 = sld [smem:[#allocation3 + $0x90]]
    %v427 = vstv %s426
    %v428 = vmul.f32 %v427, %v100
    %v429 = vadd.f32 %v425, %v428
    %s430 = sld [smem:[#allocation3 + $0x110]]
    %v431 = vstv %s430
    %v432 = vmul.f32 %v431, %v101
    %v433 = vadd.f32 %v429, %v432
    %s434 = sld [smem:[#allocation3 + $0x190]]
    %v435 = vstv %s434
    %v436 = vmul.f32 %v435, %v102
    %v437 = vadd.f32 %v433, %v436
    %s438 = sld [smem:[#allocation7 + $0x10]]
    %v439 = vstv %s438
    %v440 = vadd.f32 %v437, %v439
    %v441 = vmax.f32 %v440, 0.0
    %442 = vst [vmem:[#allocation2 + $0x40] sm:$0xf] %v441
    %s443 = sld [smem:[#allocation3 + $0x11]]
    %v444 = vstv %s443
    %v445 = vmul.f32 %v444, %v99
    %s446 = sld [smem:[#allocation3 + $0x91]]
    %v447 = vstv %s446
    %v448 = vmul.f32 %v447, %v100
    %v449 = vadd.f32 %v445, %v448
    %s450 = sld [smem:[#allocation3 + $0x111]]
    %v451 = vstv %s450
    %v452 = vmul.f32 %v451, %v101
    %v453 = vadd.f32 %v449, %v452
    %s454 = sld [smem:[#allocation3 + $0x191]]
    %v455 = vstv %s454
    %v456 = vmul.f32 %v455, %v102
    %v457 = vadd.f32 %v453, %v456
    %s458 = sld [smem:[#allocation7 + $0x11]]
    %v459 = vstv %s458
    %v460 = vadd.f32 %v457, %v459
    %v461 = vmax.f32 %v460, 0.0
    %462 = vst [vmem:[#allocation2 + $0x44] sm:$0xf] %v461
    %s463 = sld [smem:[#allocation3 + $0x12]]
    %v464 = vstv %s463
    %v465 = vmul.f32 %v464, %v99
    %s466 = sld [smem:[#allocation3 + $0x92]]
    %v467 = vstv %s466
    %v468 = vmul.f32 %v467, %v100
    %v469 = vadd.f32 %v465, %v468
    %s470 = sld [smem:[#allocation3 + $0x112]]
    %v471 = vstv %s470
    %v472 = vmul.f32 %v471, %v101
    %v473 = vadd.f32 %v469, %v472
    %s474 = sld [smem:[#allocation3 + $0x192]]
    %v475 = vstv %s474
    %v476 = vmul.f32 %v475, %v102
    %v477 = vadd.f32 %v473, %v476
    %s478 = sld [smem:[#allocation7 + $0x12]]
    %v479 = vstv %s478
    %v480 = vadd.f32 %v477, %v479
    %v481 = vmax.f32 %v480, 0.0
    %482 = vst [vmem:[#allocation2 + $0x48] sm:$0xf] %v481
    %s483 = sld [smem:[#allocation3 + $0x13]]
    %v484 = vstv %s483
    %v485 = vmul.f32 %v484, %v99
    %s486 = sld [smem:[#allocation3 + $0x93]]
    %v487 = vstv %s486
    %v488 = vmul.f32 %v487, %v100
    %v489 = vadd.f32 %v485, %v488
    %s490 = sld [smem:[#allocation3 + $0x113]]
    %v491 = vstv %s490
    %v492 = vmul.f32 %v491, %v101
    %v493 = vadd.f32 %v489, %v492
    %s494 = sld [smem:[#allocation3 + $0x193]]
    %v495 = vstv %s494
    %v496 = vmul.f32 %v495, %v102
    %v497 = vadd.f32 %v493, %v496
    %s498 = sld [smem:[#allocation7 + $0x13]]
    %v499 = vstv %s498
    %v500 = vadd.f32 %v497, %v499
    %v501 = vmax.f32 %v500, 0.0
    %502 = vst [vmem:[#allocation2 + $0x4c] sm:$0xf] %v501
    %s503 = sld [smem:[#allocation3 + $0x14]]
    %v504 = vstv %s503
    %v505 = vmul.f32 %v504, %v99
    %s506 = sld [smem:[#allocation3 + $0x94]]
    %v507 = vstv %s506
    %v508 = vmul.f32 %v507, %v100
    %v509 = vadd.f32 %v505, %v508
    %s510 = sld [smem:[#allocation3 + $0x114]]
    %v511 = vstv %s510
    %v512 = vmul.f32 %v511, %v101
    %v513 = vadd.f32 %v509, %v512
    %s514 = sld [smem:[#allocation3 + $0x194]]
    %v515 = vstv %s514
    %v516 = vmul.f32 %v515, %v102
    %v517 = vadd.f32 %v513, %v516
    %s518 = sld [smem:[#allocation7 + $0x14]]
    %v519 = vstv %s518
    %v520 = vadd.f32 %v517, %v519
    %v521 = vmax.f32 %v520, 0.0
    %522 = vst [vmem:[#allocation2 + $0x50] sm:$0xf] %v521
    %s523 = sld [smem:[#allocation3 + $0x15]]
    %v524 = vstv %s523
    %v525 = vmul.f32 %v524, %v99
    %s526 = sld [smem:[#allocation3 + $0x95]]
    %v527 = vstv %s526
    %v528 = vmul.f32 %v527, %v100
    %v529 = vadd.f32 %v525, %v528
    %s530 = sld [smem:[#allocation3 + $0x115]]
    %v531 = vstv %s530
    %v532 = vmul.f32 %v531, %v101
    %v533 = vadd.f32 %v529, %v532
    %s534 = sld [smem:[#allocation3 + $0x195]]
    %v535 = vstv %s534
    %v536 = vmul.f32 %v535, %v102
    %v537 = vadd.f32 %v533, %v536
    %s538 = sld [smem:[#allocation7 + $0x15]]
    %v539 = vstv %s538
    %v540 = vadd.f32 %v537, %v539
    %v541 = vmax.f32 %v540, 0.0
    %542 = vst [vmem:[#allocation2 + $0x54] sm:$0xf] %v541
    %s543 = sld [smem:[#allocation3 + $0x16]]
    %v544 = vstv %s543
    %v545 = vmul.f32 %v544, %v99
    %s546 = sld [smem:[#allocation3 + $0x96]]
    %v547 = vstv %s546
    %v548 = vmul.f32 %v547, %v100
    %v549 = vadd.f32 %v545, %v548
    %s550 = sld [smem:[#allocation3 + $0x116]]
    %v551 = vstv %s550
    %v552 = vmul.f32 %v551, %v101
    %v553 = vadd.f32 %v549, %v552
    %s554 = sld [smem:[#allocation3 + $0x196]]
    %v555 = vstv %s554
    %v556 = vmul.f32 %v555, %v102
    %v557 = vadd.f32 %v553, %v556
    %s558 = sld [smem:[#allocation7 + $0x16]]
    %v559 = vstv %s558
    %v560 = vadd.f32 %v557, %v559
    %v561 = vmax.f32 %v560, 0.0
    %562 = vst [vmem:[#allocation2 + $0x58] sm:$0xf] %v561
    %s563 = sld [smem:[#allocation3 + $0x17]]
    %v564 = vstv %s563
    %v565 = vmul.f32 %v564, %v99
    %s566 = sld [smem:[#allocation3 + $0x97]]
    %v567 = vstv %s566
    %v568 = vmul.f32 %v567, %v100
    %v569 = vadd.f32 %v565, %v568
    %s570 = sld [smem:[#allocation3 + $0x117]]
    %v571 = vstv %s570
    %v572 = vmul.f32 %v571, %v101
    %v573 = vadd.f32 %v569, %v572
    %s574 = sld [smem:[#allocation3 + $0x197]]
    %v575 = vstv %s574
    %v576 = vmul.f32 %v575, %v102
    %v577 = vadd.f32 %v573, %v576
    %s578 = sld [smem:[#allocation7 + $0x17]]
    %v579 = vstv %s578
    %v580 = vadd.f32 %v577, %v579
    %v581 = vmax.f32 %v580, 0.0
    %582 = vst [vmem:[#allocation2 + $0x5c] sm:$0xf] %v581
    %s583 = sld [smem:[#allocation3 + $0x18]]
    %v584 = vstv %s583
    %v585 = vmul.f32 %v584, %v99
    %s586 = sld [smem:[#allocation3 + $0x98]]
    %v587 = vstv %s586
    %v588 = vmul.f32 %v587, %v100
    %v589 = vadd.f32 %v585, %v588
    %s590 = sld [smem:[#allocation3 + $0x118]]
    %v591 = vstv %s590
    %v592 = vmul.f32 %v591, %v101
    %v593 = vadd.f32 %v589, %v592
    %s594 = sld [smem:[#allocation3 + $0x198]]
    %v595 = vstv %s594
    %v596 = vmul.f32 %v595, %v102
    %v597 = vadd.f32 %v593, %v596
    %s598 = sld [smem:[#allocation7 + $0x18]]
    %v599 = vstv %s598
    %v600 = vadd.f32 %v597, %v599
    %v601 = vmax.f32 %v600, 0.0
    %602 = vst [vmem:[#allocation2 + $0x60] sm:$0xf] %v601
    %s603 = sld [smem:[#allocation3 + $0x19]]
    %v604 = vstv %s603
    %v605 = vmul.f32 %v604, %v99
    %s606 = sld [smem:[#allocation3 + $0x99]]
    %v607 = vstv %s606
    %v608 = vmul.f32 %v607, %v100
    %v609 = vadd.f32 %v605, %v608
    %s610 = sld [smem:[#allocation3 + $0x119]]
    %v611 = vstv %s610
    %v612 = vmul.f32 %v611, %v101
    %v613 = vadd.f32 %v609, %v612
    %s614 = sld [smem:[#allocation3 + $0x199]]
    %v615 = vstv %s614
    %v616 = vmul.f32 %v615, %v102
    %v617 = vadd.f32 %v613, %v616
    %s618 = sld [smem:[#allocation7 + $0x19]]
    %v619 = vstv %s618
    %v620 = vadd.f32 %v617, %v619
    %v621 = vmax.f32 %v620, 0.0
    %622 = vst [vmem:[#allocation2 + $0x64] sm:$0xf] %v621
    %s623 = sld [smem:[#allocation3 + $0x1a]]
    %v624 = vstv %s623
    %v625 = vmul.f32 %v624, %v99
    %s626 = sld [smem:[#allocation3 + $0x9a]]
    %v627 = vstv %s626
    %v628 = vmul.f32 %v627, %v100
    %v629 = vadd.f32 %v625, %v628
    %s630 = sld [smem:[#allocation3 + $0x11a]]
    %v631 = vstv %s630
    %v632 = vmul.f32 %v631, %v101
    %v633 = vadd.f32 %v629, %v632
    %s634 = sld [smem:[#allocation3 + $0x19a]]
    %v635 = vstv %s634
    %v636 = vmul.f32 %v635, %v102
    %v637 = vadd.f32 %v633, %v636
    %s638 = sld [smem:[#allocation7 + $0x1a]]
    %v639 = vstv %s638
    %v640 = vadd.f32 %v637, %v639
    %v641 = vmax.f32 %v640, 0.0
    %642 = vst [vmem:[#allocation2 + $0x68] sm:$0xf] %v641
    %s643 = sld [smem:[#allocation3 + $0x1b]]
    %v644 = vstv %s643
    %v645 = vmul.f32 %v644, %v99
    %s646 = sld [smem:[#allocation3 + $0x9b]]
    %v647 = vstv %s646
    %v648 = vmul.f32 %v647, %v100
    %v649 = vadd.f32 %v645, %v648
    %s650 = sld [smem:[#allocation3 + $0x11b]]
    %v651 = vstv %s650
    %v652 = vmul.f32 %v651, %v101
    %v653 = vadd.f32 %v649, %v652
    %s654 = sld [smem:[#allocation3 + $0x19b]]
    %v655 = vstv %s654
    %v656 = vmul.f32 %v655, %v102
    %v657 = vadd.f32 %v653, %v656
    %s658 = sld [smem:[#allocation7 + $0x1b]]
    %v659 = vstv %s658
    %v660 = vadd.f32 %v657, %v659
    %v661 = vmax.f32 %v660, 0.0
    %662 = vst [vmem:[#allocation2 + $0x6c] sm:$0xf] %v661
    %s663 = sld [smem:[#allocation3 + $0x1c]]
    %v664 = vstv %s663
    %v665 = vmul.f32 %v664, %v99
    %s666 = sld [smem:[#allocation3 + $0x9c]]
    %v667 = vstv %s666
    %v668 = vmul.f32 %v667, %v100
    %v669 = vadd.f32 %v665, %v668
    %s670 = sld [smem:[#allocation3 + $0x11c]]
    %v671 = vstv %s670
    %v672 = vmul.f32 %v671, %v101
    %v673 = vadd.f32 %v669, %v672
    %s674 = sld [smem:[#allocation3 + $0x19c]]
    %v675 = vstv %s674
    %v676 = vmul.f32 %v675, %v102
    %v677 = vadd.f32 %v673, %v676
    %s678 = sld [smem:[#allocation7 + $0x1c]]
    %v679 = vstv %s678
    %v680 = vadd.f32 %v677, %v679
    %v681 = vmax.f32 %v680, 0.0
    %682 = vst [vmem:[#allocation2 + $0x70] sm:$0xf] %v681
    %s683 = sld [smem:[#allocation3 + $0x1d]]
    %v684 = vstv %s683
    %v685 = vmul.f32 %v684, %v99
    %s686 = sld [smem:[#allocation3 + $0x9d]]
    %v687 = vstv %s686
    %v688 = vmul.f32 %v687, %v100
    %v689 = vadd.f32 %v685, %v688
    %s690 = sld [smem:[#allocation3 + $0x11d]]
    %v691 = vstv %s690
    %v692 = vmul.f32 %v691, %v101
    %v693 = vadd.f32 %v689, %v692
    %s694 = sld [smem:[#allocation3 + $0x19d]]
    %v695 = vstv %s694
    %v696 = vmul.f32 %v695, %v102
    %v697 = vadd.f32 %v693, %v696
    %s698 = sld [smem:[#allocation7 + $0x1d]]
    %v699 = vstv %s698
    %v700 = vadd.f32 %v697, %v699
    %v701 = vmax.f32 %v700, 0.0
    %702 = vst [vmem:[#allocation2 + $0x74] sm:$0xf] %v701
    %s703 = sld [smem:[#allocation3 + $0x1e]]
    %v704 = vstv %s703
    %v705 = vmul.f32 %v704, %v99
    %s706 = sld [smem:[#allocation3 + $0x9e]]
    %v707 = vstv %s706
    %v708 = vmul.f32 %v707, %v100
    %v709 = vadd.f32 %v705, %v708
    %s710 = sld [smem:[#allocation3 + $0x11e]]
    %v711 = vstv %s710
    %v712 = vmul.f32 %v711, %v101
    %v713 = vadd.f32 %v709, %v712
    %s714 = sld [smem:[#allocation3 + $0x19e]]
    %v715 = vstv %s714
    %v716 = vmul.f32 %v715, %v102
    %v717 = vadd.f32 %v713, %v716
    %s718 = sld [smem:[#allocation7 + $0x1e]]
    %v719 = vstv %s718
    %v720 = vadd.f32 %v717, %v719
    %v721 = vmax.f32 %v720, 0.0
    %722 = vst [vmem:[#allocation2 + $0x78] sm:$0xf] %v721
    %s723 = sld [smem:[#allocation3 + $0x1f]]
    %v724 = vstv %s723
    %v725 = vmul.f32 %v724, %v99
    %s726 = sld [smem:[#allocation3 + $0x9f]]
    %v727 = vstv %s726
    %v728 = vmul.f32 %v727, %v100
    %v729 = vadd.f32 %v725, %v728
    %s730 = sld [smem:[#allocation3 + $0x11f]]
    %v731 = vstv %s730
    %v732 = vmul.f32 %v731, %v101
    %v733 = vadd.f32 %v729, %v732
    %s734 = sld [smem:[#allocation3 + $0x19f]]
    %v735 = vstv %s734
    %v736 = vmul.f32 %v735, %v102
    %v737 = vadd.f32 %v733, %v736
    %s738 = sld [smem:[#allocation7 + $0x1f]]
    %v739 = vstv %s738
    %v740 = vadd.f32 %v737, %v739
    %v741 = vmax.f32 %v740, 0.0
    %742 = vst [vmem:[#allocation2 + $0x7c] sm:$0xf] %v741
    %v743 = vld [vmem:[#allocation2] sm:$0xff]
    %v744 = vld [vmem:[#allocation2 + $0x8] sm:$0xff]
    %v745 = vld [vmem:[#allocation2 + $0x10] sm:$0xff]
    %v746 = vld [vmem:[#allocation2 + $0x18] sm:$0xff]
    %v747 = vld [vmem:[#allocation2 + $0x20] sm:$0xff]
    %v748 = vld [vmem:[#allocation2 + $0x28] sm:$0xff]
    %v749 = vld [vmem:[#allocation2 + $0x30] sm:$0xff]
    %v750 = vld [vmem:[#allocation2 + $0x38] sm:$0xff]
    %v751 = vld [vmem:[#allocation2 + $0x40] sm:$0xff]
    %v752 = vld [vmem:[#allocation2 + $0x48] sm:$0xff]
    %v753 = vld [vmem:[#allocation2 + $0x50] sm:$0xff]
    %v754 = vld [vmem:[#allocation2 + $0x58] sm:$0xff]
    %v755 = vld [vmem:[#allocation2 + $0x60] sm:$0xff]
    %v756 = vld [vmem:[#allocation2 + $0x68] sm:$0xff]
    %v757 = vld [vmem:[#allocation2 + $0x70] sm:$0xff]
    %v758 = vld [vmem:[#allocation2 + $0x78] sm:$0xff]
    %v759 = vld [vmem:[#allocation10] sm:$0xff]
    %v760 = vld [vmem:[#allocation10 + $0x8] sm:$0xff]
    %v761 = vld [vmem:[#allocation10 + $0x10] sm:$0xff]
    %v762 = vld [vmem:[#allocation10 + $0x18] sm:$0xff]
    %v763 = vld [vmem:[#allocation10 + $0x20] sm:$0xff]
    %v764 = vld [vmem:[#allocation10 + $0x28] sm:$0xff]
    %v765 = vld [vmem:[#allocation10 + $0x30] sm:$0xff]
    %v766 = vld [vmem:[#allocation10 + $0x38] sm:$0xff]
    %v767 = vld [vmem:[#allocation10 + $0x40] sm:$0xff]
    %v768 = vld [vmem:[#allocation10 + $0x48] sm:$0xff]
    %v769 = vld [vmem:[#allocation10 + $0x50] sm:$0xff]
    %v770 = vld [vmem:[#allocation10 + $0x58] sm:$0xff]
    %v771 = vld [vmem:[#allocation10 + $0x60] sm:$0xff]
    %v772 = vld [vmem:[#allocation10 + $0x68] sm:$0xff]
    %v773 = vld [vmem:[#allocation10 + $0x70] sm:$0xff]
    %v774 = vld [vmem:[#allocation10 + $0x78] sm:$0xff]
    %v775 = vld [vmem:[#allocation10 + $0x80] sm:$0xff]
    %v776 = vld [vmem:[#allocation10 + $0x88] sm:$0xff]
    %v777 = vld [vmem:[#allocation10 + $0x90] sm:$0xff]
    %v778 = vld [vmem:[#allocation10 + $0x98] sm:$0xff]
    %v779 = vld [vmem:[#allocation10 + $0xa0] sm:$0xff]
    %v780 = vld [vmem:[#allocation10 + $0xa8] sm:$0xff]
    %v781 = vld [vmem:[#allocation10 + $0xb0] sm:$0xff]
    %v782 = vld [vmem:[#allocation10 + $0xb8] sm:$0xff]
    %v783 = vld [vmem:[#allocation10 + $0xc0] sm:$0xff]
    %v784 = vld [vmem:[#allocation10 + $0xc8] sm:$0xff]
    %v785 = vld [vmem:[#allocation10 + $0xd0] sm:$0xff]
    %v786 = vld [vmem:[#allocation10 + $0xd8] sm:$0xff]
    %v787 = vld [vmem:[#allocation10 + $0xe0] sm:$0xff]
    %v788 = vld [vmem:[#allocation10 + $0xe8] sm:$0xff]
    %v789 = vld [vmem:[#allocation10 + $0xf0] sm:$0xff]
    %v790 = vld [vmem:[#allocation10 + $0xf8] sm:$0xff]
    %v791 = vld [vmem:[#allocation10 + $0x100] sm:$0xff]
    %v792 = vld [vmem:[#allocation10 + $0x108] sm:$0xff]
    %v793 = vld [vmem:[#allocation10 + $0x110] sm:$0xff]
    %v794 = vld [vmem:[#allocation10 + $0x118] sm:$0xff]
    %v795 = vld [vmem:[#allocation10 + $0x120] sm:$0xff]
    %v796 = vld [vmem:[#allocation10 + $0x128] sm:$0xff]
    %v797 = vld [vmem:[#allocation10 + $0x130] sm:$0xff]
    %v798 = vld [vmem:[#allocation10 + $0x138] sm:$0xff]
    %v799 = vld [vmem:[#allocation10 + $0x140] sm:$0xff]
    %v800 = vld [vmem:[#allocation10 + $0x148] sm:$0xff]
    %v801 = vld [vmem:[#allocation10 + $0x150] sm:$0xff]
    %v802 = vld [vmem:[#allocation10 + $0x158] sm:$0xff]
    %v803 = vld [vmem:[#allocation10 + $0x160] sm:$0xff]
    %v804 = vld [vmem:[#allocation10 + $0x168] sm:$0xff]
    %v805 = vld [vmem:[#allocation10 + $0x170] sm:$0xff]
    %v806 = vld [vmem:[#allocation10 + $0x178] sm:$0xff]
    %v807 = vld [vmem:[#allocation10 + $0x180] sm:$0xff]
    %v808 = vld [vmem:[#allocation10 + $0x188] sm:$0xff]
    %v809 = vld [vmem:[#allocation10 + $0x190] sm:$0xff]
    %v810 = vld [vmem:[#allocation10 + $0x198] sm:$0xff]
    %v811 = vld [vmem:[#allocation10 + $0x1a0] sm:$0xff]
    %v812 = vld [vmem:[#allocation10 + $0x1a8] sm:$0xff]
    %v813 = vld [vmem:[#allocation10 + $0x1b0] sm:$0xff]
    %v814 = vld [vmem:[#allocation10 + $0x1b8] sm:$0xff]
    %v815 = vld [vmem:[#allocation10 + $0x1c0] sm:$0xff]
    %v816 = vld [vmem:[#allocation10 + $0x1c8] sm:$0xff]
    %v817 = vld [vmem:[#allocation10 + $0x1d0] sm:$0xff]
    %v818 = vld [vmem:[#allocation10 + $0x1d8] sm:$0xff]
    %v819 = vld [vmem:[#allocation10 + $0x1e0] sm:$0xff]
    %v820 = vld [vmem:[#allocation10 + $0x1e8] sm:$0xff]
    %v821 = vld [vmem:[#allocation10 + $0x1f0] sm:$0xff]
    %v822 = vld [vmem:[#allocation10 + $0x1f8] sm:$0xff]
    %v823 = vld [vmem:[#allocation10 + $0x200] sm:$0xff]
    %v824 = vld [vmem:[#allocation10 + $0x208] sm:$0xff]
    %v825 = vld [vmem:[#allocation10 + $0x210] sm:$0xff]
    %v826 = vld [vmem:[#allocation10 + $0x218] sm:$0xff]
    %v827 = vld [vmem:[#allocation10 + $0x220] sm:$0xff]
    %v828 = vld [vmem:[#allocation10 + $0x228] sm:$0xff]
    %v829 = vld [vmem:[#allocation10 + $0x230] sm:$0xff]
    %v830 = vld [vmem:[#allocation10 + $0x238] sm:$0xff]
    %v831 = vld [vmem:[#allocation10 + $0x240] sm:$0xff]
    %v832 = vld [vmem:[#allocation10 + $0x248] sm:$0xff]
    %v833 = vld [vmem:[#allocation10 + $0x250] sm:$0xff]
    %v834 = vld [vmem:[#allocation10 + $0x258] sm:$0xff]
    %v835 = vld [vmem:[#allocation10 + $0x260] sm:$0xff]
    %v836 = vld [vmem:[#allocation10 + $0x268] sm:$0xff]
    %v837 = vld [vmem:[#allocation10 + $0x270] sm:$0xff]
    %v838 = vld [vmem:[#allocation10 + $0x278] sm:$0xff]
    %v839 = vld [vmem:[#allocation10 + $0x280] sm:$0xff]
    %v840 = vld [vmem:[#allocation10 + $0x288] sm:$0xff]
    %v841 = vld [vmem:[#allocation10 + $0x290] sm:$0xff]
    %v842 = vld [vmem:[#allocation10 + $0x298] sm:$0xff]
    %v843 = vld [vmem:[#allocation10 + $0x2a0] sm:$0xff]
    %v844 = vld [vmem:[#allocation10 + $0x2a8] sm:$0xff]
    %v845 = vld [vmem:[#allocation10 + $0x2b0] sm:$0xff]
    %v846 = vld [vmem:[#allocation10 + $0x2b8] sm:$0xff]
    %v847 = vld [vmem:[#allocation10 + $0x2c0] sm:$0xff]
    %v848 = vld [vmem:[#allocation10 + $0x2c8] sm:$0xff]
    %v849 = vld [vmem:[#allocation10 + $0x2d0] sm:$0xff]
    %v850 = vld [vmem:[#allocation10 + $0x2d8] sm:$0xff]
    %v851 = vld [vmem:[#allocation10 + $0x2e0] sm:$0xff]
    %v852 = vld [vmem:[#allocation10 + $0x2e8] sm:$0xff]
    %v853 = vld [vmem:[#allocation10 + $0x2f0] sm:$0xff]
    %v854 = vld [vmem:[#allocation10 + $0x2f8] sm:$0xff]
    %v855 = vld [vmem:[#allocation10 + $0x300] sm:$0xff]
    %v856 = vld [vmem:[#allocation10 + $0x308] sm:$0xff]
    %v857 = vld [vmem:[#allocation10 + $0x310] sm:$0xff]
    %v858 = vld [vmem:[#allocation10 + $0x318] sm:$0xff]
    %v859 = vld [vmem:[#allocation10 + $0x320] sm:$0xff]
    %v860 = vld [vmem:[#allocation10 + $0x328] sm:$0xff]
    %v861 = vld [vmem:[#allocation10 + $0x330] sm:$0xff]
    %v862 = vld [vmem:[#allocation10 + $0x338] sm:$0xff]
    %v863 = vld [vmem:[#allocation10 + $0x340] sm:$0xff]
    %v864 = vld [vmem:[#allocation10 + $0x348] sm:$0xff]
    %v865 = vld [vmem:[#allocation10 + $0x350] sm:$0xff]
    %v866 = vld [vmem:[#allocation10 + $0x358] sm:$0xff]
    %v867 = vld [vmem:[#allocation10 + $0x360] sm:$0xff]
    %v868 = vld [vmem:[#allocation10 + $0x368] sm:$0xff]
    %v869 = vld [vmem:[#allocation10 + $0x370] sm:$0xff]
    %v870 = vld [vmem:[#allocation10 + $0x378] sm:$0xff]
    %v871 = vld [vmem:[#allocation10 + $0x380] sm:$0xff]
    %v872 = vld [vmem:[#allocation10 + $0x388] sm:$0xff]
    %v873 = vld [vmem:[#allocation10 + $0x390] sm:$0xff]
    %v874 = vld [vmem:[#allocation10 + $0x398] sm:$0xff]
    %v875 = vld [vmem:[#allocation10 + $0x3a0] sm:$0xff]
    %v876 = vld [vmem:[#allocation10 + $0x3a8] sm:$0xff]
    %v877 = vld [vmem:[#allocation10 + $0x3b0] sm:$0xff]
    %v878 = vld [vmem:[#allocation10 + $0x3b8] sm:$0xff]
    %v879 = vld [vmem:[#allocation10 + $0x3c0] sm:$0xff]
    %v880 = vld [vmem:[#allocation10 + $0x3c8] sm:$0xff]
    %v881 = vld [vmem:[#allocation10 + $0x3d0] sm:$0xff]
    %v882 = vld [vmem:[#allocation10 + $0x3d8] sm:$0xff]
    %v883 = vld [vmem:[#allocation10 + $0x3e0] sm:$0xff]
    %v884 = vld [vmem:[#allocation10 + $0x3e8] sm:$0xff]
    %v885 = vld [vmem:[#allocation10 + $0x3f0] sm:$0xff]
    %v886 = vld [vmem:[#allocation10 + $0x3f8] sm:$0xff]
    %v887 = vld [vmem:[#allocation10 + $0x400] sm:$0xff]
    %v888 = vld [vmem:[#allocation10 + $0x408] sm:$0xff]
    %v889 = vld [vmem:[#allocation10 + $0x410] sm:$0xff]
    %v890 = vld [vmem:[#allocation10 + $0x418] sm:$0xff]
    %v891 = vld [vmem:[#allocation10 + $0x420] sm:$0xff]
    %v892 = vld [vmem:[#allocation10 + $0x428] sm:$0xff]
    %v893 = vld [vmem:[#allocation10 + $0x430] sm:$0xff]
    %v894 = vld [vmem:[#allocation10 + $0x438] sm:$0xff]
    %v895 = vld [vmem:[#allocation10 + $0x440] sm:$0xff]
    %v896 = vld [vmem:[#allocation10 + $0x448] sm:$0xff]
    %v897 = vld [vmem:[#allocation10 + $0x450] sm:$0xff]
    %v898 = vld [vmem:[#allocation10 + $0x458] sm:$0xff]
    %v899 = vld [vmem:[#allocation10 + $0x460] sm:$0xff]
    %v900 = vld [vmem:[#allocation10 + $0x468] sm:$0xff]
    %v901 = vld [vmem:[#allocation10 + $0x470] sm:$0xff]
    %v902 = vld [vmem:[#allocation10 + $0x478] sm:$0xff]
    %v903 = vld [vmem:[#allocation10 + $0x480] sm:$0xff]
    %v904 = vld [vmem:[#allocation10 + $0x488] sm:$0xff]
    %v905 = vld [vmem:[#allocation10 + $0x490] sm:$0xff]
    %v906 = vld [vmem:[#allocation10 + $0x498] sm:$0xff]
    %v907 = vld [vmem:[#allocation10 + $0x4a0] sm:$0xff]
    %v908 = vld [vmem:[#allocation10 + $0x4a8] sm:$0xff]
    %v909 = vld [vmem:[#allocation10 + $0x4b0] sm:$0xff]
    %v910 = vld [vmem:[#allocation10 + $0x4b8] sm:$0xff]
    %v911 = vld [vmem:[#allocation10 + $0x4c0] sm:$0xff]
    %v912 = vld [vmem:[#allocation10 + $0x4c8] sm:$0xff]
    %v913 = vld [vmem:[#allocation10 + $0x4d0] sm:$0xff]
    %v914 = vld [vmem:[#allocation10 + $0x4d8] sm:$0xff]
    %v915 = vld [vmem:[#allocation10 + $0x4e0] sm:$0xff]
    %v916 = vld [vmem:[#allocation10 + $0x4e8] sm:$0xff]
    %v917 = vld [vmem:[#allocation10 + $0x4f0] sm:$0xff]
    %v918 = vld [vmem:[#allocation10 + $0x4f8] sm:$0xff]
    %v919 = vld [vmem:[#allocation10 + $0x500] sm:$0xff]
    %v920 = vld [vmem:[#allocation10 + $0x508] sm:$0xff]
    %v921 = vld [vmem:[#allocation10 + $0x510] sm:$0xff]
    %v922 = vld [vmem:[#allocation10 + $0x518] sm:$0xff]
    %v923 = vld [vmem:[#allocation10 + $0x520] sm:$0xff]
    %v924 = vld [vmem:[#allocation10 + $0x528] sm:$0xff]
    %v925 = vld [vmem:[#allocation10 + $0x530] sm:$0xff]
    %v926 = vld [vmem:[#allocation10 + $0x538] sm:$0xff]
    %v927 = vld [vmem:[#allocation10 + $0x540] sm:$0xff]
    %v928 = vld [vmem:[#allocation10 + $0x548] sm:$0xff]
    %v929 = vld [vmem:[#allocation10 + $0x550] sm:$0xff]
    %v930 = vld [vmem:[#allocation10 + $0x558] sm:$0xff]
    %v931 = vld [vmem:[#allocation10 + $0x560] sm:$0xff]
    %v932 = vld [vmem:[#allocation10 + $0x568] sm:$0xff]
    %v933 = vld [vmem:[#allocation10 + $0x570] sm:$0xff]
    %v934 = vld [vmem:[#allocation10 + $0x578] sm:$0xff]
    %v935 = vld [vmem:[#allocation10 + $0x580] sm:$0xff]
    %v936 = vld [vmem:[#allocation10 + $0x588] sm:$0xff]
    %v937 = vld [vmem:[#allocation10 + $0x590] sm:$0xff]
    %v938 = vld [vmem:[#allocation10 + $0x598] sm:$0xff]
    %v939 = vld [vmem:[#allocation10 + $0x5a0] sm:$0xff]
    %v940 = vld [vmem:[#allocation10 + $0x5a8] sm:$0xff]
    %v941 = vld [vmem:[#allocation10 + $0x5b0] sm:$0xff]
    %v942 = vld [vmem:[#allocation10 + $0x5b8] sm:$0xff]
    %v943 = vld [vmem:[#allocation10 + $0x5c0] sm:$0xff]
    %v944 = vld [vmem:[#allocation10 + $0x5c8] sm:$0xff]
    %v945 = vld [vmem:[#allocation10 + $0x5d0] sm:$0xff]
    %v946 = vld [vmem:[#allocation10 + $0x5d8] sm:$0xff]
    %v947 = vld [vmem:[#allocation10 + $0x5e0] sm:$0xff]
    %v948 = vld [vmem:[#allocation10 + $0x5e8] sm:$0xff]
    %v949 = vld [vmem:[#allocation10 + $0x5f0] sm:$0xff]
    %v950 = vld [vmem:[#allocation10 + $0x5f8] sm:$0xff]
    %v951 = vld [vmem:[#allocation10 + $0x600] sm:$0xff]
    %v952 = vld [vmem:[#allocation10 + $0x608] sm:$0xff]
    %v953 = vld [vmem:[#allocation10 + $0x610] sm:$0xff]
    %v954 = vld [vmem:[#allocation10 + $0x618] sm:$0xff]
    %v955 = vld [vmem:[#allocation10 + $0x620] sm:$0xff]
    %v956 = vld [vmem:[#allocation10 + $0x628] sm:$0xff]
    %v957 = vld [vmem:[#allocation10 + $0x630] sm:$0xff]
    %v958 = vld [vmem:[#allocation10 + $0x638] sm:$0xff]
    %v959 = vld [vmem:[#allocation10 + $0x640] sm:$0xff]
    %v960 = vld [vmem:[#allocation10 + $0x648] sm:$0xff]
    %v961 = vld [vmem:[#allocation10 + $0x650] sm:$0xff]
    %v962 = vld [vmem:[#allocation10 + $0x658] sm:$0xff]
    %v963 = vld [vmem:[#allocation10 + $0x660] sm:$0xff]
    %v964 = vld [vmem:[#allocation10 + $0x668] sm:$0xff]
    %v965 = vld [vmem:[#allocation10 + $0x670] sm:$0xff]
    %v966 = vld [vmem:[#allocation10 + $0x678] sm:$0xff]
    %v967 = vld [vmem:[#allocation10 + $0x680] sm:$0xff]
    %v968 = vld [vmem:[#allocation10 + $0x688] sm:$0xff]
    %v969 = vld [vmem:[#allocation10 + $0x690] sm:$0xff]
    %v970 = vld [vmem:[#allocation10 + $0x698] sm:$0xff]
    %v971 = vld [vmem:[#allocation10 + $0x6a0] sm:$0xff]
    %v972 = vld [vmem:[#allocation10 + $0x6a8] sm:$0xff]
    %v973 = vld [vmem:[#allocation10 + $0x6b0] sm:$0xff]
    %v974 = vld [vmem:[#allocation10 + $0x6b8] sm:$0xff]
    %v975 = vld [vmem:[#allocation10 + $0x6c0] sm:$0xff]
    %v976 = vld [vmem:[#allocation10 + $0x6c8] sm:$0xff]
    %v977 = vld [vmem:[#allocation10 + $0x6d0] sm:$0xff]
    %v978 = vld [vmem:[#allocation10 + $0x6d8] sm:$0xff]
    %v979 = vld [vmem:[#allocation10 + $0x6e0] sm:$0xff]
    %v980 = vld [vmem:[#allocation10 + $0x6e8] sm:$0xff]
    %v981 = vld [vmem:[#allocation10 + $0x6f0] sm:$0xff]
    %v982 = vld [vmem:[#allocation10 + $0x6f8] sm:$0xff]
    %v983 = vld [vmem:[#allocation10 + $0x700] sm:$0xff]
    %v984 = vld [vmem:[#allocation10 + $0x708] sm:$0xff]
    %v985 = vld [vmem:[#allocation10 + $0x710] sm:$0xff]
    %v986 = vld [vmem:[#allocation10 + $0x718] sm:$0xff]
    %v987 = vld [vmem:[#allocation10 + $0x720] sm:$0xff]
    %v988 = vld [vmem:[#allocation10 + $0x728] sm:$0xff]
    %v989 = vld [vmem:[#allocation10 + $0x730] sm:$0xff]
    %v990 = vld [vmem:[#allocation10 + $0x738] sm:$0xff]
    %v991 = vld [vmem:[#allocation10 + $0x740] sm:$0xff]
    %v992 = vld [vmem:[#allocation10 + $0x748] sm:$0xff]
    %v993 = vld [vmem:[#allocation10 + $0x750] sm:$0xff]
    %v994 = vld [vmem:[#allocation10 + $0x758] sm:$0xff]
    %v995 = vld [vmem:[#allocation10 + $0x760] sm:$0xff]
    %v996 = vld [vmem:[#allocation10 + $0x768] sm:$0xff]
    %v997 = vld [vmem:[#allocation10 + $0x770] sm:$0xff]
    %v998 = vld [vmem:[#allocation10 + $0x778] sm:$0xff]
    %v999 = vld [vmem:[#allocation10 + $0x780] sm:$0xff]
    %v1000 = vld [vmem:[#allocation10 + $0x788] sm:$0xff]
    %v1001 = vld [vmem:[#allocation10 + $0x790] sm:$0xff]
    %v1002 = vld [vmem:[#allocation10 + $0x798] sm:$0xff]
    %v1003 = vld [vmem:[#allocation10 + $0x7a0] sm:$0xff]
    %v1004 = vld [vmem:[#allocation10 + $0x7a8] sm:$0xff]
    %v1005 = vld [vmem:[#allocation10 + $0x7b0] sm:$0xff]
    %v1006 = vld [vmem:[#allocation10 + $0x7b8] sm:$0xff]
    %v1007 = vld [vmem:[#allocation10 + $0x7c0] sm:$0xff]
    %v1008 = vld [vmem:[#allocation10 + $0x7c8] sm:$0xff]
    %v1009 = vld [vmem:[#allocation10 + $0x7d0] sm:$0xff]
    %v1010 = vld [vmem:[#allocation10 + $0x7d8] sm:$0xff]
    %v1011 = vld [vmem:[#allocation10 + $0x7e0] sm:$0xff]
    %v1012 = vld [vmem:[#allocation10 + $0x7e8] sm:$0xff]
    %v1013 = vld [vmem:[#allocation10 + $0x7f0] sm:$0xff]
    %v1014 = vld [vmem:[#allocation10 + $0x7f8] sm:$0xff]
    %v1015 = vld [vmem:[#allocation10 + $0x800] sm:$0xff]
    %v1016 = vld [vmem:[#allocation10 + $0x808] sm:$0xff]
    %v1017 = vld [vmem:[#allocation10 + $0x810] sm:$0xff]
    %v1018 = vld [vmem:[#allocation10 + $0x818] sm:$0xff]
    %v1019 = vld [vmem:[#allocation10 + $0x820] sm:$0xff]
    %v1020 = vld [vmem:[#allocation10 + $0x828] sm:$0xff]
    %v1021 = vld [vmem:[#allocation10 + $0x830] sm:$0xff]
    %v1022 = vld [vmem:[#allocation10 + $0x838] sm:$0xff]
    %v1023 = vld [vmem:[#allocation10 + $0x840] sm:$0xff]
    %v1024 = vld [vmem:[#allocation10 + $0x848] sm:$0xff]
    %v1025 = vld [vmem:[#allocation10 + $0x850] sm:$0xff]
    %v1026 = vld [vmem:[#allocation10 + $0x858] sm:$0xff]
    %v1027 = vld [vmem:[#allocation10 + $0x860] sm:$0xff]
    %v1028 = vld [vmem:[#allocation10 + $0x868] sm:$0xff]
    %v1029 = vld [vmem:[#allocation10 + $0x870] sm:$0xff]
    %v1030 = vld [vmem:[#allocation10 + $0x878] sm:$0xff]
    %v1031 = vld [vmem:[#allocation10 + $0x880] sm:$0xff]
    %v1032 = vld [vmem:[#allocation10 + $0x888] sm:$0xff]
    %v1033 = vld [vmem:[#allocation10 + $0x890] sm:$0xff]
    %v1034 = vld [vmem:[#allocation10 + $0x898] sm:$0xff]
    %v1035 = vld [vmem:[#allocation10 + $0x8a0] sm:$0xff]
    %v1036 = vld [vmem:[#allocation10 + $0x8a8] sm:$0xff]
    %v1037 = vld [vmem:[#allocation10 + $0x8b0] sm:$0xff]
    %v1038 = vld [vmem:[#allocation10 + $0x8b8] sm:$0xff]
    %v1039 = vld [vmem:[#allocation10 + $0x8c0] sm:$0xff]
    %v1040 = vld [vmem:[#allocation10 + $0x8c8] sm:$0xff]
    %v1041 = vld [vmem:[#allocation10 + $0x8d0] sm:$0xff]
    %v1042 = vld [vmem:[#allocation10 + $0x8d8] sm:$0xff]
    %v1043 = vld [vmem:[#allocation10 + $0x8e0] sm:$0xff]
    %v1044 = vld [vmem:[#allocation10 + $0x8e8] sm:$0xff]
    %v1045 = vld [vmem:[#allocation10 + $0x8f0] sm:$0xff]
    %v1046 = vld [vmem:[#allocation10 + $0x8f8] sm:$0xff]
    %v1047 = vld [vmem:[#allocation10 + $0x900] sm:$0xff]
    %v1048 = vld [vmem:[#allocation10 + $0x908] sm:$0xff]
    %v1049 = vld [vmem:[#allocation10 + $0x910] sm:$0xff]
    %v1050 = vld [vmem:[#allocation10 + $0x918] sm:$0xff]
    %v1051 = vld [vmem:[#allocation10 + $0x920] sm:$0xff]
    %v1052 = vld [vmem:[#allocation10 + $0x928] sm:$0xff]
    %v1053 = vld [vmem:[#allocation10 + $0x930] sm:$0xff]
    %v1054 = vld [vmem:[#allocation10 + $0x938] sm:$0xff]
    %v1055 = vld [vmem:[#allocation10 + $0x940] sm:$0xff]
    %v1056 = vld [vmem:[#allocation10 + $0x948] sm:$0xff]
    %v1057 = vld [vmem:[#allocation10 + $0x950] sm:$0xff]
    %v1058 = vld [vmem:[#allocation10 + $0x958] sm:$0xff]
    %v1059 = vld [vmem:[#allocation10 + $0x960] sm:$0xff]
    %v1060 = vld [vmem:[#allocation10 + $0x968] sm:$0xff]
    %v1061 = vld [vmem:[#allocation10 + $0x970] sm:$0xff]
    %v1062 = vld [vmem:[#allocation10 + $0x978] sm:$0xff]
    %v1063 = vld [vmem:[#allocation10 + $0x980] sm:$0xff]
    %v1064 = vld [vmem:[#allocation10 + $0x988] sm:$0xff]
    %v1065 = vld [vmem:[#allocation10 + $0x990] sm:$0xff]
    %v1066 = vld [vmem:[#allocation10 + $0x998] sm:$0xff]
    %v1067 = vld [vmem:[#allocation10 + $0x9a0] sm:$0xff]
    %v1068 = vld [vmem:[#allocation10 + $0x9a8] sm:$0xff]
    %v1069 = vld [vmem:[#allocation10 + $0x9b0] sm:$0xff]
    %v1070 = vld [vmem:[#allocation10 + $0x9b8] sm:$0xff]
    %v1071 = vld [vmem:[#allocation10 + $0x9c0] sm:$0xff]
    %v1072 = vld [vmem:[#allocation10 + $0x9c8] sm:$0xff]
    %v1073 = vld [vmem:[#allocation10 + $0x9d0] sm:$0xff]
    %v1074 = vld [vmem:[#allocation10 + $0x9d8] sm:$0xff]
    %v1075 = vld [vmem:[#allocation10 + $0x9e0] sm:$0xff]
    %v1076 = vld [vmem:[#allocation10 + $0x9e8] sm:$0xff]
    %v1077 = vld [vmem:[#allocation10 + $0x9f0] sm:$0xff]
    %v1078 = vld [vmem:[#allocation10 + $0x9f8] sm:$0xff]
    %v1079 = vld [vmem:[#allocation10 + $0xa00] sm:$0xff]
    %v1080 = vld [vmem:[#allocation10 + $0xa08] sm:$0xff]
    %v1081 = vld [vmem:[#allocation10 + $0xa10] sm:$0xff]
    %v1082 = vld [vmem:[#allocation10 + $0xa18] sm:$0xff]
    %v1083 = vld [vmem:[#allocation10 + $0xa20] sm:$0xff]
    %v1084 = vld [vmem:[#allocation10 + $0xa28] sm:$0xff]
    %v1085 = vld [vmem:[#allocation10 + $0xa30] sm:$0xff]
    %v1086 = vld [vmem:[#allocation10 + $0xa38] sm:$0xff]
    %v1087 = vld [vmem:[#allocation10 + $0xa40] sm:$0xff]
    %v1088 = vld [vmem:[#allocation10 + $0xa48] sm:$0xff]
    %v1089 = vld [vmem:[#allocation10 + $0xa50] sm:$0xff]
    %v1090 = vld [vmem:[#allocation10 + $0xa58] sm:$0xff]
    %v1091 = vld [vmem:[#allocation10 + $0xa60] sm:$0xff]
    %v1092 = vld [vmem:[#allocation10 + $0xa68] sm:$0xff]
    %v1093 = vld [vmem:[#allocation10 + $0xa70] sm:$0xff]
    %v1094 = vld [vmem:[#allocation10 + $0xa78] sm:$0xff]
    %v1095 = vld [vmem:[#allocation10 + $0xa80] sm:$0xff]
    %v1096 = vld [vmem:[#allocation10 + $0xa88] sm:$0xff]
    %v1097 = vld [vmem:[#allocation10 + $0xa90] sm:$0xff]
    %v1098 = vld [vmem:[#allocation10 + $0xa98] sm:$0xff]
    %v1099 = vld [vmem:[#allocation10 + $0xaa0] sm:$0xff]
    %v1100 = vld [vmem:[#allocation10 + $0xaa8] sm:$0xff]
    %v1101 = vld [vmem:[#allocation10 + $0xab0] sm:$0xff]
    %v1102 = vld [vmem:[#allocation10 + $0xab8] sm:$0xff]
    %v1103 = vld [vmem:[#allocation10 + $0xac0] sm:$0xff]
    %v1104 = vld [vmem:[#allocation10 + $0xac8] sm:$0xff]
    %v1105 = vld [vmem:[#allocation10 + $0xad0] sm:$0xff]
    %v1106 = vld [vmem:[#allocation10 + $0xad8] sm:$0xff]
    %v1107 = vld [vmem:[#allocation10 + $0xae0] sm:$0xff]
    %v1108 = vld [vmem:[#allocation10 + $0xae8] sm:$0xff]
    %v1109 = vld [vmem:[#allocation10 + $0xaf0] sm:$0xff]
    %v1110 = vld [vmem:[#allocation10 + $0xaf8] sm:$0xff]
    %v1111 = vld [vmem:[#allocation10 + $0xb00] sm:$0xff]
    %v1112 = vld [vmem:[#allocation10 + $0xb08] sm:$0xff]
    %v1113 = vld [vmem:[#allocation10 + $0xb10] sm:$0xff]
    %v1114 = vld [vmem:[#allocation10 + $0xb18] sm:$0xff]
    %v1115 = vld [vmem:[#allocation10 + $0xb20] sm:$0xff]
    %v1116 = vld [vmem:[#allocation10 + $0xb28] sm:$0xff]
    %v1117 = vld [vmem:[#allocation10 + $0xb30] sm:$0xff]
    %v1118 = vld [vmem:[#allocation10 + $0xb38] sm:$0xff]
    %v1119 = vld [vmem:[#allocation10 + $0xb40] sm:$0xff]
    %v1120 = vld [vmem:[#allocation10 + $0xb48] sm:$0xff]
    %v1121 = vld [vmem:[#allocation10 + $0xb50] sm:$0xff]
    %v1122 = vld [vmem:[#allocation10 + $0xb58] sm:$0xff]
    %v1123 = vld [vmem:[#allocation10 + $0xb60] sm:$0xff]
    %v1124 = vld [vmem:[#allocation10 + $0xb68] sm:$0xff]
    %v1125 = vld [vmem:[#allocation10 + $0xb70] sm:$0xff]
    %v1126 = vld [vmem:[#allocation10 + $0xb78] sm:$0xff]
    %v1127 = vld [vmem:[#allocation10 + $0xb80] sm:$0xff]
    %v1128 = vld [vmem:[#allocation10 + $0xb88] sm:$0xff]
    %v1129 = vld [vmem:[#allocation10 + $0xb90] sm:$0xff]
    %v1130 = vld [vmem:[#allocation10 + $0xb98] sm:$0xff]
    %v1131 = vld [vmem:[#allocation10 + $0xba0] sm:$0xff]
    %v1132 = vld [vmem:[#allocation10 + $0xba8] sm:$0xff]
    %v1133 = vld [vmem:[#allocation10 + $0xbb0] sm:$0xff]
    %v1134 = vld [vmem:[#allocation10 + $0xbb8] sm:$0xff]
    %v1135 = vld [vmem:[#allocation10 + $0xbc0] sm:$0xff]
    %v1136 = vld [vmem:[#allocation10 + $0xbc8] sm:$0xff]
    %v1137 = vld [vmem:[#allocation10 + $0xbd0] sm:$0xff]
    %v1138 = vld [vmem:[#allocation10 + $0xbd8] sm:$0xff]
    %v1139 = vld [vmem:[#allocation10 + $0xbe0] sm:$0xff]
    %v1140 = vld [vmem:[#allocation10 + $0xbe8] sm:$0xff]
    %v1141 = vld [vmem:[#allocation10 + $0xbf0] sm:$0xff]
    %v1142 = vld [vmem:[#allocation10 + $0xbf8] sm:$0xff]
    %v1143 = vld [vmem:[#allocation10 + $0xc00] sm:$0xff]
    %v1144 = vld [vmem:[#allocation10 + $0xc08] sm:$0xff]
    %v1145 = vld [vmem:[#allocation10 + $0xc10] sm:$0xff]
    %v1146 = vld [vmem:[#allocation10 + $0xc18] sm:$0xff]
    %v1147 = vld [vmem:[#allocation10 + $0xc20] sm:$0xff]
    %v1148 = vld [vmem:[#allocation10 + $0xc28] sm:$0xff]
    %v1149 = vld [vmem:[#allocation10 + $0xc30] sm:$0xff]
    %v1150 = vld [vmem:[#allocation10 + $0xc38] sm:$0xff]
    %v1151 = vld [vmem:[#allocation10 + $0xc40] sm:$0xff]
    %v1152 = vld [vmem:[#allocation10 + $0xc48] sm:$0xff]
    %v1153 = vld [vmem:[#allocation10 + $0xc50] sm:$0xff]
    %v1154 = vld [vmem:[#allocation10 + $0xc58] sm:$0xff]
    %v1155 = vld [vmem:[#allocation10 + $0xc60] sm:$0xff]
    %v1156 = vld [vmem:[#allocation10 + $0xc68] sm:$0xff]
    %v1157 = vld [vmem:[#allocation10 + $0xc70] sm:$0xff]
    %v1158 = vld [vmem:[#allocation10 + $0xc78] sm:$0xff]
    %v1159 = vld [vmem:[#allocation10 + $0xc80] sm:$0xff]
    %v1160 = vld [vmem:[#allocation10 + $0xc88] sm:$0xff]
    %v1161 = vld [vmem:[#allocation10 + $0xc90] sm:$0xff]
    %v1162 = vld [vmem:[#allocation10 + $0xc98] sm:$0xff]
    %v1163 = vld [vmem:[#allocation10 + $0xca0] sm:$0xff]
    %v1164 = vld [vmem:[#allocation10 + $0xca8] sm:$0xff]
    %v1165 = vld [vmem:[#allocation10 + $0xcb0] sm:$0xff]
    %v1166 = vld [vmem:[#allocation10 + $0xcb8] sm:$0xff]
    %v1167 = vld [vmem:[#allocation10 + $0xcc0] sm:$0xff]
    %v1168 = vld [vmem:[#allocation10 + $0xcc8] sm:$0xff]
    %v1169 = vld [vmem:[#allocation10 + $0xcd0] sm:$0xff]
    %v1170 = vld [vmem:[#allocation10 + $0xcd8] sm:$0xff]
    %v1171 = vld [vmem:[#allocation10 + $0xce0] sm:$0xff]
    %v1172 = vld [vmem:[#allocation10 + $0xce8] sm:$0xff]
    %v1173 = vld [vmem:[#allocation10 + $0xcf0] sm:$0xff]
    %v1174 = vld [vmem:[#allocation10 + $0xcf8] sm:$0xff]
    %v1175 = vld [vmem:[#allocation10 + $0xd00] sm:$0xff]
    %v1176 = vld [vmem:[#allocation10 + $0xd08] sm:$0xff]
    %v1177 = vld [vmem:[#allocation10 + $0xd10] sm:$0xff]
    %v1178 = vld [vmem:[#allocation10 + $0xd18] sm:$0xff]
    %v1179 = vld [vmem:[#allocation10 + $0xd20] sm:$0xff]
    %v1180 = vld [vmem:[#allocation10 + $0xd28] sm:$0xff]
    %v1181 = vld [vmem:[#allocation10 + $0xd30] sm:$0xff]
    %v1182 = vld [vmem:[#allocation10 + $0xd38] sm:$0xff]
    %v1183 = vld [vmem:[#allocation10 + $0xd40] sm:$0xff]
    %v1184 = vld [vmem:[#allocation10 + $0xd48] sm:$0xff]
    %v1185 = vld [vmem:[#allocation10 + $0xd50] sm:$0xff]
    %v1186 = vld [vmem:[#allocation10 + $0xd58] sm:$0xff]
    %v1187 = vld [vmem:[#allocation10 + $0xd60] sm:$0xff]
    %v1188 = vld [vmem:[#allocation10 + $0xd68] sm:$0xff]
    %v1189 = vld [vmem:[#allocation10 + $0xd70] sm:$0xff]
    %v1190 = vld [vmem:[#allocation10 + $0xd78] sm:$0xff]
    %v1191 = vld [vmem:[#allocation10 + $0xd80] sm:$0xff]
    %v1192 = vld [vmem:[#allocation10 + $0xd88] sm:$0xff]
    %v1193 = vld [vmem:[#allocation10 + $0xd90] sm:$0xff]
    %v1194 = vld [vmem:[#allocation10 + $0xd98] sm:$0xff]
    %v1195 = vld [vmem:[#allocation10 + $0xda0] sm:$0xff]
    %v1196 = vld [vmem:[#allocation10 + $0xda8] sm:$0xff]
    %v1197 = vld [vmem:[#allocation10 + $0xdb0] sm:$0xff]
    %v1198 = vld [vmem:[#allocation10 + $0xdb8] sm:$0xff]
    %v1199 = vld [vmem:[#allocation10 + $0xdc0] sm:$0xff]
    %v1200 = vld [vmem:[#allocation10 + $0xdc8] sm:$0xff]
    %v1201 = vld [vmem:[#allocation10 + $0xdd0] sm:$0xff]
    %v1202 = vld [vmem:[#allocation10 + $0xdd8] sm:$0xff]
    %v1203 = vld [vmem:[#allocation10 + $0xde0] sm:$0xff]
    %v1204 = vld [vmem:[#allocation10 + $0xde8] sm:$0xff]
    %v1205 = vld [vmem:[#allocation10 + $0xdf0] sm:$0xff]
    %v1206 = vld [vmem:[#allocation10 + $0xdf8] sm:$0xff]
    %v1207 = vld [vmem:[#allocation10 + $0xe00] sm:$0xff]
    %v1208 = vld [vmem:[#allocation10 + $0xe08] sm:$0xff]
    %v1209 = vld [vmem:[#allocation10 + $0xe10] sm:$0xff]
    %v1210 = vld [vmem:[#allocation10 + $0xe18] sm:$0xff]
    %v1211 = vld [vmem:[#allocation10 + $0xe20] sm:$0xff]
    %v1212 = vld [vmem:[#allocation10 + $0xe28] sm:$0xff]
    %v1213 = vld [vmem:[#allocation10 + $0xe30] sm:$0xff]
    %v1214 = vld [vmem:[#allocation10 + $0xe38] sm:$0xff]
    %v1215 = vld [vmem:[#allocation10 + $0xe40] sm:$0xff]
    %v1216 = vld [vmem:[#allocation10 + $0xe48] sm:$0xff]
    %v1217 = vld [vmem:[#allocation10 + $0xe50] sm:$0xff]
    %v1218 = vld [vmem:[#allocation10 + $0xe58] sm:$0xff]
    %v1219 = vld [vmem:[#allocation10 + $0xe60] sm:$0xff]
    %v1220 = vld [vmem:[#allocation10 + $0xe68] sm:$0xff]
    %v1221 = vld [vmem:[#allocation10 + $0xe70] sm:$0xff]
    %v1222 = vld [vmem:[#allocation10 + $0xe78] sm:$0xff]
    %v1223 = vld [vmem:[#allocation10 + $0xe80] sm:$0xff]
    %v1224 = vld [vmem:[#allocation10 + $0xe88] sm:$0xff]
    %v1225 = vld [vmem:[#allocation10 + $0xe90] sm:$0xff]
    %v1226 = vld [vmem:[#allocation10 + $0xe98] sm:$0xff]
    %v1227 = vld [vmem:[#allocation10 + $0xea0] sm:$0xff]
    %v1228 = vld [vmem:[#allocation10 + $0xea8] sm:$0xff]
    %v1229 = vld [vmem:[#allocation10 + $0xeb0] sm:$0xff]
    %v1230 = vld [vmem:[#allocation10 + $0xeb8] sm:$0xff]
    %v1231 = vld [vmem:[#allocation10 + $0xec0] sm:$0xff]
    %v1232 = vld [vmem:[#allocation10 + $0xec8] sm:$0xff]
    %v1233 = vld [vmem:[#allocation10 + $0xed0] sm:$0xff]
    %v1234 = vld [vmem:[#allocation10 + $0xed8] sm:$0xff]
    %v1235 = vld [vmem:[#allocation10 + $0xee0] sm:$0xff]
    %v1236 = vld [vmem:[#allocation10 + $0xee8] sm:$0xff]
    %v1237 = vld [vmem:[#allocation10 + $0xef0] sm:$0xff]
    %v1238 = vld [vmem:[#allocation10 + $0xef8] sm:$0xff]
    %v1239 = vld [vmem:[#allocation10 + $0xf00] sm:$0xff]
    %v1240 = vld [vmem:[#allocation10 + $0xf08] sm:$0xff]
    %v1241 = vld [vmem:[#allocation10 + $0xf10] sm:$0xff]
    %v1242 = vld [vmem:[#allocation10 + $0xf18] sm:$0xff]
    %v1243 = vld [vmem:[#allocation10 + $0xf20] sm:$0xff]
    %v1244 = vld [vmem:[#allocation10 + $0xf28] sm:$0xff]
    %v1245 = vld [vmem:[#allocation10 + $0xf30] sm:$0xff]
    %v1246 = vld [vmem:[#allocation10 + $0xf38] sm:$0xff]
    %v1247 = vld [vmem:[#allocation10 + $0xf40] sm:$0xff]
    %v1248 = vld [vmem:[#allocation10 + $0xf48] sm:$0xff]
    %v1249 = vld [vmem:[#allocation10 + $0xf50] sm:$0xff]
    %v1250 = vld [vmem:[#allocation10 + $0xf58] sm:$0xff]
    %v1251 = vld [vmem:[#allocation10 + $0xf60] sm:$0xff]
    %v1252 = vld [vmem:[#allocation10 + $0xf68] sm:$0xff]
    %v1253 = vld [vmem:[#allocation10 + $0xf70] sm:$0xff]
    %v1254 = vld [vmem:[#allocation10 + $0xf78] sm:$0xff]
    %v1255 = vld [vmem:[#allocation10 + $0xf80] sm:$0xff]
    %v1256 = vld [vmem:[#allocation10 + $0xf88] sm:$0xff]
    %v1257 = vld [vmem:[#allocation10 + $0xf90] sm:$0xff]
    %v1258 = vld [vmem:[#allocation10 + $0xf98] sm:$0xff]
    %v1259 = vld [vmem:[#allocation10 + $0xfa0] sm:$0xff]
    %v1260 = vld [vmem:[#allocation10 + $0xfa8] sm:$0xff]
    %v1261 = vld [vmem:[#allocation10 + $0xfb0] sm:$0xff]
    %v1262 = vld [vmem:[#allocation10 + $0xfb8] sm:$0xff]
    %v1263 = vld [vmem:[#allocation10 + $0xfc0] sm:$0xff]
    %v1264 = vld [vmem:[#allocation10 + $0xfc8] sm:$0xff]
    %v1265 = vld [vmem:[#allocation10 + $0xfd0] sm:$0xff]
    %v1266 = vld [vmem:[#allocation10 + $0xfd8] sm:$0xff]
    %v1267 = vld [vmem:[#allocation10 + $0xfe0] sm:$0xff]
    %v1268 = vld [vmem:[#allocation10 + $0xfe8] sm:$0xff]
    %v1269 = vld [vmem:[#allocation10 + $0xff0] sm:$0xff]
    %v1270 = vld [vmem:[#allocation10 + $0xff8] sm:$0xff]
    %v1271 = vld [vmem:[#allocation10 + $0x1000] sm:$0xff]
    %v1272 = vld [vmem:[#allocation10 + $0x1008] sm:$0xff]
    %v1273 = vld [vmem:[#allocation10 + $0x1010] sm:$0xff]
    %v1274 = vld [vmem:[#allocation10 + $0x1018] sm:$0xff]
    %v1275 = vld [vmem:[#allocation10 + $0x1020] sm:$0xff]
    %v1276 = vld [vmem:[#allocation10 + $0x1028] sm:$0xff]
    %v1277 = vld [vmem:[#allocation10 + $0x1030] sm:$0xff]
    %v1278 = vld [vmem:[#allocation10 + $0x1038] sm:$0xff]
    %v1279 = vld [vmem:[#allocation10 + $0x1040] sm:$0xff]
    %v1280 = vld [vmem:[#allocation10 + $0x1048] sm:$0xff]
    %v1281 = vld [vmem:[#allocation10 + $0x1050] sm:$0xff]
    %v1282 = vld [vmem:[#allocation10 + $0x1058] sm:$0xff]
    %v1283 = vld [vmem:[#allocation10 + $0x1060] sm:$0xff]
    %v1284 = vld [vmem:[#allocation10 + $0x1068] sm:$0xff]
    %v1285 = vld [vmem:[#allocation10 + $0x1070] sm:$0xff]
    %v1286 = vld [vmem:[#allocation10 + $0x1078] sm:$0xff]
    %v1287 = vld [vmem:[#allocation10 + $0x1080] sm:$0xff]
    %v1288 = vld [vmem:[#allocation10 + $0x1088] sm:$0xff]
    %v1289 = vld [vmem:[#allocation10 + $0x1090] sm:$0xff]
    %v1290 = vld [vmem:[#allocation10 + $0x1098] sm:$0xff]
    %v1291 = vld [vmem:[#allocation10 + $0x10a0] sm:$0xff]
    %v1292 = vld [vmem:[#allocation10 + $0x10a8] sm:$0xff]
    %v1293 = vld [vmem:[#allocation10 + $0x10b0] sm:$0xff]
    %v1294 = vld [vmem:[#allocation10 + $0x10b8] sm:$0xff]
    %v1295 = vld [vmem:[#allocation10 + $0x10c0] sm:$0xff]
    %v1296 = vld [vmem:[#allocation10 + $0x10c8] sm:$0xff]
    %v1297 = vld [vmem:[#allocation10 + $0x10d0] sm:$0xff]
    %v1298 = vld [vmem:[#allocation10 + $0x10d8] sm:$0xff]
    %v1299 = vld [vmem:[#allocation10 + $0x10e0] sm:$0xff]
    %v1300 = vld [vmem:[#allocation10 + $0x10e8] sm:$0xff]
    %v1301 = vld [vmem:[#allocation10 + $0x10f0] sm:$0xff]
    %v1302 = vld [vmem:[#allocation10 + $0x10f8] sm:$0xff]
    %v1303 = vld [vmem:[#allocation10 + $0x1100] sm:$0xff]
    %v1304 = vld [vmem:[#allocation10 + $0x1108] sm:$0xff]
    %v1305 = vld [vmem:[#allocation10 + $0x1110] sm:$0xff]
    %v1306 = vld [vmem:[#allocation10 + $0x1118] sm:$0xff]
    %v1307 = vld [vmem:[#allocation10 + $0x1120] sm:$0xff]
    %v1308 = vld [vmem:[#allocation10 + $0x1128] sm:$0xff]
    %v1309 = vld [vmem:[#allocation10 + $0x1130] sm:$0xff]
    %v1310 = vld [vmem:[#allocation10 + $0x1138] sm:$0xff]
    %v1311 = vld [vmem:[#allocation10 + $0x1140] sm:$0xff]
    %v1312 = vld [vmem:[#allocation10 + $0x1148] sm:$0xff]
    %v1313 = vld [vmem:[#allocation10 + $0x1150] sm:$0xff]
    %v1314 = vld [vmem:[#allocation10 + $0x1158] sm:$0xff]
    %v1315 = vld [vmem:[#allocation10 + $0x1160] sm:$0xff]
    %v1316 = vld [vmem:[#allocation10 + $0x1168] sm:$0xff]
    %v1317 = vld [vmem:[#allocation10 + $0x1170] sm:$0xff]
    %v1318 = vld [vmem:[#allocation10 + $0x1178] sm:$0xff]
    %v1319 = vld [vmem:[#allocation10 + $0x1180] sm:$0xff]
    %v1320 = vld [vmem:[#allocation10 + $0x1188] sm:$0xff]
    %v1321 = vld [vmem:[#allocation10 + $0x1190] sm:$0xff]
    %v1322 = vld [vmem:[#allocation10 + $0x1198] sm:$0xff]
    %v1323 = vld [vmem:[#allocation10 + $0x11a0] sm:$0xff]
    %v1324 = vld [vmem:[#allocation10 + $0x11a8] sm:$0xff]
    %v1325 = vld [vmem:[#allocation10 + $0x11b0] sm:$0xff]
    %v1326 = vld [vmem:[#allocation10 + $0x11b8] sm:$0xff]
    %v1327 = vld [vmem:[#allocation10 + $0x11c0] sm:$0xff]
    %v1328 = vld [vmem:[#allocation10 + $0x11c8] sm:$0xff]
    %v1329 = vld [vmem:[#allocation10 + $0x11d0] sm:$0xff]
    %v1330 = vld [vmem:[#allocation10 + $0x11d8] sm:$0xff]
    %v1331 = vld [vmem:[#allocation10 + $0x11e0] sm:$0xff]
    %v1332 = vld [vmem:[#allocation10 + $0x11e8] sm:$0xff]
    %v1333 = vld [vmem:[#allocation10 + $0x11f0] sm:$0xff]
    %v1334 = vld [vmem:[#allocation10 + $0x11f8] sm:$0xff]
    %v1335 = vld [vmem:[#allocation10 + $0x1200] sm:$0xff]
    %v1336 = vld [vmem:[#allocation10 + $0x1208] sm:$0xff]
    %v1337 = vld [vmem:[#allocation10 + $0x1210] sm:$0xff]
    %v1338 = vld [vmem:[#allocation10 + $0x1218] sm:$0xff]
    %v1339 = vld [vmem:[#allocation10 + $0x1220] sm:$0xff]
    %v1340 = vld [vmem:[#allocation10 + $0x1228] sm:$0xff]
    %v1341 = vld [vmem:[#allocation10 + $0x1230] sm:$0xff]
    %v1342 = vld [vmem:[#allocation10 + $0x1238] sm:$0xff]
    %v1343 = vld [vmem:[#allocation10 + $0x1240] sm:$0xff]
    %v1344 = vld [vmem:[#allocation10 + $0x1248] sm:$0xff]
    %v1345 = vld [vmem:[#allocation10 + $0x1250] sm:$0xff]
    %v1346 = vld [vmem:[#allocation10 + $0x1258] sm:$0xff]
    %v1347 = vld [vmem:[#allocation10 + $0x1260] sm:$0xff]
    %v1348 = vld [vmem:[#allocation10 + $0x1268] sm:$0xff]
    %v1349 = vld [vmem:[#allocation10 + $0x1270] sm:$0xff]
    %v1350 = vld [vmem:[#allocation10 + $0x1278] sm:$0xff]
    %v1351 = vld [vmem:[#allocation10 + $0x1280] sm:$0xff]
    %v1352 = vld [vmem:[#allocation10 + $0x1288] sm:$0xff]
    %v1353 = vld [vmem:[#allocation10 + $0x1290] sm:$0xff]
    %v1354 = vld [vmem:[#allocation10 + $0x1298] sm:$0xff]
    %v1355 = vld [vmem:[#allocation10 + $0x12a0] sm:$0xff]
    %v1356 = vld [vmem:[#allocation10 + $0x12a8] sm:$0xff]
    %v1357 = vld [vmem:[#allocation10 + $0x12b0] sm:$0xff]
    %v1358 = vld [vmem:[#allocation10 + $0x12b8] sm:$0xff]
    %v1359 = vld [vmem:[#allocation10 + $0x12c0] sm:$0xff]
    %v1360 = vld [vmem:[#allocation10 + $0x12c8] sm:$0xff]
    %v1361 = vld [vmem:[#allocation10 + $0x12d0] sm:$0xff]
    %v1362 = vld [vmem:[#allocation10 + $0x12d8] sm:$0xff]
    %v1363 = vld [vmem:[#allocation10 + $0x12e0] sm:$0xff]
    %v1364 = vld [vmem:[#allocation10 + $0x12e8] sm:$0xff]
    %v1365 = vld [vmem:[#allocation10 + $0x12f0] sm:$0xff]
    %v1366 = vld [vmem:[#allocation10 + $0x12f8] sm:$0xff]
    %v1367 = vld [vmem:[#allocation10 + $0x1300] sm:$0xff]
    %v1368 = vld [vmem:[#allocation10 + $0x1308] sm:$0xff]
    %v1369 = vld [vmem:[#allocation10 + $0x1310] sm:$0xff]
    %v1370 = vld [vmem:[#allocation10 + $0x1318] sm:$0xff]
    %v1371 = vld [vmem:[#allocation10 + $0x1320] sm:$0xff]
    %v1372 = vld [vmem:[#allocation10 + $0x1328] sm:$0xff]
    %v1373 = vld [vmem:[#allocation10 + $0x1330] sm:$0xff]
    %v1374 = vld [vmem:[#allocation10 + $0x1338] sm:$0xff]
    %v1375 = vld [vmem:[#allocation10 + $0x1340] sm:$0xff]
    %v1376 = vld [vmem:[#allocation10 + $0x1348] sm:$0xff]
    %v1377 = vld [vmem:[#allocation10 + $0x1350] sm:$0xff]
    %v1378 = vld [vmem:[#allocation10 + $0x1358] sm:$0xff]
    %v1379 = vld [vmem:[#allocation10 + $0x1360] sm:$0xff]
    %v1380 = vld [vmem:[#allocation10 + $0x1368] sm:$0xff]
    %v1381 = vld [vmem:[#allocation10 + $0x1370] sm:$0xff]
    %v1382 = vld [vmem:[#allocation10 + $0x1378] sm:$0xff]
    %v1383 = vld [vmem:[#allocation10 + $0x1380] sm:$0xff]
    %v1384 = vld [vmem:[#allocation10 + $0x1388] sm:$0xff]
    %v1385 = vld [vmem:[#allocation10 + $0x1390] sm:$0xff]
    %v1386 = vld [vmem:[#allocation10 + $0x1398] sm:$0xff]
    %v1387 = vld [vmem:[#allocation10 + $0x13a0] sm:$0xff]
    %v1388 = vld [vmem:[#allocation10 + $0x13a8] sm:$0xff]
    %v1389 = vld [vmem:[#allocation10 + $0x13b0] sm:$0xff]
    %v1390 = vld [vmem:[#allocation10 + $0x13b8] sm:$0xff]
    %v1391 = vld [vmem:[#allocation10 + $0x13c0] sm:$0xff]
    %v1392 = vld [vmem:[#allocation10 + $0x13c8] sm:$0xff]
    %v1393 = vld [vmem:[#allocation10 + $0x13d0] sm:$0xff]
    %v1394 = vld [vmem:[#allocation10 + $0x13d8] sm:$0xff]
    %v1395 = vld [vmem:[#allocation10 + $0x13e0] sm:$0xff]
    %v1396 = vld [vmem:[#allocation10 + $0x13e8] sm:$0xff]
    %v1397 = vld [vmem:[#allocation10 + $0x13f0] sm:$0xff]
    %v1398 = vld [vmem:[#allocation10 + $0x13f8] sm:$0xff]
    %v1399 = vld [vmem:[#allocation10 + $0x1400] sm:$0xff]
    %v1400 = vld [vmem:[#allocation10 + $0x1408] sm:$0xff]
    %v1401 = vld [vmem:[#allocation10 + $0x1410] sm:$0xff]
    %v1402 = vld [vmem:[#allocation10 + $0x1418] sm:$0xff]
    %v1403 = vld [vmem:[#allocation10 + $0x1420] sm:$0xff]
    %v1404 = vld [vmem:[#allocation10 + $0x1428] sm:$0xff]
    %v1405 = vld [vmem:[#allocation10 + $0x1430] sm:$0xff]
    %v1406 = vld [vmem:[#allocation10 + $0x1438] sm:$0xff]
    %v1407 = vld [vmem:[#allocation10 + $0x1440] sm:$0xff]
    %v1408 = vld [vmem:[#allocation10 + $0x1448] sm:$0xff]
    %v1409 = vld [vmem:[#allocation10 + $0x1450] sm:$0xff]
    %v1410 = vld [vmem:[#allocation10 + $0x1458] sm:$0xff]
    %v1411 = vld [vmem:[#allocation10 + $0x1460] sm:$0xff]
    %v1412 = vld [vmem:[#allocation10 + $0x1468] sm:$0xff]
    %v1413 = vld [vmem:[#allocation10 + $0x1470] sm:$0xff]
    %v1414 = vld [vmem:[#allocation10 + $0x1478] sm:$0xff]
    %v1415 = vld [vmem:[#allocation10 + $0x1480] sm:$0xff]
    %v1416 = vld [vmem:[#allocation10 + $0x1488] sm:$0xff]
    %v1417 = vld [vmem:[#allocation10 + $0x1490] sm:$0xff]
    %v1418 = vld [vmem:[#allocation10 + $0x1498] sm:$0xff]
    %v1419 = vld [vmem:[#allocation10 + $0x14a0] sm:$0xff]
    %v1420 = vld [vmem:[#allocation10 + $0x14a8] sm:$0xff]
    %v1421 = vld [vmem:[#allocation10 + $0x14b0] sm:$0xff]
    %v1422 = vld [vmem:[#allocation10 + $0x14b8] sm:$0xff]
    %v1423 = vld [vmem:[#allocation10 + $0x14c0] sm:$0xff]
    %v1424 = vld [vmem:[#allocation10 + $0x14c8] sm:$0xff]
    %v1425 = vld [vmem:[#allocation10 + $0x14d0] sm:$0xff]
    %v1426 = vld [vmem:[#allocation10 + $0x14d8] sm:$0xff]
    %v1427 = vld [vmem:[#allocation10 + $0x14e0] sm:$0xff]
    %v1428 = vld [vmem:[#allocation10 + $0x14e8] sm:$0xff]
    %v1429 = vld [vmem:[#allocation10 + $0x14f0] sm:$0xff]
    %v1430 = vld [vmem:[#allocation10 + $0x14f8] sm:$0xff]
    %v1431 = vld [vmem:[#allocation10 + $0x1500] sm:$0xff]
    %v1432 = vld [vmem:[#allocation10 + $0x1508] sm:$0xff]
    %v1433 = vld [vmem:[#allocation10 + $0x1510] sm:$0xff]
    %v1434 = vld [vmem:[#allocation10 + $0x1518] sm:$0xff]
    %v1435 = vld [vmem:[#allocation10 + $0x1520] sm:$0xff]
    %v1436 = vld [vmem:[#allocation10 + $0x1528] sm:$0xff]
    %v1437 = vld [vmem:[#allocation10 + $0x1530] sm:$0xff]
    %v1438 = vld [vmem:[#allocation10 + $0x1538] sm:$0xff]
    %v1439 = vld [vmem:[#allocation10 + $0x1540] sm:$0xff]
    %v1440 = vld [vmem:[#allocation10 + $0x1548] sm:$0xff]
    %v1441 = vld [vmem:[#allocation10 + $0x1550] sm:$0xff]
    %v1442 = vld [vmem:[#allocation10 + $0x1558] sm:$0xff]
    %v1443 = vld [vmem:[#allocation10 + $0x1560] sm:$0xff]
    %v1444 = vld [vmem:[#allocation10 + $0x1568] sm:$0xff]
    %v1445 = vld [vmem:[#allocation10 + $0x1570] sm:$0xff]
    %v1446 = vld [vmem:[#allocation10 + $0x1578] sm:$0xff]
    %v1447 = vld [vmem:[#allocation10 + $0x1580] sm:$0xff]
    %v1448 = vld [vmem:[#allocation10 + $0x1588] sm:$0xff]
    %v1449 = vld [vmem:[#allocation10 + $0x1590] sm:$0xff]
    %v1450 = vld [vmem:[#allocation10 + $0x1598] sm:$0xff]
    %v1451 = vld [vmem:[#allocation10 + $0x15a0] sm:$0xff]
    %v1452 = vld [vmem:[#allocation10 + $0x15a8] sm:$0xff]
    %v1453 = vld [vmem:[#allocation10 + $0x15b0] sm:$0xff]
    %v1454 = vld [vmem:[#allocation10 + $0x15b8] sm:$0xff]
    %v1455 = vld [vmem:[#allocation10 + $0x15c0] sm:$0xff]
    %v1456 = vld [vmem:[#allocation10 + $0x15c8] sm:$0xff]
    %v1457 = vld [vmem:[#allocation10 + $0x15d0] sm:$0xff]
    %v1458 = vld [vmem:[#allocation10 + $0x15d8] sm:$0xff]
    %v1459 = vld [vmem:[#allocation10 + $0x15e0] sm:$0xff]
    %v1460 = vld [vmem:[#allocation10 + $0x15e8] sm:$0xff]
    %v1461 = vld [vmem:[#allocation10 + $0x15f0] sm:$0xff]
    %v1462 = vld [vmem:[#allocation10 + $0x15f8] sm:$0xff]
    %v1463 = vld [vmem:[#allocation10 + $0x1600] sm:$0xff]
    %v1464 = vld [vmem:[#allocation10 + $0x1608] sm:$0xff]
    %v1465 = vld [vmem:[#allocation10 + $0x1610] sm:$0xff]
    %v1466 = vld [vmem:[#allocation10 + $0x1618] sm:$0xff]
    %v1467 = vld [vmem:[#allocation10 + $0x1620] sm:$0xff]
    %v1468 = vld [vmem:[#allocation10 + $0x1628] sm:$0xff]
    %v1469 = vld [vmem:[#allocation10 + $0x1630] sm:$0xff]
    %v1470 = vld [vmem:[#allocation10 + $0x1638] sm:$0xff]
    %v1471 = vld [vmem:[#allocation10 + $0x1640] sm:$0xff]
    %v1472 = vld [vmem:[#allocation10 + $0x1648] sm:$0xff]
    %v1473 = vld [vmem:[#allocation10 + $0x1650] sm:$0xff]
    %v1474 = vld [vmem:[#allocation10 + $0x1658] sm:$0xff]
    %v1475 = vld [vmem:[#allocation10 + $0x1660] sm:$0xff]
    %v1476 = vld [vmem:[#allocation10 + $0x1668] sm:$0xff]
    %v1477 = vld [vmem:[#allocation10 + $0x1670] sm:$0xff]
    %v1478 = vld [vmem:[#allocation10 + $0x1678] sm:$0xff]
    %v1479 = vld [vmem:[#allocation10 + $0x1680] sm:$0xff]
    %v1480 = vld [vmem:[#allocation10 + $0x1688] sm:$0xff]
    %v1481 = vld [vmem:[#allocation10 + $0x1690] sm:$0xff]
    %v1482 = vld [vmem:[#allocation10 + $0x1698] sm:$0xff]
    %v1483 = vld [vmem:[#allocation10 + $0x16a0] sm:$0xff]
    %v1484 = vld [vmem:[#allocation10 + $0x16a8] sm:$0xff]
    %v1485 = vld [vmem:[#allocation10 + $0x16b0] sm:$0xff]
    %v1486 = vld [vmem:[#allocation10 + $0x16b8] sm:$0xff]
    %v1487 = vld [vmem:[#allocation10 + $0x16c0] sm:$0xff]
    %v1488 = vld [vmem:[#allocation10 + $0x16c8] sm:$0xff]
    %v1489 = vld [vmem:[#allocation10 + $0x16d0] sm:$0xff]
    %v1490 = vld [vmem:[#allocation10 + $0x16d8] sm:$0xff]
    %v1491 = vld [vmem:[#allocation10 + $0x16e0] sm:$0xff]
    %v1492 = vld [vmem:[#allocation10 + $0x16e8] sm:$0xff]
    %v1493 = vld [vmem:[#allocation10 + $0x16f0] sm:$0xff]
    %v1494 = vld [vmem:[#allocation10 + $0x16f8] sm:$0xff]
    %v1495 = vld [vmem:[#allocation10 + $0x1700] sm:$0xff]
    %v1496 = vld [vmem:[#allocation10 + $0x1708] sm:$0xff]
    %v1497 = vld [vmem:[#allocation10 + $0x1710] sm:$0xff]
    %v1498 = vld [vmem:[#allocation10 + $0x1718] sm:$0xff]
    %v1499 = vld [vmem:[#allocation10 + $0x1720] sm:$0xff]
    %v1500 = vld [vmem:[#allocation10 + $0x1728] sm:$0xff]
    %v1501 = vld [vmem:[#allocation10 + $0x1730] sm:$0xff]
    %v1502 = vld [vmem:[#allocation10 + $0x1738] sm:$0xff]
    %v1503 = vld [vmem:[#allocation10 + $0x1740] sm:$0xff]
    %v1504 = vld [vmem:[#allocation10 + $0x1748] sm:$0xff]
    %v1505 = vld [vmem:[#allocation10 + $0x1750] sm:$0xff]
    %v1506 = vld [vmem:[#allocation10 + $0x1758] sm:$0xff]
    %v1507 = vld [vmem:[#allocation10 + $0x1760] sm:$0xff]
    %v1508 = vld [vmem:[#allocation10 + $0x1768] sm:$0xff]
    %v1509 = vld [vmem:[#allocation10 + $0x1770] sm:$0xff]
    %v1510 = vld [vmem:[#allocation10 + $0x1778] sm:$0xff]
    %v1511 = vld [vmem:[#allocation10 + $0x1780] sm:$0xff]
    %v1512 = vld [vmem:[#allocation10 + $0x1788] sm:$0xff]
    %v1513 = vld [vmem:[#allocation10 + $0x1790] sm:$0xff]
    %v1514 = vld [vmem:[#allocation10 + $0x1798] sm:$0xff]
    %v1515 = vld [vmem:[#allocation10 + $0x17a0] sm:$0xff]
    %v1516 = vld [vmem:[#allocation10 + $0x17a8] sm:$0xff]
    %v1517 = vld [vmem:[#allocation10 + $0x17b0] sm:$0xff]
    %v1518 = vld [vmem:[#allocation10 + $0x17b8] sm:$0xff]
    %v1519 = vld [vmem:[#allocation10 + $0x17c0] sm:$0xff]
    %v1520 = vld [vmem:[#allocation10 + $0x17c8] sm:$0xff]
    %v1521 = vld [vmem:[#allocation10 + $0x17d0] sm:$0xff]
    %v1522 = vld [vmem:[#allocation10 + $0x17d8] sm:$0xff]
    %v1523 = vld [vmem:[#allocation10 + $0x17e0] sm:$0xff]
    %v1524 = vld [vmem:[#allocation10 + $0x17e8] sm:$0xff]
    %v1525 = vld [vmem:[#allocation10 + $0x17f0] sm:$0xff]
    %v1526 = vld [vmem:[#allocation10 + $0x17f8] sm:$0xff]
    %v1527 = vld [vmem:[#allocation10 + $0x1800] sm:$0xff]
    %v1528 = vld [vmem:[#allocation10 + $0x1808] sm:$0xff]
    %v1529 = vld [vmem:[#allocation10 + $0x1810] sm:$0xff]
    %v1530 = vld [vmem:[#allocation10 + $0x1818] sm:$0xff]
    %v1531 = vld [vmem:[#allocation10 + $0x1820] sm:$0xff]
    %v1532 = vld [vmem:[#allocation10 + $0x1828] sm:$0xff]
    %v1533 = vld [vmem:[#allocation10 + $0x1830] sm:$0xff]
    %v1534 = vld [vmem:[#allocation10 + $0x1838] sm:$0xff]
    %v1535 = vld [vmem:[#allocation10 + $0x1840] sm:$0xff]
    %v1536 = vld [vmem:[#allocation10 + $0x1848] sm:$0xff]
    %v1537 = vld [vmem:[#allocation10 + $0x1850] sm:$0xff]
    %v1538 = vld [vmem:[#allocation10 + $0x1858] sm:$0xff]
    %v1539 = vld [vmem:[#allocation10 + $0x1860] sm:$0xff]
    %v1540 = vld [vmem:[#allocation10 + $0x1868] sm:$0xff]
    %v1541 = vld [vmem:[#allocation10 + $0x1870] sm:$0xff]
    %v1542 = vld [vmem:[#allocation10 + $0x1878] sm:$0xff]
    %v1543 = vld [vmem:[#allocation10 + $0x1880] sm:$0xff]
    %v1544 = vld [vmem:[#allocation10 + $0x1888] sm:$0xff]
    %v1545 = vld [vmem:[#allocation10 + $0x1890] sm:$0xff]
    %v1546 = vld [vmem:[#allocation10 + $0x1898] sm:$0xff]
    %v1547 = vld [vmem:[#allocation10 + $0x18a0] sm:$0xff]
    %v1548 = vld [vmem:[#allocation10 + $0x18a8] sm:$0xff]
    %v1549 = vld [vmem:[#allocation10 + $0x18b0] sm:$0xff]
    %v1550 = vld [vmem:[#allocation10 + $0x18b8] sm:$0xff]
    %v1551 = vld [vmem:[#allocation10 + $0x18c0] sm:$0xff]
    %v1552 = vld [vmem:[#allocation10 + $0x18c8] sm:$0xff]
    %v1553 = vld [vmem:[#allocation10 + $0x18d0] sm:$0xff]
    %v1554 = vld [vmem:[#allocation10 + $0x18d8] sm:$0xff]
    %v1555 = vld [vmem:[#allocation10 + $0x18e0] sm:$0xff]
    %v1556 = vld [vmem:[#allocation10 + $0x18e8] sm:$0xff]
    %v1557 = vld [vmem:[#allocation10 + $0x18f0] sm:$0xff]
    %v1558 = vld [vmem:[#allocation10 + $0x18f8] sm:$0xff]
    %v1559 = vld [vmem:[#allocation10 + $0x1900] sm:$0xff]
    %v1560 = vld [vmem:[#allocation10 + $0x1908] sm:$0xff]
    %v1561 = vld [vmem:[#allocation10 + $0x1910] sm:$0xff]
    %v1562 = vld [vmem:[#allocation10 + $0x1918] sm:$0xff]
    %v1563 = vld [vmem:[#allocation10 + $0x1920] sm:$0xff]
    %v1564 = vld [vmem:[#allocation10 + $0x1928] sm:$0xff]
    %v1565 = vld [vmem:[#allocation10 + $0x1930] sm:$0xff]
    %v1566 = vld [vmem:[#allocation10 + $0x1938] sm:$0xff]
    %v1567 = vld [vmem:[#allocation10 + $0x1940] sm:$0xff]
    %v1568 = vld [vmem:[#allocation10 + $0x1948] sm:$0xff]
    %v1569 = vld [vmem:[#allocation10 + $0x1950] sm:$0xff]
    %v1570 = vld [vmem:[#allocation10 + $0x1958] sm:$0xff]
    %v1571 = vld [vmem:[#allocation10 + $0x1960] sm:$0xff]
    %v1572 = vld [vmem:[#allocation10 + $0x1968] sm:$0xff]
    %v1573 = vld [vmem:[#allocation10 + $0x1970] sm:$0xff]
    %v1574 = vld [vmem:[#allocation10 + $0x1978] sm:$0xff]
    %v1575 = vld [vmem:[#allocation10 + $0x1980] sm:$0xff]
    %v1576 = vld [vmem:[#allocation10 + $0x1988] sm:$0xff]
    %v1577 = vld [vmem:[#allocation10 + $0x1990] sm:$0xff]
    %v1578 = vld [vmem:[#allocation10 + $0x1998] sm:$0xff]
    %v1579 = vld [vmem:[#allocation10 + $0x19a0] sm:$0xff]
    %v1580 = vld [vmem:[#allocation10 + $0x19a8] sm:$0xff]
    %v1581 = vld [vmem:[#allocation10 + $0x19b0] sm:$0xff]
    %v1582 = vld [vmem:[#allocation10 + $0x19b8] sm:$0xff]
    %v1583 = vld [vmem:[#allocation10 + $0x19c0] sm:$0xff]
    %v1584 = vld [vmem:[#allocation10 + $0x19c8] sm:$0xff]
    %v1585 = vld [vmem:[#allocation10 + $0x19d0] sm:$0xff]
    %v1586 = vld [vmem:[#allocation10 + $0x19d8] sm:$0xff]
    %v1587 = vld [vmem:[#allocation10 + $0x19e0] sm:$0xff]
    %v1588 = vld [vmem:[#allocation10 + $0x19e8] sm:$0xff]
    %v1589 = vld [vmem:[#allocation10 + $0x19f0] sm:$0xff]
    %v1590 = vld [vmem:[#allocation10 + $0x19f8] sm:$0xff]
    %v1591 = vld [vmem:[#allocation10 + $0x1a00] sm:$0xff]
    %v1592 = vld [vmem:[#allocation10 + $0x1a08] sm:$0xff]
    %v1593 = vld [vmem:[#allocation10 + $0x1a10] sm:$0xff]
    %v1594 = vld [vmem:[#allocation10 + $0x1a18] sm:$0xff]
    %v1595 = vld [vmem:[#allocation10 + $0x1a20] sm:$0xff]
    %v1596 = vld [vmem:[#allocation10 + $0x1a28] sm:$0xff]
    %v1597 = vld [vmem:[#allocation10 + $0x1a30] sm:$0xff]
    %v1598 = vld [vmem:[#allocation10 + $0x1a38] sm:$0xff]
    %v1599 = vld [vmem:[#allocation10 + $0x1a40] sm:$0xff]
    %v1600 = vld [vmem:[#allocation10 + $0x1a48] sm:$0xff]
    %v1601 = vld [vmem:[#allocation10 + $0x1a50] sm:$0xff]
    %v1602 = vld [vmem:[#allocation10 + $0x1a58] sm:$0xff]
    %v1603 = vld [vmem:[#allocation10 + $0x1a60] sm:$0xff]
    %v1604 = vld [vmem:[#allocation10 + $0x1a68] sm:$0xff]
    %v1605 = vld [vmem:[#allocation10 + $0x1a70] sm:$0xff]
    %v1606 = vld [vmem:[#allocation10 + $0x1a78] sm:$0xff]
    %v1607 = vld [vmem:[#allocation10 + $0x1a80] sm:$0xff]
    %v1608 = vld [vmem:[#allocation10 + $0x1a88] sm:$0xff]
    %v1609 = vld [vmem:[#allocation10 + $0x1a90] sm:$0xff]
    %v1610 = vld [vmem:[#allocation10 + $0x1a98] sm:$0xff]
    %v1611 = vld [vmem:[#allocation10 + $0x1aa0] sm:$0xff]
    %v1612 = vld [vmem:[#allocation10 + $0x1aa8] sm:$0xff]
    %v1613 = vld [vmem:[#allocation10 + $0x1ab0] sm:$0xff]
    %v1614 = vld [vmem:[#allocation10 + $0x1ab8] sm:$0xff]
    %v1615 = vld [vmem:[#allocation10 + $0x1ac0] sm:$0xff]
    %v1616 = vld [vmem:[#allocation10 + $0x1ac8] sm:$0xff]
    %v1617 = vld [vmem:[#allocation10 + $0x1ad0] sm:$0xff]
    %v1618 = vld [vmem:[#allocation10 + $0x1ad8] sm:$0xff]
    %v1619 = vld [vmem:[#allocation10 + $0x1ae0] sm:$0xff]
    %v1620 = vld [vmem:[#allocation10 + $0x1ae8] sm:$0xff]
    %v1621 = vld [vmem:[#allocation10 + $0x1af0] sm:$0xff]
    %v1622 = vld [vmem:[#allocation10 + $0x1af8] sm:$0xff]
    %v1623 = vld [vmem:[#allocation10 + $0x1b00] sm:$0xff]
    %v1624 = vld [vmem:[#allocation10 + $0x1b08] sm:$0xff]
    %v1625 = vld [vmem:[#allocation10 + $0x1b10] sm:$0xff]
    %v1626 = vld [vmem:[#allocation10 + $0x1b18] sm:$0xff]
    %v1627 = vld [vmem:[#allocation10 + $0x1b20] sm:$0xff]
    %v1628 = vld [vmem:[#allocation10 + $0x1b28] sm:$0xff]
    %v1629 = vld [vmem:[#allocation10 + $0x1b30] sm:$0xff]
    %v1630 = vld [vmem:[#allocation10 + $0x1b38] sm:$0xff]
    %v1631 = vld [vmem:[#allocation10 + $0x1b40] sm:$0xff]
    %v1632 = vld [vmem:[#allocation10 + $0x1b48] sm:$0xff]
    %v1633 = vld [vmem:[#allocation10 + $0x1b50] sm:$0xff]
    %v1634 = vld [vmem:[#allocation10 + $0x1b58] sm:$0xff]
    %v1635 = vld [vmem:[#allocation10 + $0x1b60] sm:$0xff]
    %v1636 = vld [vmem:[#allocation10 + $0x1b68] sm:$0xff]
    %v1637 = vld [vmem:[#allocation10 + $0x1b70] sm:$0xff]
    %v1638 = vld [vmem:[#allocation10 + $0x1b78] sm:$0xff]
    %v1639 = vld [vmem:[#allocation10 + $0x1b80] sm:$0xff]
    %v1640 = vld [vmem:[#allocation10 + $0x1b88] sm:$0xff]
    %v1641 = vld [vmem:[#allocation10 + $0x1b90] sm:$0xff]
    %v1642 = vld [vmem:[#allocation10 + $0x1b98] sm:$0xff]
    %v1643 = vld [vmem:[#allocation10 + $0x1ba0] sm:$0xff]
    %v1644 = vld [vmem:[#allocation10 + $0x1ba8] sm:$0xff]
    %v1645 = vld [vmem:[#allocation10 + $0x1bb0] sm:$0xff]
    %v1646 = vld [vmem:[#allocation10 + $0x1bb8] sm:$0xff]
    %v1647 = vld [vmem:[#allocation10 + $0x1bc0] sm:$0xff]
    %v1648 = vld [vmem:[#allocation10 + $0x1bc8] sm:$0xff]
    %v1649 = vld [vmem:[#allocation10 + $0x1bd0] sm:$0xff]
    %v1650 = vld [vmem:[#allocation10 + $0x1bd8] sm:$0xff]
    %v1651 = vld [vmem:[#allocation10 + $0x1be0] sm:$0xff]
    %v1652 = vld [vmem:[#allocation10 + $0x1be8] sm:$0xff]
    %v1653 = vld [vmem:[#allocation10 + $0x1bf0] sm:$0xff]
    %v1654 = vld [vmem:[#allocation10 + $0x1bf8] sm:$0xff]
    %v1655 = vld [vmem:[#allocation10 + $0x1c00] sm:$0xff]
    %v1656 = vld [vmem:[#allocation10 + $0x1c08] sm:$0xff]
    %v1657 = vld [vmem:[#allocation10 + $0x1c10] sm:$0xff]
    %v1658 = vld [vmem:[#allocation10 + $0x1c18] sm:$0xff]
    %v1659 = vld [vmem:[#allocation10 + $0x1c20] sm:$0xff]
    %v1660 = vld [vmem:[#allocation10 + $0x1c28] sm:$0xff]
    %v1661 = vld [vmem:[#allocation10 + $0x1c30] sm:$0xff]
    %v1662 = vld [vmem:[#allocation10 + $0x1c38] sm:$0xff]
    %v1663 = vld [vmem:[#allocation10 + $0x1c40] sm:$0xff]
    %v1664 = vld [vmem:[#allocation10 + $0x1c48] sm:$0xff]
    %v1665 = vld [vmem:[#allocation10 + $0x1c50] sm:$0xff]
    %v1666 = vld [vmem:[#allocation10 + $0x1c58] sm:$0xff]
    %v1667 = vld [vmem:[#allocation10 + $0x1c60] sm:$0xff]
    %v1668 = vld [vmem:[#allocation10 + $0x1c68] sm:$0xff]
    %v1669 = vld [vmem:[#allocation10 + $0x1c70] sm:$0xff]
    %v1670 = vld [vmem:[#allocation10 + $0x1c78] sm:$0xff]
    %v1671 = vld [vmem:[#allocation10 + $0x1c80] sm:$0xff]
    %v1672 = vld [vmem:[#allocation10 + $0x1c88] sm:$0xff]
    %v1673 = vld [vmem:[#allocation10 + $0x1c90] sm:$0xff]
    %v1674 = vld [vmem:[#allocation10 + $0x1c98] sm:$0xff]
    %v1675 = vld [vmem:[#allocation10 + $0x1ca0] sm:$0xff]
    %v1676 = vld [vmem:[#allocation10 + $0x1ca8] sm:$0xff]
    %v1677 = vld [vmem:[#allocation10 + $0x1cb0] sm:$0xff]
    %v1678 = vld [vmem:[#allocation10 + $0x1cb8] sm:$0xff]
    %v1679 = vld [vmem:[#allocation10 + $0x1cc0] sm:$0xff]
    %v1680 = vld [vmem:[#allocation10 + $0x1cc8] sm:$0xff]
    %v1681 = vld [vmem:[#allocation10 + $0x1cd0] sm:$0xff]
    %v1682 = vld [vmem:[#allocation10 + $0x1cd8] sm:$0xff]
    %v1683 = vld [vmem:[#allocation10 + $0x1ce0] sm:$0xff]
    %v1684 = vld [vmem:[#allocation10 + $0x1ce8] sm:$0xff]
    %v1685 = vld [vmem:[#allocation10 + $0x1cf0] sm:$0xff]
    %v1686 = vld [vmem:[#allocation10 + $0x1cf8] sm:$0xff]
    %v1687 = vld [vmem:[#allocation10 + $0x1d00] sm:$0xff]
    %v1688 = vld [vmem:[#allocation10 + $0x1d08] sm:$0xff]
    %v1689 = vld [vmem:[#allocation10 + $0x1d10] sm:$0xff]
    %v1690 = vld [vmem:[#allocation10 + $0x1d18] sm:$0xff]
    %v1691 = vld [vmem:[#allocation10 + $0x1d20] sm:$0xff]
    %v1692 = vld [vmem:[#allocation10 + $0x1d28] sm:$0xff]
    %v1693 = vld [vmem:[#allocation10 + $0x1d30] sm:$0xff]
    %v1694 = vld [vmem:[#allocation10 + $0x1d38] sm:$0xff]
    %v1695 = vld [vmem:[#allocation10 + $0x1d40] sm:$0xff]
    %v1696 = vld [vmem:[#allocation10 + $0x1d48] sm:$0xff]
    %v1697 = vld [vmem:[#allocation10 + $0x1d50] sm:$0xff]
    %v1698 = vld [vmem:[#allocation10 + $0x1d58] sm:$0xff]
    %v1699 = vld [vmem:[#allocation10 + $0x1d60] sm:$0xff]
    %v1700 = vld [vmem:[#allocation10 + $0x1d68] sm:$0xff]
    %v1701 = vld [vmem:[#allocation10 + $0x1d70] sm:$0xff]
    %v1702 = vld [vmem:[#allocation10 + $0x1d78] sm:$0xff]
    %v1703 = vld [vmem:[#allocation10 + $0x1d80] sm:$0xff]
    %v1704 = vld [vmem:[#allocation10 + $0x1d88] sm:$0xff]
    %v1705 = vld [vmem:[#allocation10 + $0x1d90] sm:$0xff]
    %v1706 = vld [vmem:[#allocation10 + $0x1d98] sm:$0xff]
    %v1707 = vld [vmem:[#allocation10 + $0x1da0] sm:$0xff]
    %v1708 = vld [vmem:[#allocation10 + $0x1da8] sm:$0xff]
    %v1709 = vld [vmem:[#allocation10 + $0x1db0] sm:$0xff]
    %v1710 = vld [vmem:[#allocation10 + $0x1db8] sm:$0xff]
    %v1711 = vld [vmem:[#allocation10 + $0x1dc0] sm:$0xff]
    %v1712 = vld [vmem:[#allocation10 + $0x1dc8] sm:$0xff]
    %v1713 = vld [vmem:[#allocation10 + $0x1dd0] sm:$0xff]
    %v1714 = vld [vmem:[#allocation10 + $0x1dd8] sm:$0xff]
    %v1715 = vld [vmem:[#allocation10 + $0x1de0] sm:$0xff]
    %v1716 = vld [vmem:[#allocation10 + $0x1de8] sm:$0xff]
    %v1717 = vld [vmem:[#allocation10 + $0x1df0] sm:$0xff]
    %v1718 = vld [vmem:[#allocation10 + $0x1df8] sm:$0xff]
    %v1719 = vld [vmem:[#allocation10 + $0x1e00] sm:$0xff]
    %v1720 = vld [vmem:[#allocation10 + $0x1e08] sm:$0xff]
    %v1721 = vld [vmem:[#allocation10 + $0x1e10] sm:$0xff]
    %v1722 = vld [vmem:[#allocation10 + $0x1e18] sm:$0xff]
    %v1723 = vld [vmem:[#allocation10 + $0x1e20] sm:$0xff]
    %v1724 = vld [vmem:[#allocation10 + $0x1e28] sm:$0xff]
    %v1725 = vld [vmem:[#allocation10 + $0x1e30] sm:$0xff]
    %v1726 = vld [vmem:[#allocation10 + $0x1e38] sm:$0xff]
    %v1727 = vld [vmem:[#allocation10 + $0x1e40] sm:$0xff]
    %v1728 = vld [vmem:[#allocation10 + $0x1e48] sm:$0xff]
    %v1729 = vld [vmem:[#allocation10 + $0x1e50] sm:$0xff]
    %v1730 = vld [vmem:[#allocation10 + $0x1e58] sm:$0xff]
    %v1731 = vld [vmem:[#allocation10 + $0x1e60] sm:$0xff]
    %v1732 = vld [vmem:[#allocation10 + $0x1e68] sm:$0xff]
    %v1733 = vld [vmem:[#allocation10 + $0x1e70] sm:$0xff]
    %v1734 = vld [vmem:[#allocation10 + $0x1e78] sm:$0xff]
    %v1735 = vld [vmem:[#allocation10 + $0x1e80] sm:$0xff]
    %v1736 = vld [vmem:[#allocation10 + $0x1e88] sm:$0xff]
    %v1737 = vld [vmem:[#allocation10 + $0x1e90] sm:$0xff]
    %v1738 = vld [vmem:[#allocation10 + $0x1e98] sm:$0xff]
    %v1739 = vld [vmem:[#allocation10 + $0x1ea0] sm:$0xff]
    %v1740 = vld [vmem:[#allocation10 + $0x1ea8] sm:$0xff]
    %v1741 = vld [vmem:[#allocation10 + $0x1eb0] sm:$0xff]
    %v1742 = vld [vmem:[#allocation10 + $0x1eb8] sm:$0xff]
    %v1743 = vld [vmem:[#allocation10 + $0x1ec0] sm:$0xff]
    %v1744 = vld [vmem:[#allocation10 + $0x1ec8] sm:$0xff]
    %v1745 = vld [vmem:[#allocation10 + $0x1ed0] sm:$0xff]
    %v1746 = vld [vmem:[#allocation10 + $0x1ed8] sm:$0xff]
    %v1747 = vld [vmem:[#allocation10 + $0x1ee0] sm:$0xff]
    %v1748 = vld [vmem:[#allocation10 + $0x1ee8] sm:$0xff]
    %v1749 = vld [vmem:[#allocation10 + $0x1ef0] sm:$0xff]
    %v1750 = vld [vmem:[#allocation10 + $0x1ef8] sm:$0xff]
    %v1751 = vld [vmem:[#allocation10 + $0x1f00] sm:$0xff]
    %v1752 = vld [vmem:[#allocation10 + $0x1f08] sm:$0xff]
    %v1753 = vld [vmem:[#allocation10 + $0x1f10] sm:$0xff]
    %v1754 = vld [vmem:[#allocation10 + $0x1f18] sm:$0xff]
    %v1755 = vld [vmem:[#allocation10 + $0x1f20] sm:$0xff]
    %v1756 = vld [vmem:[#allocation10 + $0x1f28] sm:$0xff]
    %v1757 = vld [vmem:[#allocation10 + $0x1f30] sm:$0xff]
    %v1758 = vld [vmem:[#allocation10 + $0x1f38] sm:$0xff]
    %v1759 = vld [vmem:[#allocation10 + $0x1f40] sm:$0xff]
    %v1760 = vld [vmem:[#allocation10 + $0x1f48] sm:$0xff]
    %v1761 = vld [vmem:[#allocation10 + $0x1f50] sm:$0xff]
    %v1762 = vld [vmem:[#allocation10 + $0x1f58] sm:$0xff]
    %v1763 = vld [vmem:[#allocation10 + $0x1f60] sm:$0xff]
    %v1764 = vld [vmem:[#allocation10 + $0x1f68] sm:$0xff]
    %v1765 = vld [vmem:[#allocation10 + $0x1f70] sm:$0xff]
    %v1766 = vld [vmem:[#allocation10 + $0x1f78] sm:$0xff]
    %v1767 = vld [vmem:[#allocation10 + $0x1f80] sm:$0xff]
    %v1768 = vld [vmem:[#allocation10 + $0x1f88] sm:$0xff]
    %v1769 = vld [vmem:[#allocation10 + $0x1f90] sm:$0xff]
    %v1770 = vld [vmem:[#allocation10 + $0x1f98] sm:$0xff]
    %v1771 = vld [vmem:[#allocation10 + $0x1fa0] sm:$0xff]
    %v1772 = vld [vmem:[#allocation10 + $0x1fa8] sm:$0xff]
    %v1773 = vld [vmem:[#allocation10 + $0x1fb0] sm:$0xff]
    %v1774 = vld [vmem:[#allocation10 + $0x1fb8] sm:$0xff]
    %v1775 = vld [vmem:[#allocation10 + $0x1fc0] sm:$0xff]
    %v1776 = vld [vmem:[#allocation10 + $0x1fc8] sm:$0xff]
    %v1777 = vld [vmem:[#allocation10 + $0x1fd0] sm:$0xff]
    %v1778 = vld [vmem:[#allocation10 + $0x1fd8] sm:$0xff]
    %v1779 = vld [vmem:[#allocation10 + $0x1fe0] sm:$0xff]
    %v1780 = vld [vmem:[#allocation10 + $0x1fe8] sm:$0xff]
    %v1781 = vld [vmem:[#allocation10 + $0x1ff0] sm:$0xff]
    %v1782 = vld [vmem:[#allocation10 + $0x1ff8] sm:$0xff]
    %v1799 = vcombine.high %v743, %v743
    %v1801 = vunpack.c.l.s4 1983009808
    %v1802 = vunpack.c.0.s8 %v1801
    %v1803 = vlaneseq
    %v1804 = vshrl.u32 %v1803, 7
    %v1805 = vsub.s32 %v1802, %v1804
    %v1806 = vrot.slane %v743, %v1805
    %v1808 = vunpack.c.l.s4 1983009808
    %v1809 = vunpack.c.0.s8 %v1808
    %v1810 = vlaneseq
    %v1811 = vshrl.u32 %v1810, 7
    %v1812 = vsub.s32 %v1809, %v1811
    %v1813 = vrot.slane %v1799, %v1812
    %v1814 = vcombine.high %v1806, %v1806
    %v1815 = vcombine.high %v1813, %v1813
    %v1816 = vcombine.high %v744, %v744
    %v1818 = vunpack.c.l.s4 1983009808
    %v1819 = vunpack.c.0.s8 %v1818
    %v1820 = vlaneseq
    %v1821 = vshrl.u32 %v1820, 7
    %v1822 = vsub.s32 %v1819, %v1821
    %v1823 = vrot.slane %v744, %v1822
    %v1825 = vunpack.c.l.s4 1983009808
    %v1826 = vunpack.c.0.s8 %v1825
    %v1827 = vlaneseq
    %v1828 = vshrl.u32 %v1827, 7
    %v1829 = vsub.s32 %v1826, %v1828
    %v1830 = vrot.slane %v1816, %v1829
    %v1831 = vcombine.high %v1823, %v1823
    %v1832 = vcombine.high %v1830, %v1830
    %v1833 = vcombine.high %v745, %v745
    %v1835 = vunpack.c.l.s4 1983009808
    %v1836 = vunpack.c.0.s8 %v1835
    %v1837 = vlaneseq
    %v1838 = vshrl.u32 %v1837, 7
    %v1839 = vsub.s32 %v1836, %v1838
    %v1840 = vrot.slane %v745, %v1839
    %v1842 = vunpack.c.l.s4 1983009808
    %v1843 = vunpack.c.0.s8 %v1842
    %v1844 = vlaneseq
    %v1845 = vshrl.u32 %v1844, 7
    %v1846 = vsub.s32 %v1843, %v1845
    %v1847 = vrot.slane %v1833, %v1846
    %v1848 = vcombine.high %v1840, %v1840
    %v1849 = vcombine.high %v1847, %v1847
    %v1850 = vcombine.high %v746, %v746
    %v1852 = vunpack.c.l.s4 1983009808
    %v1853 = vunpack.c.0.s8 %v1852
    %v1854 = vlaneseq
    %v1855 = vshrl.u32 %v1854, 7
    %v1856 = vsub.s32 %v1853, %v1855
    %v1857 = vrot.slane %v746, %v1856
    %v1859 = vunpack.c.l.s4 1983009808
    %v1860 = vunpack.c.0.s8 %v1859
    %v1861 = vlaneseq
    %v1862 = vshrl.u32 %v1861, 7
    %v1863 = vsub.s32 %v1860, %v1862
    %v1864 = vrot.slane %v1850, %v1863
    %v1865 = vcombine.high %v1857, %v1857
    %v1866 = vcombine.high %v1864, %v1864
    %v1867 = vcombine.high %v747, %v747
    %v1869 = vunpack.c.l.s4 1983009808
    %v1870 = vunpack.c.0.s8 %v1869
    %v1871 = vlaneseq
    %v1872 = vshrl.u32 %v1871, 7
    %v1873 = vsub.s32 %v1870, %v1872
    %v1874 = vrot.slane %v747, %v1873
    %v1876 = vunpack.c.l.s4 1983009808
    %v1877 = vunpack.c.0.s8 %v1876
    %v1878 = vlaneseq
    %v1879 = vshrl.u32 %v1878, 7
    %v1880 = vsub.s32 %v1877, %v1879
    %v1881 = vrot.slane %v1867, %v1880
    %v1882 = vcombine.high %v1874, %v1874
    %v1883 = vcombine.high %v1881, %v1881
    %v1884 = vcombine.high %v748, %v748
    %v1886 = vunpack.c.l.s4 1983009808
    %v1887 = vunpack.c.0.s8 %v1886
    %v1888 = vlaneseq
    %v1889 = vshrl.u32 %v1888, 7
    %v1890 = vsub.s32 %v1887, %v1889
    %v1891 = vrot.slane %v748, %v1890
    %v1893 = vunpack.c.l.s4 1983009808
    %v1894 = vunpack.c.0.s8 %v1893
    %v1895 = vlaneseq
    %v1896 = vshrl.u32 %v1895, 7
    %v1897 = vsub.s32 %v1894, %v1896
    %v1898 = vrot.slane %v1884, %v1897
    %v1899 = vcombine.high %v1891, %v1891
    %v1900 = vcombine.high %v1898, %v1898
    %v1901 = vcombine.high %v749, %v749
    %v1903 = vunpack.c.l.s4 1983009808
    %v1904 = vunpack.c.0.s8 %v1903
    %v1905 = vlaneseq
    %v1906 = vshrl.u32 %v1905, 7
    %v1907 = vsub.s32 %v1904, %v1906
    %v1908 = vrot.slane %v749, %v1907
    %v1910 = vunpack.c.l.s4 1983009808
    %v1911 = vunpack.c.0.s8 %v1910
    %v1912 = vlaneseq
    %v1913 = vshrl.u32 %v1912, 7
    %v1914 = vsub.s32 %v1911, %v1913
    %v1915 = vrot.slane %v1901, %v1914
    %v1916 = vcombine.high %v1908, %v1908
    %v1917 = vcombine.high %v1915, %v1915
    %v1918 = vcombine.high %v750, %v750
    %v1920 = vunpack.c.l.s4 1983009808
    %v1921 = vunpack.c.0.s8 %v1920
    %v1922 = vlaneseq
    %v1923 = vshrl.u32 %v1922, 7
    %v1924 = vsub.s32 %v1921, %v1923
    %v1925 = vrot.slane %v750, %v1924
    %v1927 = vunpack.c.l.s4 1983009808
    %v1928 = vunpack.c.0.s8 %v1927
    %v1929 = vlaneseq
    %v1930 = vshrl.u32 %v1929, 7
    %v1931 = vsub.s32 %v1928, %v1930
    %v1932 = vrot.slane %v1918, %v1931
    %v1933 = vcombine.high %v1925, %v1925
    %v1934 = vcombine.high %v1932, %v1932
    %v1935 = vcombine.high %v751, %v751
    %v1937 = vunpack.c.l.s4 1983009808
    %v1938 = vunpack.c.0.s8 %v1937
    %v1939 = vlaneseq
    %v1940 = vshrl.u32 %v1939, 7
    %v1941 = vsub.s32 %v1938, %v1940
    %v1942 = vrot.slane %v751, %v1941
    %v1944 = vunpack.c.l.s4 1983009808
    %v1945 = vunpack.c.0.s8 %v1944
    %v1946 = vlaneseq
    %v1947 = vshrl.u32 %v1946, 7
    %v1948 = vsub.s32 %v1945, %v1947
    %v1949 = vrot.slane %v1935, %v1948
    %v1950 = vcombine.high %v1942, %v1942
    %v1951 = vcombine.high %v1949, %v1949
    %v1952 = vcombine.high %v752, %v752
    %v1954 = vunpack.c.l.s4 1983009808
    %v1955 = vunpack.c.0.s8 %v1954
    %v1956 = vlaneseq
    %v1957 = vshrl.u32 %v1956, 7
    %v1958 = vsub.s32 %v1955, %v1957
    %v1959 = vrot.slane %v752, %v1958
    %v1961 = vunpack.c.l.s4 1983009808
    %v1962 = vunpack.c.0.s8 %v1961
    %v1963 = vlaneseq
    %v1964 = vshrl.u32 %v1963, 7
    %v1965 = vsub.s32 %v1962, %v1964
    %v1966 = vrot.slane %v1952, %v1965
    %v1967 = vcombine.high %v1959, %v1959
    %v1968 = vcombine.high %v1966, %v1966
    %v1969 = vcombine.high %v753, %v753
    %v1971 = vunpack.c.l.s4 1983009808
    %v1972 = vunpack.c.0.s8 %v1971
    %v1973 = vlaneseq
    %v1974 = vshrl.u32 %v1973, 7
    %v1975 = vsub.s32 %v1972, %v1974
    %v1976 = vrot.slane %v753, %v1975
    %v1978 = vunpack.c.l.s4 1983009808
    %v1979 = vunpack.c.0.s8 %v1978
    %v1980 = vlaneseq
    %v1981 = vshrl.u32 %v1980, 7
    %v1982 = vsub.s32 %v1979, %v1981
    %v1983 = vrot.slane %v1969, %v1982
    %v1984 = vcombine.high %v1976, %v1976
    %v1985 = vcombine.high %v1983, %v1983
    %v1986 = vcombine.high %v754, %v754
    %v1988 = vunpack.c.l.s4 1983009808
    %v1989 = vunpack.c.0.s8 %v1988
    %v1990 = vlaneseq
    %v1991 = vshrl.u32 %v1990, 7
    %v1992 = vsub.s32 %v1989, %v1991
    %v1993 = vrot.slane %v754, %v1992
    %v1995 = vunpack.c.l.s4 1983009808
    %v1996 = vunpack.c.0.s8 %v1995
    %v1997 = vlaneseq
    %v1998 = vshrl.u32 %v1997, 7
    %v1999 = vsub.s32 %v1996, %v1998
    %v2000 = vrot.slane %v1986, %v1999
    %v2001 = vcombine.high %v1993, %v1993
    %v2002 = vcombine.high %v2000, %v2000
    %v2003 = vcombine.high %v755, %v755
    %v2005 = vunpack.c.l.s4 1983009808
    %v2006 = vunpack.c.0.s8 %v2005
    %v2007 = vlaneseq
    %v2008 = vshrl.u32 %v2007, 7
    %v2009 = vsub.s32 %v2006, %v2008
    %v2010 = vrot.slane %v755, %v2009
    %v2012 = vunpack.c.l.s4 1983009808
    %v2013 = vunpack.c.0.s8 %v2012
    %v2014 = vlaneseq
    %v2015 = vshrl.u32 %v2014, 7
    %v2016 = vsub.s32 %v2013, %v2015
    %v2017 = vrot.slane %v2003, %v2016
    %v2018 = vcombine.high %v2010, %v2010
    %v2019 = vcombine.high %v2017, %v2017
    %v2020 = vcombine.high %v756, %v756
    %v2022 = vunpack.c.l.s4 1983009808
    %v2023 = vunpack.c.0.s8 %v2022
    %v2024 = vlaneseq
    %v2025 = vshrl.u32 %v2024, 7
    %v2026 = vsub.s32 %v2023, %v2025
    %v2027 = vrot.slane %v756, %v2026
    %v2029 = vunpack.c.l.s4 1983009808
    %v2030 = vunpack.c.0.s8 %v2029
    %v2031 = vlaneseq
    %v2032 = vshrl.u32 %v2031, 7
    %v2033 = vsub.s32 %v2030, %v2032
    %v2034 = vrot.slane %v2020, %v2033
    %v2035 = vcombine.high %v2027, %v2027
    %v2036 = vcombine.high %v2034, %v2034
    %v2037 = vcombine.high %v757, %v757
    %v2039 = vunpack.c.l.s4 1983009808
    %v2040 = vunpack.c.0.s8 %v2039
    %v2041 = vlaneseq
    %v2042 = vshrl.u32 %v2041, 7
    %v2043 = vsub.s32 %v2040, %v2042
    %v2044 = vrot.slane %v757, %v2043
    %v2046 = vunpack.c.l.s4 1983009808
    %v2047 = vunpack.c.0.s8 %v2046
    %v2048 = vlaneseq
    %v2049 = vshrl.u32 %v2048, 7
    %v2050 = vsub.s32 %v2047, %v2049
    %v2051 = vrot.slane %v2037, %v2050
    %v2052 = vcombine.high %v2044, %v2044
    %v2053 = vcombine.high %v2051, %v2051
    %v2054 = vcombine.high %v758, %v758
    %v2056 = vunpack.c.l.s4 1983009808
    %v2057 = vunpack.c.0.s8 %v2056
    %v2058 = vlaneseq
    %v2059 = vshrl.u32 %v2058, 7
    %v2060 = vsub.s32 %v2057, %v2059
    %v2061 = vrot.slane %v758, %v2060
    %v2063 = vunpack.c.l.s4 1983009808
    %v2064 = vunpack.c.0.s8 %v2063
    %v2065 = vlaneseq
    %v2066 = vshrl.u32 %v2065, 7
    %v2067 = vsub.s32 %v2064, %v2066
    %v2068 = vrot.slane %v2054, %v2067
    %v2069 = vcombine.high %v2061, %v2061
    %v2070 = vcombine.high %v2068, %v2068
    %2135 = vmatprep.subr.mxu0 0.0
    %2136 = vmatpush1.msra.mxu0 %v759
    %2137 = vmatprep.subr.mxu0 0.0
    %2138 = vmatpush1.msra.mxu0 %v760
    %2139 = vmatprep.subr.mxu0 0.0
    %2140 = vmatpush1.msra.mxu0 %v761
    %2141 = vmatprep.subr.mxu0 0.0
    %2142 = vmatpush1.msra.mxu0 %v762
    %2143 = vmatprep.subr.mxu0 0.0
    %2144 = vmatpush1.msra.mxu0 %v763
    %2145 = vmatprep.subr.mxu0 0.0
    %2146 = vmatpush1.msra.mxu0 %v764
    %2147 = vmatprep.subr.mxu0 0.0
    %2148 = vmatpush1.msra.mxu0 %v765
    %2149 = vmatprep.subr.mxu0 0.0
    %2150 = vmatpush1.msra.mxu0 %v766
    %2151 = vmatprep.subr.mxu0 0.0
    %2152 = vmatpush1.msra.mxu0 %v767
    %2153 = vmatprep.subr.mxu0 0.0
    %2154 = vmatpush1.msra.mxu0 %v768
    %2155 = vmatprep.subr.mxu0 0.0
    %2156 = vmatpush1.msra.mxu0 %v769
    %2157 = vmatprep.subr.mxu0 0.0
    %2158 = vmatpush1.msra.mxu0 %v770
    %2159 = vmatprep.subr.mxu0 0.0
    %2160 = vmatpush1.msra.mxu0 %v771
    %2161 = vmatprep.subr.mxu0 0.0
    %2162 = vmatpush1.msra.mxu0 %v772
    %2163 = vmatprep.subr.mxu0 0.0
    %2164 = vmatpush1.msra.mxu0 %v773
    %2165 = vmatprep.subr.mxu0 0.0
    %2166 = vmatpush1.msra.mxu0 %v774
    %2167 = vmatprep.subr.mxu0 0.0
    %2168 = vmatpush1.msra.mxu0 %v775
    %2169 = vmatprep.subr.mxu0 0.0
    %2170 = vmatpush1.msra.mxu0 %v776
    %2171 = vmatprep.subr.mxu0 0.0
    %2172 = vmatpush1.msra.mxu0 %v777
    %2173 = vmatprep.subr.mxu0 0.0
    %2174 = vmatpush1.msra.mxu0 %v778
    %2175 = vmatprep.subr.mxu0 0.0
    %2176 = vmatpush1.msra.mxu0 %v779
    %2177 = vmatprep.subr.mxu0 0.0
    %2178 = vmatpush1.msra.mxu0 %v780
    %2179 = vmatprep.subr.mxu0 0.0
    %2180 = vmatpush1.msra.mxu0 %v781
    %2181 = vmatprep.subr.mxu0 0.0
    %2182 = vmatpush1.msra.mxu0 %v782
    %2183 = vmatprep.subr.mxu0 0.0
    %2184 = vmatpush1.msra.mxu0 %v783
    %2185 = vmatprep.subr.mxu0 0.0
    %2186 = vmatpush1.msra.mxu0 %v784
    %2187 = vmatprep.subr.mxu0 0.0
    %2188 = vmatpush1.msra.mxu0 %v785
    %2189 = vmatprep.subr.mxu0 0.0
    %2190 = vmatpush1.msra.mxu0 %v786
    %2191 = vmatprep.subr.mxu0 0.0
    %2192 = vmatpush1.msra.mxu0 %v787
    %2193 = vmatprep.subr.mxu0 0.0
    %2194 = vmatpush1.msra.mxu0 %v788
    %2195 = vmatprep.subr.mxu0 0.0
    %2196 = vmatpush1.msra.mxu0 %v789
    %2197 = vmatprep.subr.mxu0 0.0
    %2198 = vmatpush1.msra.mxu0 %v790
    %2199 = vmatprep.mubr.f32.mxu0 %v1814
    %2200 = vmatmul.mubr.f32.gmra.mrb[0].mxu0 %v1806
    %v2201 = vpop.f32.mrb[0].mxu0
    %v2202 = vadd.f32 0.0, %v2201
    %v2203 = vpop.f32.mrb[0].mxu0
    %2204 = vdwg.mxu0
    %2205 = vmatprep.subr.mxu0 0.0
    %2206 = vmatpush1.msra.mxu0 %v791
    %2207 = vmatprep.subr.mxu0 0.0
    %2208 = vmatpush1.msra.mxu0 %v792
    %2209 = vmatprep.subr.mxu0 0.0
    %2210 = vmatpush1.msra.mxu0 %v793
    %2211 = vmatprep.subr.mxu0 0.0
    %2212 = vmatpush1.msra.mxu0 %v794
    %2213 = vmatprep.subr.mxu0 0.0
    %2214 = vmatpush1.msra.mxu0 %v795
    %2215 = vmatprep.subr.mxu0 0.0
    %2216 = vmatpush1.msra.mxu0 %v796
    %2217 = vmatprep.subr.mxu0 0.0
    %2218 = vmatpush1.msra.mxu0 %v797
    %2219 = vmatprep.subr.mxu0 0.0
    %2220 = vmatpush1.msra.mxu0 %v798
    %2221 = vmatprep.subr.mxu0 0.0
    %2222 = vmatpush1.msra.mxu0 %v799
    %2223 = vmatprep.subr.mxu0 0.0
    %2224 = vmatpush1.msra.mxu0 %v800
    %2225 = vmatprep.subr.mxu0 0.0
    %2226 = vmatpush1.msra.mxu0 %v801
    %2227 = vmatprep.subr.mxu0 0.0
    %2228 = vmatpush1.msra.mxu0 %v802
    %2229 = vmatprep.subr.mxu0 0.0
    %2230 = vmatpush1.msra.mxu0 %v803
    %2231 = vmatprep.subr.mxu0 0.0
    %2232 = vmatpush1.msra.mxu0 %v804
    %2233 = vmatprep.subr.mxu0 0.0
    %2234 = vmatpush1.msra.mxu0 %v805
    %2235 = vmatprep.subr.mxu0 0.0
    %2236 = vmatpush1.msra.mxu0 %v806
    %2237 = vmatprep.subr.mxu0 0.0
    %2238 = vmatpush1.msra.mxu0 %v807
    %2239 = vmatprep.subr.mxu0 0.0
    %2240 = vmatpush1.msra.mxu0 %v808
    %2241 = vmatprep.subr.mxu0 0.0
    %2242 = vmatpush1.msra.mxu0 %v809
    %2243 = vmatprep.subr.mxu0 0.0
    %2244 = vmatpush1.msra.mxu0 %v810
    %2245 = vmatprep.subr.mxu0 0.0
    %2246 = vmatpush1.msra.mxu0 %v811
    %2247 = vmatprep.subr.mxu0 0.0
    %2248 = vmatpush1.msra.mxu0 %v812
    %2249 = vmatprep.subr.mxu0 0.0
    %2250 = vmatpush1.msra.mxu0 %v813
    %2251 = vmatprep.subr.mxu0 0.0
    %2252 = vmatpush1.msra.mxu0 %v814
    %2253 = vmatprep.subr.mxu0 0.0
    %2254 = vmatpush1.msra.mxu0 %v815
    %2255 = vmatprep.subr.mxu0 0.0
    %2256 = vmatpush1.msra.mxu0 %v816
    %2257 = vmatprep.subr.mxu0 0.0
    %2258 = vmatpush1.msra.mxu0 %v817
    %2259 = vmatprep.subr.mxu0 0.0
    %2260 = vmatpush1.msra.mxu0 %v818
    %2261 = vmatprep.subr.mxu0 0.0
    %2262 = vmatpush1.msra.mxu0 %v819
    %2263 = vmatprep.subr.mxu0 0.0
    %2264 = vmatpush1.msra.mxu0 %v820
    %2265 = vmatprep.subr.mxu0 0.0
    %2266 = vmatpush1.msra.mxu0 %v821
    %2267 = vmatprep.subr.mxu0 0.0
    %2268 = vmatpush1.msra.mxu0 %v822
    %2269 = vmatprep.mubr.f32.mxu0 %v1815
    %2270 = vmatmul.mubr.f32.gmra.mrb[0].mxu0 %v1813
    %v2271 = vpop.f32.mrb[0].mxu0
    %v2272 = vadd.f32 %v2202, %v2271
    %v2273 = vpop.f32.mrb[0].mxu0
    %2274 = vdwg.mxu0
    %2275 = vmatprep.subr.mxu0 0.0
    %2276 = vmatpush1.msra.mxu0 %v823
    %2277 = vmatprep.subr.mxu0 0.0
    %2278 = vmatpush1.msra.mxu0 %v824
    %2279 = vmatprep.subr.mxu0 0.0
    %2280 = vmatpush1.msra.mxu0 %v825
    %2281 = vmatprep.subr.mxu0 0.0
    %2282 = vmatpush1.msra.mxu0 %v826
    %2283 = vmatprep.subr.mxu0 0.0
    %2284 = vmatpush1.msra.mxu0 %v827
    %2285 = vmatprep.subr.mxu0 0.0
    %2286 = vmatpush1.msra.mxu0 %v828
    %2287 = vmatprep.subr.mxu0 0.0
    %2288 = vmatpush1.msra.mxu0 %v829
    %2289 = vmatprep.subr.mxu0 0.0
    %2290 = vmatpush1.msra.mxu0 %v830
    %2291 = vmatprep.subr.mxu0 0.0
    %2292 = vmatpush1.msra.mxu0 %v831
    %2293 = vmatprep.subr.mxu0 0.0
    %2294 = vmatpush1.msra.mxu0 %v832
    %2295 = vmatprep.subr.mxu0 0.0
    %2296 = vmatpush1.msra.mxu0 %v833
    %2297 = vmatprep.subr.mxu0 0.0
    %2298 = vmatpush1.msra.mxu0 %v834
    %2299 = vmatprep.subr.mxu0 0.0
    %2300 = vmatpush1.msra.mxu0 %v835
    %2301 = vmatprep.subr.mxu0 0.0
    %2302 = vmatpush1.msra.mxu0 %v836
    %2303 = vmatprep.subr.mxu0 0.0
    %2304 = vmatpush1.msra.mxu0 %v837
    %2305 = vmatprep.subr.mxu0 0.0
    %2306 = vmatpush1.msra.mxu0 %v838
    %2307 = vmatprep.subr.mxu0 0.0
    %2308 = vmatpush1.msra.mxu0 %v839
    %2309 = vmatprep.subr.mxu0 0.0
    %2310 = vmatpush1.msra.mxu0 %v840
    %2311 = vmatprep.subr.mxu0 0.0
    %2312 = vmatpush1.msra.mxu0 %v841
    %2313 = vmatprep.subr.mxu0 0.0
    %2314 = vmatpush1.msra.mxu0 %v842
    %2315 = vmatprep.subr.mxu0 0.0
    %2316 = vmatpush1.msra.mxu0 %v843
    %2317 = vmatprep.subr.mxu0 0.0
    %2318 = vmatpush1.msra.mxu0 %v844
    %2319 = vmatprep.subr.mxu0 0.0
    %2320 = vmatpush1.msra.mxu0 %v845
    %2321 = vmatprep.subr.mxu0 0.0
    %2322 = vmatpush1.msra.mxu0 %v846
    %2323 = vmatprep.subr.mxu0 0.0
    %2324 = vmatpush1.msra.mxu0 %v847
    %2325 = vmatprep.subr.mxu0 0.0
    %2326 = vmatpush1.msra.mxu0 %v848
    %2327 = vmatprep.subr.mxu0 0.0
    %2328 = vmatpush1.msra.mxu0 %v849
    %2329 = vmatprep.subr.mxu0 0.0
    %2330 = vmatpush1.msra.mxu0 %v850
    %2331 = vmatprep.subr.mxu0 0.0
    %2332 = vmatpush1.msra.mxu0 %v851
    %2333 = vmatprep.subr.mxu0 0.0
    %2334 = vmatpush1.msra.mxu0 %v852
    %2335 = vmatprep.subr.mxu0 0.0
    %2336 = vmatpush1.msra.mxu0 %v853
    %2337 = vmatprep.subr.mxu0 0.0
    %2338 = vmatpush1.msra.mxu0 %v854
    %2339 = vmatprep.mubr.f32.mxu0 %v1831
    %2340 = vmatmul.mubr.f32.gmra.mrb[0].mxu0 %v1823
    %v2341 = vpop.f32.mrb[0].mxu0
    %v2342 = vadd.f32 %v2272, %v2341
    %v2343 = vpop.f32.mrb[0].mxu0
    %2344 = vdwg.mxu0
    %2345 = vmatprep.subr.mxu0 0.0
    %2346 = vmatpush1.msra.mxu0 %v855
    %2347 = vmatprep.subr.mxu0 0.0
    %2348 = vmatpush1.msra.mxu0 %v856
    %2349 = vmatprep.subr.mxu0 0.0
    %2350 = vmatpush1.msra.mxu0 %v857
    %2351 = vmatprep.subr.mxu0 0.0
    %2352 = vmatpush1.msra.mxu0 %v858
    %2353 = vmatprep.subr.mxu0 0.0
    %2354 = vmatpush1.msra.mxu0 %v859
    %2355 = vmatprep.subr.mxu0 0.0
    %2356 = vmatpush1.msra.mxu0 %v860
    %2357 = vmatprep.subr.mxu0 0.0
    %2358 = vmatpush1.msra.mxu0 %v861
    %2359 = vmatprep.subr.mxu0 0.0
    %2360 = vmatpush1.msra.mxu0 %v862
    %2361 = vmatprep.subr.mxu0 0.0
    %2362 = vmatpush1.msra.mxu0 %v863
    %2363 = vmatprep.subr.mxu0 0.0
    %2364 = vmatpush1.msra.mxu0 %v864
    %2365 = vmatprep.subr.mxu0 0.0
    %2366 = vmatpush1.msra.mxu0 %v865
    %2367 = vmatprep.subr.mxu0 0.0
    %2368 = vmatpush1.msra.mxu0 %v866
    %2369 = vmatprep.subr.mxu0 0.0
    %2370 = vmatpush1.msra.mxu0 %v867
    %2371 = vmatprep.subr.mxu0 0.0
    %2372 = vmatpush1.msra.mxu0 %v868
    %2373 = vmatprep.subr.mxu0 0.0
    %2374 = vmatpush1.msra.mxu0 %v869
    %2375 = vmatprep.subr.mxu0 0.0
    %2376 = vmatpush1.msra.mxu0 %v870
    %2377 = vmatprep.subr.mxu0 0.0
    %2378 = vmatpush1.msra.mxu0 %v871
    %2379 = vmatprep.subr.mxu0 0.0
    %2380 = vmatpush1.msra.mxu0 %v872
    %2381 = vmatprep.subr.mxu0 0.0
    %2382 = vmatpush1.msra.mxu0 %v873
    %2383 = vmatprep.subr.mxu0 0.0
    %2384 = vmatpush1.msra.mxu0 %v874
    %2385 = vmatprep.subr.mxu0 0.0
    %2386 = vmatpush1.msra.mxu0 %v875
    %2387 = vmatprep.subr.mxu0 0.0
    %2388 = vmatpush1.msra.mxu0 %v876
    %2389 = vmatprep.subr.mxu0 0.0
    %2390 = vmatpush1.msra.mxu0 %v877
    %2391 = vmatprep.subr.mxu0 0.0
    %2392 = vmatpush1.msra.mxu0 %v878
    %2393 = vmatprep.subr.mxu0 0.0
    %2394 = vmatpush1.msra.mxu0 %v879
    %2395 = vmatprep.subr.mxu0 0.0
    %2396 = vmatpush1.msra.mxu0 %v880
    %2397 = vmatprep.subr.mxu0 0.0
    %2398 = vmatpush1.msra.mxu0 %v881
    %2399 = vmatprep.subr.mxu0 0.0
    %2400 = vmatpush1.msra.mxu0 %v882
    %2401 = vmatprep.subr.mxu0 0.0
    %2402 = vmatpush1.msra.mxu0 %v883
    %2403 = vmatprep.subr.mxu0 0.0
    %2404 = vmatpush1.msra.mxu0 %v884
    %2405 = vmatprep.subr.mxu0 0.0
    %2406 = vmatpush1.msra.mxu0 %v885
    %2407 = vmatprep.subr.mxu0 0.0
    %2408 = vmatpush1.msra.mxu0 %v886
    %2409 = vmatprep.mubr.f32.mxu0 %v1832
    %2410 = vmatmul.mubr.f32.gmra.mrb[0].mxu0 %v1830
    %v2411 = vpop.f32.mrb[0].mxu0
    %v2412 = vadd.f32 %v2342, %v2411
    %v2413 = vpop.f32.mrb[0].mxu0
    %2414 = vdwg.mxu0
    %2415 = vmatprep.subr.mxu0 0.0
    %2416 = vmatpush1.msra.mxu0 %v887
    %2417 = vmatprep.subr.mxu0 0.0
    %2418 = vmatpush1.msra.mxu0 %v888
    %2419 = vmatprep.subr.mxu0 0.0
    %2420 = vmatpush1.msra.mxu0 %v889
    %2421 = vmatprep.subr.mxu0 0.0
    %2422 = vmatpush1.msra.mxu0 %v890
    %2423 = vmatprep.subr.mxu0 0.0
    %2424 = vmatpush1.msra.mxu0 %v891
    %2425 = vmatprep.subr.mxu0 0.0
    %2426 = vmatpush1.msra.mxu0 %v892
    %2427 = vmatprep.subr.mxu0 0.0
    %2428 = vmatpush1.msra.mxu0 %v893
    %2429 = vmatprep.subr.mxu0 0.0
    %2430 = vmatpush1.msra.mxu0 %v894
    %2431 = vmatprep.subr.mxu0 0.0
    %2432 = vmatpush1.msra.mxu0 %v895
    %2433 = vmatprep.subr.mxu0 0.0
    %2434 = vmatpush1.msra.mxu0 %v896
    %2435 = vmatprep.subr.mxu0 0.0
    %2436 = vmatpush1.msra.mxu0 %v897
    %2437 = vmatprep.subr.mxu0 0.0
    %2438 = vmatpush1.msra.mxu0 %v898
    %2439 = vmatprep.subr.mxu0 0.0
    %2440 = vmatpush1.msra.mxu0 %v899
    %2441 = vmatprep.subr.mxu0 0.0
    %2442 = vmatpush1.msra.mxu0 %v900
    %2443 = vmatprep.subr.mxu0 0.0
    %2444 = vmatpush1.msra.mxu0 %v901
    %2445 = vmatprep.subr.mxu0 0.0
    %2446 = vmatpush1.msra.mxu0 %v902
    %2447 = vmatprep.subr.mxu0 0.0
    %2448 = vmatpush1.msra.mxu0 %v903
    %2449 = vmatprep.subr.mxu0 0.0
    %2450 = vmatpush1.msra.mxu0 %v904
    %2451 = vmatprep.subr.mxu0 0.0
    %2452 = vmatpush1.msra.mxu0 %v905
    %2453 = vmatprep.subr.mxu0 0.0
    %2454 = vmatpush1.msra.mxu0 %v906
    %2455 = vmatprep.subr.mxu0 0.0
    %2456 = vmatpush1.msra.mxu0 %v907
    %2457 = vmatprep.subr.mxu0 0.0
    %2458 = vmatpush1.msra.mxu0 %v908
    %2459 = vmatprep.subr.mxu0 0.0
    %2460 = vmatpush1.msra.mxu0 %v909
    %2461 = vmatprep.subr.mxu0 0.0
    %2462 = vmatpush1.msra.mxu0 %v910
    %2463 = vmatprep.subr.mxu0 0.0
    %2464 = vmatpush1.msra.mxu0 %v911
    %2465 = vmatprep.subr.mxu0 0.0
    %2466 = vmatpush1.msra.mxu0 %v912
    %2467 = vmatprep.subr.mxu0 0.0
    %2468 = vmatpush1.msra.mxu0 %v913
    %2469 = vmatprep.subr.mxu0 0.0
    %2470 = vmatpush1.msra.mxu0 %v914
    %2471 = vmatprep.subr.mxu0 0.0
    %2472 = vmatpush1.msra.mxu0 %v915
    %2473 = vmatprep.subr.mxu0 0.0
    %2474 = vmatpush1.msra.mxu0 %v916
    %2475 = vmatprep.subr.mxu0 0.0
    %2476 = vmatpush1.msra.mxu0 %v917
    %2477 = vmatprep.subr.mxu0 0.0
    %2478 = vmatpush1.msra.mxu0 %v918
    %2479 = vmatprep.mubr.f32.mxu0 %v1848
    %2480 = vmatmul.mubr.f32.gmra.mrb[0].mxu0 %v1840
    %v2481 = vpop.f32.mrb[0].mxu0
    %v2482 = vadd.f32 %v2412, %v2481
    %v2483 = vpop.f32.mrb[0].mxu0
    %2484 = vdwg.mxu0
    %2485 = vmatprep.subr.mxu0 0.0
    %2486 = vmatpush1.msra.mxu0 %v919
    %2487 = vmatprep.subr.mxu0 0.0
    %2488 = vmatpush1.msra.mxu0 %v920
    %2489 = vmatprep.subr.mxu0 0.0
    %2490 = vmatpush1.msra.mxu0 %v921
    %2491 = vmatprep.subr.mxu0 0.0
    %2492 = vmatpush1.msra.mxu0 %v922
    %2493 = vmatprep.subr.mxu0 0.0
    %2494 = vmatpush1.msra.mxu0 %v923
    %2495 = vmatprep.subr.mxu0 0.0
    %2496 = vmatpush1.msra.mxu0 %v924
    %2497 = vmatprep.subr.mxu0 0.0
    %2498 = vmatpush1.msra.mxu0 %v925
    %2499 = vmatprep.subr.mxu0 0.0
    %2500 = vmatpush1.msra.mxu0 %v926
    %2501 = vmatprep.subr.mxu0 0.0
    %2502 = vmatpush1.msra.mxu0 %v927
    %2503 = vmatprep.subr.mxu0 0.0
    %2504 = vmatpush1.msra.mxu0 %v928
    %2505 = vmatprep.subr.mxu0 0.0
    %2506 = vmatpush1.msra.mxu0 %v929
    %2507 = vmatprep.subr.mxu0 0.0
    %2508 = vmatpush1.msra.mxu0 %v930
    %2509 = vmatprep.subr.mxu0 0.0
    %2510 = vmatpush1.msra.mxu0 %v931
    %2511 = vmatprep.subr.mxu0 0.0
    %2512 = vmatpush1.msra.mxu0 %v932
    %2513 = vmatprep.subr.mxu0 0.0
    %2514 = vmatpush1.msra.mxu0 %v933
    %2515 = vmatprep.subr.mxu0 0.0
    %2516 = vmatpush1.msra.mxu0 %v934
    %2517 = vmatprep.subr.mxu0 0.0
    %2518 = vmatpush1.msra.mxu0 %v935
    %2519 = vmatprep.subr.mxu0 0.0
    %2520 = vmatpush1.msra.mxu0 %v936
    %2521 = vmatprep.subr.mxu0 0.0
    %2522 = vmatpush1.msra.mxu0 %v937
    %2523 = vmatprep.subr.mxu0 0.0
    %2524 = vmatpush1.msra.mxu0 %v938
    %2525 = vmatprep.subr.mxu0 0.0
    %2526 = vmatpush1.msra.mxu0 %v939
    %2527 = vmatprep.subr.mxu0 0.0
    %2528 = vmatpush1.msra.mxu0 %v940
    %2529 = vmatprep.subr.mxu0 0.0
    %2530 = vmatpush1.msra.mxu0 %v941
    %2531 = vmatprep.subr.mxu0 0.0
    %2532 = vmatpush1.msra.mxu0 %v942
    %2533 = vmatprep.subr.mxu0 0.0
    %2534 = vmatpush1.msra.mxu0 %v943
    %2535 = vmatprep.subr.mxu0 0.0
    %2536 = vmatpush1.msra.mxu0 %v944
    %2537 = vmatprep.subr.mxu0 0.0
    %2538 = vmatpush1.msra.mxu0 %v945
    %2539 = vmatprep.subr.mxu0 0.0
    %2540 = vmatpush1.msra.mxu0 %v946
    %2541 = vmatprep.subr.mxu0 0.0
    %2542 = vmatpush1.msra.mxu0 %v947
    %2543 = vmatprep.subr.mxu0 0.0
    %2544 = vmatpush1.msra.mxu0 %v948
    %2545 = vmatprep.subr.mxu0 0.0
    %2546 = vmatpush1.msra.mxu0 %v949
    %2547 = vmatprep.subr.mxu0 0.0
    %2548 = vmatpush1.msra.mxu0 %v950
    %2549 = vmatprep.mubr.f32.mxu0 %v1849
    %2550 = vmatmul.mubr.f32.gmra.mrb[0].mxu0 %v1847
    %v2551 = vpop.f32.mrb[0].mxu0
    %v2552 = vadd.f32 %v2482, %v2551
    %v2553 = vpop.f32.mrb[0].mxu0
    %2554 = vdwg.mxu0
    %2555 = vmatprep.subr.mxu0 0.0
    %2556 = vmatpush1.msra.mxu0 %v951
    %2557 = vmatprep.subr.mxu0 0.0
    %2558 = vmatpush1.msra.mxu0 %v952
    %2559 = vmatprep.subr.mxu0 0.0
    %2560 = vmatpush1.msra.mxu0 %v953
    %2561 = vmatprep.subr.mxu0 0.0
    %2562 = vmatpush1.msra.mxu0 %v954
    %2563 = vmatprep.subr.mxu0 0.0
    %2564 = vmatpush1.msra.mxu0 %v955
    %2565 = vmatprep.subr.mxu0 0.0
    %2566 = vmatpush1.msra.mxu0 %v956
    %2567 = vmatprep.subr.mxu0 0.0
    %2568 = vmatpush1.msra.mxu0 %v957
    %2569 = vmatprep.subr.mxu0 0.0
    %2570 = vmatpush1.msra.mxu0 %v958
    %2571 = vmatprep.subr.mxu0 0.0
    %2572 = vmatpush1.msra.mxu0 %v959
    %2573 = vmatprep.subr.mxu0 0.0
    %2574 = vmatpush1.msra.mxu0 %v960
    %2575 = vmatprep.subr.mxu0 0.0
    %2576 = vmatpush1.msra.mxu0 %v961
    %2577 = vmatprep.subr.mxu0 0.0
    %2578 = vmatpush1.msra.mxu0 %v962
    %2579 = vmatprep.subr.mxu0 0.0
    %2580 = vmatpush1.msra.mxu0 %v963
    %2581 = vmatprep.subr.mxu0 0.0
    %2582 = vmatpush1.msra.mxu0 %v964
    %2583 = vmatprep.subr.mxu0 0.0
    %2584 = vmatpush1.msra.mxu0 %v965
    %2585 = vmatprep.subr.mxu0 0.0
    %2586 = vmatpush1.msra.mxu0 %v966
    %2587 = vmatprep.subr.mxu0 0.0
    %2588 = vmatpush1.msra.mxu0 %v967
    %2589 = vmatprep.subr.mxu0 0.0
    %2590 = vmatpush1.msra.mxu0 %v968
    %2591 = vmatprep.subr.mxu0 0.0
    %2592 = vmatpush1.msra.mxu0 %v969
    %2593 = vmatprep.subr.mxu0 0.0
    %2594 = vmatpush1.msra.mxu0 %v970
    %2595 = vmatprep.subr.mxu0 0.0
    %2596 = vmatpush1.msra.mxu0 %v971
    %2597 = vmatprep.subr.mxu0 0.0
    %2598 = vmatpush1.msra.mxu0 %v972
    %2599 = vmatprep.subr.mxu0 0.0
    %2600 = vmatpush1.msra.mxu0 %v973
    %2601 = vmatprep.subr.mxu0 0.0
    %2602 = vmatpush1.msra.mxu0 %v974
    %2603 = vmatprep.subr.mxu0 0.0
    %2604 = vmatpush1.msra.mxu0 %v975
    %2605 = vmatprep.subr.mxu0 0.0
    %2606 = vmatpush1.msra.mxu0 %v976
    %2607 = vmatprep.subr.mxu0 0.0
    %2608 = vmatpush1.msra.mxu0 %v977
    %2609 = vmatprep.subr.mxu0 0.0
    %2610 = vmatpush1.msra.mxu0 %v978
    %2611 = vmatprep.subr.mxu0 0.0
    %2612 = vmatpush1.msra.mxu0 %v979
    %2613 = vmatprep.subr.mxu0 0.0
    %2614 = vmatpush1.msra.mxu0 %v980
    %2615 = vmatprep.subr.mxu0 0.0
    %2616 = vmatpush1.msra.mxu0 %v981
    %2617 = vmatprep.subr.mxu0 0.0
    %2618 = vmatpush1.msra.mxu0 %v982
    %2619 = vmatprep.mubr.f32.mxu0 %v1865
    %2620 = vmatmul.mubr.f32.gmra.mrb[0].mxu0 %v1857
    %v2621 = vpop.f32.mrb[0].mxu0
    %v2622 = vadd.f32 %v2552, %v2621
    %v2623 = vpop.f32.mrb[0].mxu0
    %2624 = vdwg.mxu0
    %2625 = vmatprep.subr.mxu0 0.0
    %2626 = vmatpush1.msra.mxu0 %v983
    %2627 = vmatprep.subr.mxu0 0.0
    %2628 = vmatpush1.msra.mxu0 %v984
    %2629 = vmatprep.subr.mxu0 0.0
    %2630 = vmatpush1.msra.mxu0 %v985
    %2631 = vmatprep.subr.mxu0 0.0
    %2632 = vmatpush1.msra.mxu0 %v986
    %2633 = vmatprep.subr.mxu0 0.0
    %2634 = vmatpush1.msra.mxu0 %v987
    %2635 = vmatprep.subr.mxu0 0.0
    %2636 = vmatpush1.msra.mxu0 %v988
    %2637 = vmatprep.subr.mxu0 0.0
    %2638 = vmatpush1.msra.mxu0 %v989
    %2639 = vmatprep.subr.mxu0 0.0
    %2640 = vmatpush1.msra.mxu0 %v990
    %2641 = vmatprep.subr.mxu0 0.0
    %2642 = vmatpush1.msra.mxu0 %v991
    %2643 = vmatprep.subr.mxu0 0.0
    %2644 = vmatpush1.msra.mxu0 %v992
    %2645 = vmatprep.subr.mxu0 0.0
    %2646 = vmatpush1.msra.mxu0 %v993
    %2647 = vmatprep.subr.mxu0 0.0
    %2648 = vmatpush1.msra.mxu0 %v994
    %2649 = vmatprep.subr.mxu0 0.0
    %2650 = vmatpush1.msra.mxu0 %v995
    %2651 = vmatprep.subr.mxu0 0.0
    %2652 = vmatpush1.msra.mxu0 %v996
    %2653 = vmatprep.subr.mxu0 0.0
    %2654 = vmatpush1.msra.mxu0 %v997
    %2655 = vmatprep.subr.mxu0 0.0
    %2656 = vmatpush1.msra.mxu0 %v998
    %2657 = vmatprep.subr.mxu0 0.0
    %2658 = vmatpush1.msra.mxu0 %v999
    %2659 = vmatprep.subr.mxu0 0.0
    %2660 = vmatpush1.msra.mxu0 %v1000
    %2661 = vmatprep.subr.mxu0 0.0
    %2662 = vmatpush1.msra.mxu0 %v1001
    %2663 = vmatprep.subr.mxu0 0.0
    %2664 = vmatpush1.msra.mxu0 %v1002
    %2665 = vmatprep.subr.mxu0 0.0
    %2666 = vmatpush1.msra.mxu0 %v1003
    %2667 = vmatprep.subr.mxu0 0.0
    %2668 = vmatpush1.msra.mxu0 %v1004
    %2669 = vmatprep.subr.mxu0 0.0
    %2670 = vmatpush1.msra.mxu0 %v1005
    %2671 = vmatprep.subr.mxu0 0.0
    %2672 = vmatpush1.msra.mxu0 %v1006
    %2673 = vmatprep.subr.mxu0 0.0
    %2674 = vmatpush1.msra.mxu0 %v1007
    %2675 = vmatprep.subr.mxu0 0.0
    %2676 = vmatpush1.msra.mxu0 %v1008
    %2677 = vmatprep.subr.mxu0 0.0
    %2678 = vmatpush1.msra.mxu0 %v1009
    %2679 = vmatprep.subr.mxu0 0.0
    %2680 = vmatpush1.msra.mxu0 %v1010
    %2681 = vmatprep.subr.mxu0 0.0
    %2682 = vmatpush1.msra.mxu0 %v1011
    %2683 = vmatprep.subr.mxu0 0.0
    %2684 = vmatpush1.msra.mxu0 %v1012
    %2685 = vmatprep.subr.mxu0 0.0
    %2686 = vmatpush1.msra.mxu0 %v1013
    %2687 = vmatprep.subr.mxu0 0.0
    %2688 = vmatpush1.msra.mxu0 %v1014
    %2689 = vmatprep.mubr.f32.mxu0 %v1866
    %2690 = vmatmul.mubr.f32.gmra.mrb[0].mxu0 %v1864
    %v2691 = vpop.f32.mrb[0].mxu0
    %v2692 = vadd.f32 %v2622, %v2691
    %v2693 = vpop.f32.mrb[0].mxu0
    %2694 = vdwg.mxu0
    %2695 = vmatprep.subr.mxu0 0.0
    %2696 = vmatpush1.msra.mxu0 %v1015
    %2697 = vmatprep.subr.mxu0 0.0
    %2698 = vmatpush1.msra.mxu0 %v1016
    %2699 = vmatprep.subr.mxu0 0.0
    %2700 = vmatpush1.msra.mxu0 %v1017
    %2701 = vmatprep.subr.mxu0 0.0
    %2702 = vmatpush1.msra.mxu0 %v1018
    %2703 = vmatprep.subr.mxu0 0.0
    %2704 = vmatpush1.msra.mxu0 %v1019
    %2705 = vmatprep.subr.mxu0 0.0
    %2706 = vmatpush1.msra.mxu0 %v1020
    %2707 = vmatprep.subr.mxu0 0.0
    %2708 = vmatpush1.msra.mxu0 %v1021
    %2709 = vmatprep.subr.mxu0 0.0
    %2710 = vmatpush1.msra.mxu0 %v1022
    %2711 = vmatprep.subr.mxu0 0.0
    %2712 = vmatpush1.msra.mxu0 %v1023
    %2713 = vmatprep.subr.mxu0 0.0
    %2714 = vmatpush1.msra.mxu0 %v1024
    %2715 = vmatprep.subr.mxu0 0.0
    %2716 = vmatpush1.msra.mxu0 %v1025
    %2717 = vmatprep.subr.mxu0 0.0
    %2718 = vmatpush1.msra.mxu0 %v1026
    %2719 = vmatprep.subr.mxu0 0.0
    %2720 = vmatpush1.msra.mxu0 %v1027
    %2721 = vmatprep.subr.mxu0 0.0
    %2722 = vmatpush1.msra.mxu0 %v1028
    %2723 = vmatprep.subr.mxu0 0.0
    %2724 = vmatpush1.msra.mxu0 %v1029
    %2725 = vmatprep.subr.mxu0 0.0
    %2726 = vmatpush1.msra.mxu0 %v1030
    %2727 = vmatprep.subr.mxu0 0.0
    %2728 = vmatpush1.msra.mxu0 %v1031
    %2729 = vmatprep.subr.mxu0 0.0
    %2730 = vmatpush1.msra.mxu0 %v1032
    %2731 = vmatprep.subr.mxu0 0.0
    %2732 = vmatpush1.msra.mxu0 %v1033
    %2733 = vmatprep.subr.mxu0 0.0
    %2734 = vmatpush1.msra.mxu0 %v1034
    %2735 = vmatprep.subr.mxu0 0.0
    %2736 = vmatpush1.msra.mxu0 %v1035
    %2737 = vmatprep.subr.mxu0 0.0
    %2738 = vmatpush1.msra.mxu0 %v1036
    %2739 = vmatprep.subr.mxu0 0.0
    %2740 = vmatpush1.msra.mxu0 %v1037
    %2741 = vmatprep.subr.mxu0 0.0
    %2742 = vmatpush1.msra.mxu0 %v1038
    %2743 = vmatprep.subr.mxu0 0.0
    %2744 = vmatpush1.msra.mxu0 %v1039
    %2745 = vmatprep.subr.mxu0 0.0
    %2746 = vmatpush1.msra.mxu0 %v1040
    %2747 = vmatprep.subr.mxu0 0.0
    %2748 = vmatpush1.msra.mxu0 %v1041
    %2749 = vmatprep.subr.mxu0 0.0
    %2750 = vmatpush1.msra.mxu0 %v1042
    %2751 = vmatprep.subr.mxu0 0.0
    %2752 = vmatpush1.msra.mxu0 %v1043
    %2753 = vmatprep.subr.mxu0 0.0
    %2754 = vmatpush1.msra.mxu0 %v1044
    %2755 = vmatprep.subr.mxu0 0.0
    %2756 = vmatpush1.msra.mxu0 %v1045
    %2757 = vmatprep.subr.mxu0 0.0
    %2758 = vmatpush1.msra.mxu0 %v1046
    %2759 = vmatprep.mubr.f32.mxu0 %v1882
    %2760 = vmatmul.mubr.f32.gmra.mrb[0].mxu0 %v1874
    %v2761 = vpop.f32.mrb[0].mxu0
    %v2762 = vadd.f32 %v2692, %v2761
    %v2763 = vpop.f32.mrb[0].mxu0
    %2764 = vdwg.mxu0
    %2765 = vmatprep.subr.mxu0 0.0
    %2766 = vmatpush1.msra.mxu0 %v1047
    %2767 = vmatprep.subr.mxu0 0.0
    %2768 = vmatpush1.msra.mxu0 %v1048
    %2769 = vmatprep.subr.mxu0 0.0
    %2770 = vmatpush1.msra.mxu0 %v1049
    %2771 = vmatprep.subr.mxu0 0.0
    %2772 = vmatpush1.msra.mxu0 %v1050
    %2773 = vmatprep.subr.mxu0 0.0
    %2774 = vmatpush1.msra.mxu0 %v1051
    %2775 = vmatprep.subr.mxu0 0.0
    %2776 = vmatpush1.msra.mxu0 %v1052
    %2777 = vmatprep.subr.mxu0 0.0
    %2778 = vmatpush1.msra.mxu0 %v1053
    %2779 = vmatprep.subr.mxu0 0.0
    %2780 = vmatpush1.msra.mxu0 %v1054
    %2781 = vmatprep.subr.mxu0 0.0
    %2782 = vmatpush1.msra.mxu0 %v1055
    %2783 = vmatprep.subr.mxu0 0.0
    %2784 = vmatpush1.msra.mxu0 %v1056
    %2785 = vmatprep.subr.mxu0 0.0
    %2786 = vmatpush1.msra.mxu0 %v1057
    %2787 = vmatprep.subr.mxu0 0.0
    %2788 = vmatpush1.msra.mxu0 %v1058
    %2789 = vmatprep.subr.mxu0 0.0
    %2790 = vmatpush1.msra.mxu0 %v1059
    %2791 = vmatprep.subr.mxu0 0.0
    %2792 = vmatpush1.msra.mxu0 %v1060
    %2793 = vmatprep.subr.mxu0 0.0
    %2794 = vmatpush1.msra.mxu0 %v1061
    %2795 = vmatprep.subr.mxu0 0.0
    %2796 = vmatpush1.msra.mxu0 %v1062
    %2797 = vmatprep.subr.mxu0 0.0
    %2798 = vmatpush1.msra.mxu0 %v1063
    %2799 = vmatprep.subr.mxu0 0.0
    %2800 = vmatpush1.msra.mxu0 %v1064
    %2801 = vmatprep.subr.mxu0 0.0
    %2802 = vmatpush1.msra.mxu0 %v1065
    %2803 = vmatprep.subr.mxu0 0.0
    %2804 = vmatpush1.msra.mxu0 %v1066
    %2805 = vmatprep.subr.mxu0 0.0
    %2806 = vmatpush1.msra.mxu0 %v1067
    %2807 = vmatprep.subr.mxu0 0.0
    %2808 = vmatpush1.msra.mxu0 %v1068
    %2809 = vmatprep.subr.mxu0 0.0
    %2810 = vmatpush1.msra.mxu0 %v1069
    %2811 = vmatprep.subr.mxu0 0.0
    %2812 = vmatpush1.msra.mxu0 %v1070
    %2813 = vmatprep.subr.mxu0 0.0
    %2814 = vmatpush1.msra.mxu0 %v1071
    %2815 = vmatprep.subr.mxu0 0.0
    %2816 = vmatpush1.msra.mxu0 %v1072
    %2817 = vmatprep.subr.mxu0 0.0
    %2818 = vmatpush1.msra.mxu0 %v1073
    %2819 = vmatprep.subr.mxu0 0.0
    %2820 = vmatpush1.msra.mxu0 %v1074
    %2821 = vmatprep.subr.mxu0 0.0
    %2822 = vmatpush1.msra.mxu0 %v1075
    %2823 = vmatprep.subr.mxu0 0.0
    %2824 = vmatpush1.msra.mxu0 %v1076
    %2825 = vmatprep.subr.mxu0 0.0
    %2826 = vmatpush1.msra.mxu0 %v1077
    %2827 = vmatprep.subr.mxu0 0.0
    %2828 = vmatpush1.msra.mxu0 %v1078
    %2829 = vmatprep.mubr.f32.mxu0 %v1883
    %2830 = vmatmul.mubr.f32.gmra.mrb[0].mxu0 %v1881
    %v2831 = vpop.f32.mrb[0].mxu0
    %v2832 = vadd.f32 %v2762, %v2831
    %v2833 = vpop.f32.mrb[0].mxu0
    %2834 = vdwg.mxu0
    %2835 = vmatprep.subr.mxu0 0.0
    %2836 = vmatpush1.msra.mxu0 %v1079
    %2837 = vmatprep.subr.mxu0 0.0
    %2838 = vmatpush1.msra.mxu0 %v1080
    %2839 = vmatprep.subr.mxu0 0.0
    %2840 = vmatpush1.msra.mxu0 %v1081
    %2841 = vmatprep.subr.mxu0 0.0
    %2842 = vmatpush1.msra.mxu0 %v1082
    %2843 = vmatprep.subr.mxu0 0.0
    %2844 = vmatpush1.msra.mxu0 %v1083
    %2845 = vmatprep.subr.mxu0 0.0
    %2846 = vmatpush1.msra.mxu0 %v1084
    %2847 = vmatprep.subr.mxu0 0.0
    %2848 = vmatpush1.msra.mxu0 %v1085
    %2849 = vmatprep.subr.mxu0 0.0
    %2850 = vmatpush1.msra.mxu0 %v1086
    %2851 = vmatprep.subr.mxu0 0.0
    %2852 = vmatpush1.msra.mxu0 %v1087
    %2853 = vmatprep.subr.mxu0 0.0
    %2854 = vmatpush1.msra.mxu0 %v1088
    %2855 = vmatprep.subr.mxu0 0.0
    %2856 = vmatpush1.msra.mxu0 %v1089
    %2857 = vmatprep.subr.mxu0 0.0
    %2858 = vmatpush1.msra.mxu0 %v1090
    %2859 = vmatprep.subr.mxu0 0.0
    %2860 = vmatpush1.msra.mxu0 %v1091
    %2861 = vmatprep.subr.mxu0 0.0
    %2862 = vmatpush1.msra.mxu0 %v1092
    %2863 = vmatprep.subr.mxu0 0.0
    %2864 = vmatpush1.msra.mxu0 %v1093
    %2865 = vmatprep.subr.mxu0 0.0
    %2866 = vmatpush1.msra.mxu0 %v1094
    %2867 = vmatprep.subr.mxu0 0.0
    %2868 = vmatpush1.msra.mxu0 %v1095
    %2869 = vmatprep.subr.mxu0 0.0
    %2870 = vmatpush1.msra.mxu0 %v1096
    %2871 = vmatprep.subr.mxu0 0.0
    %2872 = vmatpush1.msra.mxu0 %v1097
    %2873 = vmatprep.subr.mxu0 0.0
    %2874 = vmatpush1.msra.mxu0 %v1098
    %2875 = vmatprep.subr.mxu0 0.0
    %2876 = vmatpush1.msra.mxu0 %v1099
    %2877 = vmatprep.subr.mxu0 0.0
    %2878 = vmatpush1.msra.mxu0 %v1100
    %2879 = vmatprep.subr.mxu0 0.0
    %2880 = vmatpush1.msra.mxu0 %v1101
    %2881 = vmatprep.subr.mxu0 0.0
    %2882 = vmatpush1.msra.mxu0 %v1102
    %2883 = vmatprep.subr.mxu0 0.0
    %2884 = vmatpush1.msra.mxu0 %v1103
    %2885 = vmatprep.subr.mxu0 0.0
    %2886 = vmatpush1.msra.mxu0 %v1104
    %2887 = vmatprep.subr.mxu0 0.0
    %2888 = vmatpush1.msra.mxu0 %v1105
    %2889 = vmatprep.subr.mxu0 0.0
    %2890 = vmatpush1.msra.mxu0 %v1106
    %2891 = vmatprep.subr.mxu0 0.0
    %2892 = vmatpush1.msra.mxu0 %v1107
    %2893 = vmatprep.subr.mxu0 0.0
    %2894 = vmatpush1.msra.mxu0 %v1108
    %2895 = vmatprep.subr.mxu0 0.0
    %2896 = vmatpush1.msra.mxu0 %v1109
    %2897 = vmatprep.subr.mxu0 0.0
    %2898 = vmatpush1.msra.mxu0 %v1110
    %2899 = vmatprep.mubr.f32.mxu0 %v1899
    %2900 = vmatmul.mubr.f32.gmra.mrb[0].mxu0 %v1891
    %v2901 = vpop.f32.mrb[0].mxu0
    %v2902 = vadd.f32 %v2832, %v2901
    %v2903 = vpop.f32.mrb[0].mxu0
    %2904 = vdwg.mxu0
    %2905 = vmatprep.subr.mxu0 0.0
    %2906 = vmatpush1.msra.mxu0 %v1111
    %2907 = vmatprep.subr.mxu0 0.0
    %2908 = vmatpush1.msra.mxu0 %v1112
    %2909 = vmatprep.subr.mxu0 0.0
    %2910 = vmatpush1.msra.mxu0 %v1113
    %2911 = vmatprep.subr.mxu0 0.0
    %2912 = vmatpush1.msra.mxu0 %v1114
    %2913 = vmatprep.subr.mxu0 0.0
    %2914 = vmatpush1.msra.mxu0 %v1115
    %2915 = vmatprep.subr.mxu0 0.0
    %2916 = vmatpush1.msra.mxu0 %v1116
    %2917 = vmatprep.subr.mxu0 0.0
    %2918 = vmatpush1.msra.mxu0 %v1117
    %2919 = vmatprep.subr.mxu0 0.0
    %2920 = vmatpush1.msra.mxu0 %v1118
    %2921 = vmatprep.subr.mxu0 0.0
    %2922 = vmatpush1.msra.mxu0 %v1119
    %2923 = vmatprep.subr.mxu0 0.0
    %2924 = vmatpush1.msra.mxu0 %v1120
    %2925 = vmatprep.subr.mxu0 0.0
    %2926 = vmatpush1.msra.mxu0 %v1121
    %2927 = vmatprep.subr.mxu0 0.0
    %2928 = vmatpush1.msra.mxu0 %v1122
    %2929 = vmatprep.subr.mxu0 0.0
    %2930 = vmatpush1.msra.mxu0 %v1123
    %2931 = vmatprep.subr.mxu0 0.0
    %2932 = vmatpush1.msra.mxu0 %v1124
    %2933 = vmatprep.subr.mxu0 0.0
    %2934 = vmatpush1.msra.mxu0 %v1125
    %2935 = vmatprep.subr.mxu0 0.0
    %2936 = vmatpush1.msra.mxu0 %v1126
    %2937 = vmatprep.subr.mxu0 0.0
    %2938 = vmatpush1.msra.mxu0 %v1127
    %2939 = vmatprep.subr.mxu0 0.0
    %2940 = vmatpush1.msra.mxu0 %v1128
    %2941 = vmatprep.subr.mxu0 0.0
    %2942 = vmatpush1.msra.mxu0 %v1129
    %2943 = vmatprep.subr.mxu0 0.0
    %2944 = vmatpush1.msra.mxu0 %v1130
    %2945 = vmatprep.subr.mxu0 0.0
    %2946 = vmatpush1.msra.mxu0 %v1131
    %2947 = vmatprep.subr.mxu0 0.0
    %2948 = vmatpush1.msra.mxu0 %v1132
    %2949 = vmatprep.subr.mxu0 0.0
    %2950 = vmatpush1.msra.mxu0 %v1133
    %2951 = vmatprep.subr.mxu0 0.0
    %2952 = vmatpush1.msra.mxu0 %v1134
    %2953 = vmatprep.subr.mxu0 0.0
    %2954 = vmatpush1.msra.mxu0 %v1135
    %2955 = vmatprep.subr.mxu0 0.0
    %2956 = vmatpush1.msra.mxu0 %v1136
    %2957 = vmatprep.subr.mxu0 0.0
    %2958 = vmatpush1.msra.mxu0 %v1137
    %2959 = vmatprep.subr.mxu0 0.0
    %2960 = vmatpush1.msra.mxu0 %v1138
    %2961 = vmatprep.subr.mxu0 0.0
    %2962 = vmatpush1.msra.mxu0 %v1139
    %2963 = vmatprep.subr.mxu0 0.0
    %2964 = vmatpush1.msra.mxu0 %v1140
    %2965 = vmatprep.subr.mxu0 0.0
    %2966 = vmatpush1.msra.mxu0 %v1141
    %2967 = vmatprep.subr.mxu0 0.0
    %2968 = vmatpush1.msra.mxu0 %v1142
    %2969 = vmatprep.mubr.f32.mxu0 %v1900
    %2970 = vmatmul.mubr.f32.gmra.mrb[0].mxu0 %v1898
    %v2971 = vpop.f32.mrb[0].mxu0
    %v2972 = vadd.f32 %v2902, %v2971
    %v2973 = vpop.f32.mrb[0].mxu0
    %2974 = vdwg.mxu0
    %2975 = vmatprep.subr.mxu0 0.0
    %2976 = vmatpush1.msra.mxu0 %v1143
    %2977 = vmatprep.subr.mxu0 0.0
    %2978 = vmatpush1.msra.mxu0 %v1144
    %2979 = vmatprep.subr.mxu0 0.0
    %2980 = vmatpush1.msra.mxu0 %v1145
    %2981 = vmatprep.subr.mxu0 0.0
    %2982 = vmatpush1.msra.mxu0 %v1146
    %2983 = vmatprep.subr.mxu0 0.0
    %2984 = vmatpush1.msra.mxu0 %v1147
    %2985 = vmatprep.subr.mxu0 0.0
    %2986 = vmatpush1.msra.mxu0 %v1148
    %2987 = vmatprep.subr.mxu0 0.0
    %2988 = vmatpush1.msra.mxu0 %v1149
    %2989 = vmatprep.subr.mxu0 0.0
    %2990 = vmatpush1.msra.mxu0 %v1150
    %2991 = vmatprep.subr.mxu0 0.0
    %2992 = vmatpush1.msra.mxu0 %v1151
    %2993 = vmatprep.subr.mxu0 0.0
    %2994 = vmatpush1.msra.mxu0 %v1152
    %2995 = vmatprep.subr.mxu0 0.0
    %2996 = vmatpush1.msra.mxu0 %v1153
    %2997 = vmatprep.subr.mxu0 0.0
    %2998 = vmatpush1.msra.mxu0 %v1154
    %2999 = vmatprep.subr.mxu0 0.0
    %3000 = vmatpush1.msra.mxu0 %v1155
    %3001 = vmatprep.subr.mxu0 0.0
    %3002 = vmatpush1.msra.mxu0 %v1156
    %3003 = vmatprep.subr.mxu0 0.0
    %3004 = vmatpush1.msra.mxu0 %v1157
    %3005 = vmatprep.subr.mxu0 0.0
    %3006 = vmatpush1.msra.mxu0 %v1158
    %3007 = vmatprep.subr.mxu0 0.0
    %3008 = vmatpush1.msra.mxu0 %v1159
    %3009 = vmatprep.subr.mxu0 0.0
    %3010 = vmatpush1.msra.mxu0 %v1160
    %3011 = vmatprep.subr.mxu0 0.0
    %3012 = vmatpush1.msra.mxu0 %v1161
    %3013 = vmatprep.subr.mxu0 0.0
    %3014 = vmatpush1.msra.mxu0 %v1162
    %3015 = vmatprep.subr.mxu0 0.0
    %3016 = vmatpush1.msra.mxu0 %v1163
    %3017 = vmatprep.subr.mxu0 0.0
    %3018 = vmatpush1.msra.mxu0 %v1164
    %3019 = vmatprep.subr.mxu0 0.0
    %3020 = vmatpush1.msra.mxu0 %v1165
    %3021 = vmatprep.subr.mxu0 0.0
    %3022 = vmatpush1.msra.mxu0 %v1166
    %3023 = vmatprep.subr.mxu0 0.0
    %3024 = vmatpush1.msra.mxu0 %v1167
    %3025 = vmatprep.subr.mxu0 0.0
    %3026 = vmatpush1.msra.mxu0 %v1168
    %3027 = vmatprep.subr.mxu0 0.0
    %3028 = vmatpush1.msra.mxu0 %v1169
    %3029 = vmatprep.subr.mxu0 0.0
    %3030 = vmatpush1.msra.mxu0 %v1170
    %3031 = vmatprep.subr.mxu0 0.0
    %3032 = vmatpush1.msra.mxu0 %v1171
    %3033 = vmatprep.subr.mxu0 0.0
    %3034 = vmatpush1.msra.mxu0 %v1172
    %3035 = vmatprep.subr.mxu0 0.0
    %3036 = vmatpush1.msra.mxu0 %v1173
    %3037 = vmatprep.subr.mxu0 0.0
    %3038 = vmatpush1.msra.mxu0 %v1174
    %3039 = vmatprep.mubr.f32.mxu0 %v1916
    %3040 = vmatmul.mubr.f32.gmra.mrb[0].mxu0 %v1908
    %v3041 = vpop.f32.mrb[0].mxu0
    %v3042 = vadd.f32 %v2972, %v3041
    %v3043 = vpop.f32.mrb[0].mxu0
    %3044 = vdwg.mxu0
    %3045 = vmatprep.subr.mxu0 0.0
    %3046 = vmatpush1.msra.mxu0 %v1175
    %3047 = vmatprep.subr.mxu0 0.0
    %3048 = vmatpush1.msra.mxu0 %v1176
    %3049 = vmatprep.subr.mxu0 0.0
    %3050 = vmatpush1.msra.mxu0 %v1177
    %3051 = vmatprep.subr.mxu0 0.0
    %3052 = vmatpush1.msra.mxu0 %v1178
    %3053 = vmatprep.subr.mxu0 0.0
    %3054 = vmatpush1.msra.mxu0 %v1179
    %3055 = vmatprep.subr.mxu0 0.0
    %3056 = vmatpush1.msra.mxu0 %v1180
    %3057 = vmatprep.subr.mxu0 0.0
    %3058 = vmatpush1.msra.mxu0 %v1181
    %3059 = vmatprep.subr.mxu0 0.0
    %3060 = vmatpush1.msra.mxu0 %v1182
    %3061 = vmatprep.subr.mxu0 0.0
    %3062 = vmatpush1.msra.mxu0 %v1183
    %3063 = vmatprep.subr.mxu0 0.0
    %3064 = vmatpush1.msra.mxu0 %v1184
    %3065 = vmatprep.subr.mxu0 0.0
    %3066 = vmatpush1.msra.mxu0 %v1185
    %3067 = vmatprep.subr.mxu0 0.0
    %3068 = vmatpush1.msra.mxu0 %v1186
    %3069 = vmatprep.subr.mxu0 0.0
    %3070 = vmatpush1.msra.mxu0 %v1187
    %3071 = vmatprep.subr.mxu0 0.0
    %3072 = vmatpush1.msra.mxu0 %v1188
    %3073 = vmatprep.subr.mxu0 0.0
    %3074 = vmatpush1.msra.mxu0 %v1189
    %3075 = vmatprep.subr.mxu0 0.0
    %3076 = vmatpush1.msra.mxu0 %v1190
    %3077 = vmatprep.subr.mxu0 0.0
    %3078 = vmatpush1.msra.mxu0 %v1191
    %3079 = vmatprep.subr.mxu0 0.0
    %3080 = vmatpush1.msra.mxu0 %v1192
    %3081 = vmatprep.subr.mxu0 0.0
    %3082 = vmatpush1.msra.mxu0 %v1193
    %3083 = vmatprep.subr.mxu0 0.0
    %3084 = vmatpush1.msra.mxu0 %v1194
    %3085 = vmatprep.subr.mxu0 0.0
    %3086 = vmatpush1.msra.mxu0 %v1195
    %3087 = vmatprep.subr.mxu0 0.0
    %3088 = vmatpush1.msra.mxu0 %v1196
    %3089 = vmatprep.subr.mxu0 0.0
    %3090 = vmatpush1.msra.mxu0 %v1197
    %3091 = vmatprep.subr.mxu0 0.0
    %3092 = vmatpush1.msra.mxu0 %v1198
    %3093 = vmatprep.subr.mxu0 0.0
    %3094 = vmatpush1.msra.mxu0 %v1199
    %3095 = vmatprep.subr.mxu0 0.0
    %3096 = vmatpush1.msra.mxu0 %v1200
    %3097 = vmatprep.subr.mxu0 0.0
    %3098 = vmatpush1.msra.mxu0 %v1201
    %3099 = vmatprep.subr.mxu0 0.0
    %3100 = vmatpush1.msra.mxu0 %v1202
    %3101 = vmatprep.subr.mxu0 0.0
    %3102 = vmatpush1.msra.mxu0 %v1203
    %3103 = vmatprep.subr.mxu0 0.0
    %3104 = vmatpush1.msra.mxu0 %v1204
    %3105 = vmatprep.subr.mxu0 0.0
    %3106 = vmatpush1.msra.mxu0 %v1205
    %3107 = vmatprep.subr.mxu0 0.0
    %3108 = vmatpush1.msra.mxu0 %v1206
    %3109 = vmatprep.mubr.f32.mxu0 %v1917
    %3110 = vmatmul.mubr.f32.gmra.mrb[0].mxu0 %v1915
    %v3111 = vpop.f32.mrb[0].mxu0
    %v3112 = vadd.f32 %v3042, %v3111
    %v3113 = vpop.f32.mrb[0].mxu0
    %3114 = vdwg.mxu0
    %3115 = vmatprep.subr.mxu0 0.0
    %3116 = vmatpush1.msra.mxu0 %v1207
    %3117 = vmatprep.subr.mxu0 0.0
    %3118 = vmatpush1.msra.mxu0 %v1208
    %3119 = vmatprep.subr.mxu0 0.0
    %3120 = vmatpush1.msra.mxu0 %v1209
    %3121 = vmatprep.subr.mxu0 0.0
    %3122 = vmatpush1.msra.mxu0 %v1210
    %3123 = vmatprep.subr.mxu0 0.0
    %3124 = vmatpush1.msra.mxu0 %v1211
    %3125 = vmatprep.subr.mxu0 0.0
    %3126 = vmatpush1.msra.mxu0 %v1212
    %3127 = vmatprep.subr.mxu0 0.0
    %3128 = vmatpush1.msra.mxu0 %v1213
    %3129 = vmatprep.subr.mxu0 0.0
    %3130 = vmatpush1.msra.mxu0 %v1214
    %3131 = vmatprep.subr.mxu0 0.0
    %3132 = vmatpush1.msra.mxu0 %v1215
    %3133 = vmatprep.subr.mxu0 0.0
    %3134 = vmatpush1.msra.mxu0 %v1216
    %3135 = vmatprep.subr.mxu0 0.0
    %3136 = vmatpush1.msra.mxu0 %v1217
    %3137 = vmatprep.subr.mxu0 0.0
    %3138 = vmatpush1.msra.mxu0 %v1218
    %3139 = vmatprep.subr.mxu0 0.0
    %3140 = vmatpush1.msra.mxu0 %v1219
    %3141 = vmatprep.subr.mxu0 0.0
    %3142 = vmatpush1.msra.mxu0 %v1220
    %3143 = vmatprep.subr.mxu0 0.0
    %3144 = vmatpush1.msra.mxu0 %v1221
    %3145 = vmatprep.subr.mxu0 0.0
    %3146 = vmatpush1.msra.mxu0 %v1222
    %3147 = vmatprep.subr.mxu0 0.0
    %3148 = vmatpush1.msra.mxu0 %v1223
    %3149 = vmatprep.subr.mxu0 0.0
    %3150 = vmatpush1.msra.mxu0 %v1224
    %3151 = vmatprep.subr.mxu0 0.0
    %3152 = vmatpush1.msra.mxu0 %v1225
    %3153 = vmatprep.subr.mxu0 0.0
    %3154 = vmatpush1.msra.mxu0 %v1226
    %3155 = vmatprep.subr.mxu0 0.0
    %3156 = vmatpush1.msra.mxu0 %v1227
    %3157 = vmatprep.subr.mxu0 0.0
    %3158 = vmatpush1.msra.mxu0 %v1228
    %3159 = vmatprep.subr.mxu0 0.0
    %3160 = vmatpush1.msra.mxu0 %v1229
    %3161 = vmatprep.subr.mxu0 0.0
    %3162 = vmatpush1.msra.mxu0 %v1230
    %3163 = vmatprep.subr.mxu0 0.0
    %3164 = vmatpush1.msra.mxu0 %v1231
    %3165 = vmatprep.subr.mxu0 0.0
    %3166 = vmatpush1.msra.mxu0 %v1232
    %3167 = vmatprep.subr.mxu0 0.0
    %3168 = vmatpush1.msra.mxu0 %v1233
    %3169 = vmatprep.subr.mxu0 0.0
    %3170 = vmatpush1.msra.mxu0 %v1234
    %3171 = vmatprep.subr.mxu0 0.0
    %3172 = vmatpush1.msra.mxu0 %v1235
    %3173 = vmatprep.subr.mxu0 0.0
    %3174 = vmatpush1.msra.mxu0 %v1236
    %3175 = vmatprep.subr.mxu0 0.0
    %3176 = vmatpush1.msra.mxu0 %v1237
    %3177 = vmatprep.subr.mxu0 0.0
    %3178 = vmatpush1.msra.mxu0 %v1238
    %3179 = vmatprep.mubr.f32.mxu0 %v1933
    %3180 = vmatmul.mubr.f32.gmra.mrb[0].mxu0 %v1925
    %v3181 = vpop.f32.mrb[0].mxu0
    %v3182 = vadd.f32 %v3112, %v3181
    %v3183 = vpop.f32.mrb[0].mxu0
    %3184 = vdwg.mxu0
    %3185 = vmatprep.subr.mxu0 0.0
    %3186 = vmatpush1.msra.mxu0 %v1239
    %3187 = vmatprep.subr.mxu0 0.0
    %3188 = vmatpush1.msra.mxu0 %v1240
    %3189 = vmatprep.subr.mxu0 0.0
    %3190 = vmatpush1.msra.mxu0 %v1241
    %3191 = vmatprep.subr.mxu0 0.0
    %3192 = vmatpush1.msra.mxu0 %v1242
    %3193 = vmatprep.subr.mxu0 0.0
    %3194 = vmatpush1.msra.mxu0 %v1243
    %3195 = vmatprep.subr.mxu0 0.0
    %3196 = vmatpush1.msra.mxu0 %v1244
    %3197 = vmatprep.subr.mxu0 0.0
    %3198 = vmatpush1.msra.mxu0 %v1245
    %3199 = vmatprep.subr.mxu0 0.0
    %3200 = vmatpush1.msra.mxu0 %v1246
    %3201 = vmatprep.subr.mxu0 0.0
    %3202 = vmatpush1.msra.mxu0 %v1247
    %3203 = vmatprep.subr.mxu0 0.0
    %3204 = vmatpush1.msra.mxu0 %v1248
    %3205 = vmatprep.subr.mxu0 0.0
    %3206 = vmatpush1.msra.mxu0 %v1249
    %3207 = vmatprep.subr.mxu0 0.0
    %3208 = vmatpush1.msra.mxu0 %v1250
    %3209 = vmatprep.subr.mxu0 0.0
    %3210 = vmatpush1.msra.mxu0 %v1251
    %3211 = vmatprep.subr.mxu0 0.0
    %3212 = vmatpush1.msra.mxu0 %v1252
    %3213 = vmatprep.subr.mxu0 0.0
    %3214 = vmatpush1.msra.mxu0 %v1253
    %3215 = vmatprep.subr.mxu0 0.0
    %3216 = vmatpush1.msra.mxu0 %v1254
    %3217 = vmatprep.subr.mxu0 0.0
    %3218 = vmatpush1.msra.mxu0 %v1255
    %3219 = vmatprep.subr.mxu0 0.0
    %3220 = vmatpush1.msra.mxu0 %v1256
    %3221 = vmatprep.subr.mxu0 0.0
    %3222 = vmatpush1.msra.mxu0 %v1257
    %3223 = vmatprep.subr.mxu0 0.0
    %3224 = vmatpush1.msra.mxu0 %v1258
    %3225 = vmatprep.subr.mxu0 0.0
    %3226 = vmatpush1.msra.mxu0 %v1259
    %3227 = vmatprep.subr.mxu0 0.0
    %3228 = vmatpush1.msra.mxu0 %v1260
    %3229 = vmatprep.subr.mxu0 0.0
    %3230 = vmatpush1.msra.mxu0 %v1261
    %3231 = vmatprep.subr.mxu0 0.0
    %3232 = vmatpush1.msra.mxu0 %v1262
    %3233 = vmatprep.subr.mxu0 0.0
    %3234 = vmatpush1.msra.mxu0 %v1263
    %3235 = vmatprep.subr.mxu0 0.0
    %3236 = vmatpush1.msra.mxu0 %v1264
    %3237 = vmatprep.subr.mxu0 0.0
    %3238 = vmatpush1.msra.mxu0 %v1265
    %3239 = vmatprep.subr.mxu0 0.0
    %3240 = vmatpush1.msra.mxu0 %v1266
    %3241 = vmatprep.subr.mxu0 0.0
    %3242 = vmatpush1.msra.mxu0 %v1267
    %3243 = vmatprep.subr.mxu0 0.0
    %3244 = vmatpush1.msra.mxu0 %v1268
    %3245 = vmatprep.subr.mxu0 0.0
    %3246 = vmatpush1.msra.mxu0 %v1269
    %3247 = vmatprep.subr.mxu0 0.0
    %3248 = vmatpush1.msra.mxu0 %v1270
    %3249 = vmatprep.mubr.f32.mxu0 %v1934
    %3250 = vmatmul.mubr.f32.gmra.mrb[0].mxu0 %v1932
    %v3251 = vpop.f32.mrb[0].mxu0
    %v3252 = vadd.f32 %v3182, %v3251
    %v3253 = vpop.f32.mrb[0].mxu0
    %3254 = vdwg.mxu0
    %3255 = vmatprep.subr.mxu0 0.0
    %3256 = vmatpush1.msra.mxu0 %v1271
    %3257 = vmatprep.subr.mxu0 0.0
    %3258 = vmatpush1.msra.mxu0 %v1272
    %3259 = vmatprep.subr.mxu0 0.0
    %3260 = vmatpush1.msra.mxu0 %v1273
    %3261 = vmatprep.subr.mxu0 0.0
    %3262 = vmatpush1.msra.mxu0 %v1274
    %3263 = vmatprep.subr.mxu0 0.0
    %3264 = vmatpush1.msra.mxu0 %v1275
    %3265 = vmatprep.subr.mxu0 0.0
    %3266 = vmatpush1.msra.mxu0 %v1276
    %3267 = vmatprep.subr.mxu0 0.0
    %3268 = vmatpush1.msra.mxu0 %v1277
    %3269 = vmatprep.subr.mxu0 0.0
    %3270 = vmatpush1.msra.mxu0 %v1278
    %3271 = vmatprep.subr.mxu0 0.0
    %3272 = vmatpush1.msra.mxu0 %v1279
    %3273 = vmatprep.subr.mxu0 0.0
    %3274 = vmatpush1.msra.mxu0 %v1280
    %3275 = vmatprep.subr.mxu0 0.0
    %3276 = vmatpush1.msra.mxu0 %v1281
    %3277 = vmatprep.subr.mxu0 0.0
    %3278 = vmatpush1.msra.mxu0 %v1282
    %3279 = vmatprep.subr.mxu0 0.0
    %3280 = vmatpush1.msra.mxu0 %v1283
    %3281 = vmatprep.subr.mxu0 0.0
    %3282 = vmatpush1.msra.mxu0 %v1284
    %3283 = vmatprep.subr.mxu0 0.0
    %3284 = vmatpush1.msra.mxu0 %v1285
    %3285 = vmatprep.subr.mxu0 0.0
    %3286 = vmatpush1.msra.mxu0 %v1286
    %3287 = vmatprep.subr.mxu0 0.0
    %3288 = vmatpush1.msra.mxu0 %v1287
    %3289 = vmatprep.subr.mxu0 0.0
    %3290 = vmatpush1.msra.mxu0 %v1288
    %3291 = vmatprep.subr.mxu0 0.0
    %3292 = vmatpush1.msra.mxu0 %v1289
    %3293 = vmatprep.subr.mxu0 0.0
    %3294 = vmatpush1.msra.mxu0 %v1290
    %3295 = vmatprep.subr.mxu0 0.0
    %3296 = vmatpush1.msra.mxu0 %v1291
    %3297 = vmatprep.subr.mxu0 0.0
    %3298 = vmatpush1.msra.mxu0 %v1292
    %3299 = vmatprep.subr.mxu0 0.0
    %3300 = vmatpush1.msra.mxu0 %v1293
    %3301 = vmatprep.subr.mxu0 0.0
    %3302 = vmatpush1.msra.mxu0 %v1294
    %3303 = vmatprep.subr.mxu0 0.0
    %3304 = vmatpush1.msra.mxu0 %v1295
    %3305 = vmatprep.subr.mxu0 0.0
    %3306 = vmatpush1.msra.mxu0 %v1296
    %3307 = vmatprep.subr.mxu0 0.0
    %3308 = vmatpush1.msra.mxu0 %v1297
    %3309 = vmatprep.subr.mxu0 0.0
    %3310 = vmatpush1.msra.mxu0 %v1298
    %3311 = vmatprep.subr.mxu0 0.0
    %3312 = vmatpush1.msra.mxu0 %v1299
    %3313 = vmatprep.subr.mxu0 0.0
    %3314 = vmatpush1.msra.mxu0 %v1300
    %3315 = vmatprep.subr.mxu0 0.0
    %3316 = vmatpush1.msra.mxu0 %v1301
    %3317 = vmatprep.subr.mxu0 0.0
    %3318 = vmatpush1.msra.mxu0 %v1302
    %3319 = vmatprep.mubr.f32.mxu0 %v1950
    %3320 = vmatmul.mubr.f32.gmra.mrb[0].mxu0 %v1942
    %v3321 = vpop.f32.mrb[0].mxu0
    %v3322 = vadd.f32 %v3252, %v3321
    %v3323 = vpop.f32.mrb[0].mxu0
    %3324 = vdwg.mxu0
    %3325 = vmatprep.subr.mxu0 0.0
    %3326 = vmatpush1.msra.mxu0 %v1303
    %3327 = vmatprep.subr.mxu0 0.0
    %3328 = vmatpush1.msra.mxu0 %v1304
    %3329 = vmatprep.subr.mxu0 0.0
    %3330 = vmatpush1.msra.mxu0 %v1305
    %3331 = vmatprep.subr.mxu0 0.0
    %3332 = vmatpush1.msra.mxu0 %v1306
    %3333 = vmatprep.subr.mxu0 0.0
    %3334 = vmatpush1.msra.mxu0 %v1307
    %3335 = vmatprep.subr.mxu0 0.0
    %3336 = vmatpush1.msra.mxu0 %v1308
    %3337 = vmatprep.subr.mxu0 0.0
    %3338 = vmatpush1.msra.mxu0 %v1309
    %3339 = vmatprep.subr.mxu0 0.0
    %3340 = vmatpush1.msra.mxu0 %v1310
    %3341 = vmatprep.subr.mxu0 0.0
    %3342 = vmatpush1.msra.mxu0 %v1311
    %3343 = vmatprep.subr.mxu0 0.0
    %3344 = vmatpush1.msra.mxu0 %v1312
    %3345 = vmatprep.subr.mxu0 0.0
    %3346 = vmatpush1.msra.mxu0 %v1313
    %3347 = vmatprep.subr.mxu0 0.0
    %3348 = vmatpush1.msra.mxu0 %v1314
    %3349 = vmatprep.subr.mxu0 0.0
    %3350 = vmatpush1.msra.mxu0 %v1315
    %3351 = vmatprep.subr.mxu0 0.0
    %3352 = vmatpush1.msra.mxu0 %v1316
    %3353 = vmatprep.subr.mxu0 0.0
    %3354 = vmatpush1.msra.mxu0 %v1317
    %3355 = vmatprep.subr.mxu0 0.0
    %3356 = vmatpush1.msra.mxu0 %v1318
    %3357 = vmatprep.subr.mxu0 0.0
    %3358 = vmatpush1.msra.mxu0 %v1319
    %3359 = vmatprep.subr.mxu0 0.0
    %3360 = vmatpush1.msra.mxu0 %v1320
    %3361 = vmatprep.subr.mxu0 0.0
    %3362 = vmatpush1.msra.mxu0 %v1321
    %3363 = vmatprep.subr.mxu0 0.0
    %3364 = vmatpush1.msra.mxu0 %v1322
    %3365 = vmatprep.subr.mxu0 0.0
    %3366 = vmatpush1.msra.mxu0 %v1323
    %3367 = vmatprep.subr.mxu0 0.0
    %3368 = vmatpush1.msra.mxu0 %v1324
    %3369 = vmatprep.subr.mxu0 0.0
    %3370 = vmatpush1.msra.mxu0 %v1325
    %3371 = vmatprep.subr.mxu0 0.0
    %3372 = vmatpush1.msra.mxu0 %v1326
    %3373 = vmatprep.subr.mxu0 0.0
    %3374 = vmatpush1.msra.mxu0 %v1327
    %3375 = vmatprep.subr.mxu0 0.0
    %3376 = vmatpush1.msra.mxu0 %v1328
    %3377 = vmatprep.subr.mxu0 0.0
    %3378 = vmatpush1.msra.mxu0 %v1329
    %3379 = vmatprep.subr.mxu0 0.0
    %3380 = vmatpush1.msra.mxu0 %v1330
    %3381 = vmatprep.subr.mxu0 0.0
    %3382 = vmatpush1.msra.mxu0 %v1331
    %3383 = vmatprep.subr.mxu0 0.0
    %3384 = vmatpush1.msra.mxu0 %v1332
    %3385 = vmatprep.subr.mxu0 0.0
    %3386 = vmatpush1.msra.mxu0 %v1333
    %3387 = vmatprep.subr.mxu0 0.0
    %3388 = vmatpush1.msra.mxu0 %v1334
    %3389 = vmatprep.mubr.f32.mxu0 %v1951
    %3390 = vmatmul.mubr.f32.gmra.mrb[0].mxu0 %v1949
    %v3391 = vpop.f32.mrb[0].mxu0
    %v3392 = vadd.f32 %v3322, %v3391
    %v3393 = vpop.f32.mrb[0].mxu0
    %3394 = vdwg.mxu0
    %3395 = vmatprep.subr.mxu0 0.0
    %3396 = vmatpush1.msra.mxu0 %v1335
    %3397 = vmatprep.subr.mxu0 0.0
    %3398 = vmatpush1.msra.mxu0 %v1336
    %3399 = vmatprep.subr.mxu0 0.0
    %3400 = vmatpush1.msra.mxu0 %v1337
    %3401 = vmatprep.subr.mxu0 0.0
    %3402 = vmatpush1.msra.mxu0 %v1338
    %3403 = vmatprep.subr.mxu0 0.0
    %3404 = vmatpush1.msra.mxu0 %v1339
    %3405 = vmatprep.subr.mxu0 0.0
    %3406 = vmatpush1.msra.mxu0 %v1340
    %3407 = vmatprep.subr.mxu0 0.0
    %3408 = vmatpush1.msra.mxu0 %v1341
    %3409 = vmatprep.subr.mxu0 0.0
    %3410 = vmatpush1.msra.mxu0 %v1342
    %3411 = vmatprep.subr.mxu0 0.0
    %3412 = vmatpush1.msra.mxu0 %v1343
    %3413 = vmatprep.subr.mxu0 0.0
    %3414 = vmatpush1.msra.mxu0 %v1344
    %3415 = vmatprep.subr.mxu0 0.0
    %3416 = vmatpush1.msra.mxu0 %v1345
    %3417 = vmatprep.subr.mxu0 0.0
    %3418 = vmatpush1.msra.mxu0 %v1346
    %3419 = vmatprep.subr.mxu0 0.0
    %3420 = vmatpush1.msra.mxu0 %v1347
    %3421 = vmatprep.subr.mxu0 0.0
    %3422 = vmatpush1.msra.mxu0 %v1348
    %3423 = vmatprep.subr.mxu0 0.0
    %3424 = vmatpush1.msra.mxu0 %v1349
    %3425 = vmatprep.subr.mxu0 0.0
    %3426 = vmatpush1.msra.mxu0 %v1350
    %3427 = vmatprep.subr.mxu0 0.0
    %3428 = vmatpush1.msra.mxu0 %v1351
    %3429 = vmatprep.subr.mxu0 0.0
    %3430 = vmatpush1.msra.mxu0 %v1352
    %3431 = vmatprep.subr.mxu0 0.0
    %3432 = vmatpush1.msra.mxu0 %v1353
    %3433 = vmatprep.subr.mxu0 0.0
    %3434 = vmatpush1.msra.mxu0 %v1354
    %3435 = vmatprep.subr.mxu0 0.0
    %3436 = vmatpush1.msra.mxu0 %v1355
    %3437 = vmatprep.subr.mxu0 0.0
    %3438 = vmatpush1.msra.mxu0 %v1356
    %3439 = vmatprep.subr.mxu0 0.0
    %3440 = vmatpush1.msra.mxu0 %v1357
    %3441 = vmatprep.subr.mxu0 0.0
    %3442 = vmatpush1.msra.mxu0 %v1358
    %3443 = vmatprep.subr.mxu0 0.0
    %3444 = vmatpush1.msra.mxu0 %v1359
    %3445 = vmatprep.subr.mxu0 0.0
    %3446 = vmatpush1.msra.mxu0 %v1360
    %3447 = vmatprep.subr.mxu0 0.0
    %3448 = vmatpush1.msra.mxu0 %v1361
    %3449 = vmatprep.subr.mxu0 0.0
    %3450 = vmatpush1.msra.mxu0 %v1362
    %3451 = vmatprep.subr.mxu0 0.0
    %3452 = vmatpush1.msra.mxu0 %v1363
    %3453 = vmatprep.subr.mxu0 0.0
    %3454 = vmatpush1.msra.mxu0 %v1364
    %3455 = vmatprep.subr.mxu0 0.0
    %3456 = vmatpush1.msra.mxu0 %v1365
    %3457 = vmatprep.subr.mxu0 0.0
    %3458 = vmatpush1.msra.mxu0 %v1366
    %3459 = vmatprep.mubr.f32.mxu0 %v1967
    %3460 = vmatmul.mubr.f32.gmra.mrb[0].mxu0 %v1959
    %v3461 = vpop.f32.mrb[0].mxu0
    %v3462 = vadd.f32 %v3392, %v3461
    %v3463 = vpop.f32.mrb[0].mxu0
    %3464 = vdwg.mxu0
    %3465 = vmatprep.subr.mxu0 0.0
    %3466 = vmatpush1.msra.mxu0 %v1367
    %3467 = vmatprep.subr.mxu0 0.0
    %3468 = vmatpush1.msra.mxu0 %v1368
    %3469 = vmatprep.subr.mxu0 0.0
    %3470 = vmatpush1.msra.mxu0 %v1369
    %3471 = vmatprep.subr.mxu0 0.0
    %3472 = vmatpush1.msra.mxu0 %v1370
    %3473 = vmatprep.subr.mxu0 0.0
    %3474 = vmatpush1.msra.mxu0 %v1371
    %3475 = vmatprep.subr.mxu0 0.0
    %3476 = vmatpush1.msra.mxu0 %v1372
    %3477 = vmatprep.subr.mxu0 0.0
    %3478 = vmatpush1.msra.mxu0 %v1373
    %3479 = vmatprep.subr.mxu0 0.0
    %3480 = vmatpush1.msra.mxu0 %v1374
    %3481 = vmatprep.subr.mxu0 0.0
    %3482 = vmatpush1.msra.mxu0 %v1375
    %3483 = vmatprep.subr.mxu0 0.0
    %3484 = vmatpush1.msra.mxu0 %v1376
    %3485 = vmatprep.subr.mxu0 0.0
    %3486 = vmatpush1.msra.mxu0 %v1377
    %3487 = vmatprep.subr.mxu0 0.0
    %3488 = vmatpush1.msra.mxu0 %v1378
    %3489 = vmatprep.subr.mxu0 0.0
    %3490 = vmatpush1.msra.mxu0 %v1379
    %3491 = vmatprep.subr.mxu0 0.0
    %3492 = vmatpush1.msra.mxu0 %v1380
    %3493 = vmatprep.subr.mxu0 0.0
    %3494 = vmatpush1.msra.mxu0 %v1381
    %3495 = vmatprep.subr.mxu0 0.0
    %3496 = vmatpush1.msra.mxu0 %v1382
    %3497 = vmatprep.subr.mxu0 0.0
    %3498 = vmatpush1.msra.mxu0 %v1383
    %3499 = vmatprep.subr.mxu0 0.0
    %3500 = vmatpush1.msra.mxu0 %v1384
    %3501 = vmatprep.subr.mxu0 0.0
    %3502 = vmatpush1.msra.mxu0 %v1385
    %3503 = vmatprep.subr.mxu0 0.0
    %3504 = vmatpush1.msra.mxu0 %v1386
    %3505 = vmatprep.subr.mxu0 0.0
    %3506 = vmatpush1.msra.mxu0 %v1387
    %3507 = vmatprep.subr.mxu0 0.0
    %3508 = vmatpush1.msra.mxu0 %v1388
    %3509 = vmatprep.subr.mxu0 0.0
    %3510 = vmatpush1.msra.mxu0 %v1389
    %3511 = vmatprep.subr.mxu0 0.0
    %3512 = vmatpush1.msra.mxu0 %v1390
    %3513 = vmatprep.subr.mxu0 0.0
    %3514 = vmatpush1.msra.mxu0 %v1391
    %3515 = vmatprep.subr.mxu0 0.0
    %3516 = vmatpush1.msra.mxu0 %v1392
    %3517 = vmatprep.subr.mxu0 0.0
    %3518 = vmatpush1.msra.mxu0 %v1393
    %3519 = vmatprep.subr.mxu0 0.0
    %3520 = vmatpush1.msra.mxu0 %v1394
    %3521 = vmatprep.subr.mxu0 0.0
    %3522 = vmatpush1.msra.mxu0 %v1395
    %3523 = vmatprep.subr.mxu0 0.0
    %3524 = vmatpush1.msra.mxu0 %v1396
    %3525 = vmatprep.subr.mxu0 0.0
    %3526 = vmatpush1.msra.mxu0 %v1397
    %3527 = vmatprep.subr.mxu0 0.0
    %3528 = vmatpush1.msra.mxu0 %v1398
    %3529 = vmatprep.mubr.f32.mxu0 %v1968
    %3530 = vmatmul.mubr.f32.gmra.mrb[0].mxu0 %v1966
    %v3531 = vpop.f32.mrb[0].mxu0
    %v3532 = vadd.f32 %v3462, %v3531
    %v3533 = vpop.f32.mrb[0].mxu0
    %3534 = vdwg.mxu0
    %3535 = vmatprep.subr.mxu0 0.0
    %3536 = vmatpush1.msra.mxu0 %v1399
    %3537 = vmatprep.subr.mxu0 0.0
    %3538 = vmatpush1.msra.mxu0 %v1400
    %3539 = vmatprep.subr.mxu0 0.0
    %3540 = vmatpush1.msra.mxu0 %v1401
    %3541 = vmatprep.subr.mxu0 0.0
    %3542 = vmatpush1.msra.mxu0 %v1402
    %3543 = vmatprep.subr.mxu0 0.0
    %3544 = vmatpush1.msra.mxu0 %v1403
    %3545 = vmatprep.subr.mxu0 0.0
    %3546 = vmatpush1.msra.mxu0 %v1404
    %3547 = vmatprep.subr.mxu0 0.0
    %3548 = vmatpush1.msra.mxu0 %v1405
    %3549 = vmatprep.subr.mxu0 0.0
    %3550 = vmatpush1.msra.mxu0 %v1406
    %3551 = vmatprep.subr.mxu0 0.0
    %3552 = vmatpush1.msra.mxu0 %v1407
    %3553 = vmatprep.subr.mxu0 0.0
    %3554 = vmatpush1.msra.mxu0 %v1408
    %3555 = vmatprep.subr.mxu0 0.0
    %3556 = vmatpush1.msra.mxu0 %v1409
    %3557 = vmatprep.subr.mxu0 0.0
    %3558 = vmatpush1.msra.mxu0 %v1410
    %3559 = vmatprep.subr.mxu0 0.0
    %3560 = vmatpush1.msra.mxu0 %v1411
    %3561 = vmatprep.subr.mxu0 0.0
    %3562 = vmatpush1.msra.mxu0 %v1412
    %3563 = vmatprep.subr.mxu0 0.0
    %3564 = vmatpush1.msra.mxu0 %v1413
    %3565 = vmatprep.subr.mxu0 0.0
    %3566 = vmatpush1.msra.mxu0 %v1414
    %3567 = vmatprep.subr.mxu0 0.0
    %3568 = vmatpush1.msra.mxu0 %v1415
    %3569 = vmatprep.subr.mxu0 0.0
    %3570 = vmatpush1.msra.mxu0 %v1416
    %3571 = vmatprep.subr.mxu0 0.0
    %3572 = vmatpush1.msra.mxu0 %v1417
    %3573 = vmatprep.subr.mxu0 0.0
    %3574 = vmatpush1.msra.mxu0 %v1418
    %3575 = vmatprep.subr.mxu0 0.0
    %3576 = vmatpush1.msra.mxu0 %v1419
    %3577 = vmatprep.subr.mxu0 0.0
    %3578 = vmatpush1.msra.mxu0 %v1420
    %3579 = vmatprep.subr.mxu0 0.0
    %3580 = vmatpush1.msra.mxu0 %v1421
    %3581 = vmatprep.subr.mxu0 0.0
    %3582 = vmatpush1.msra.mxu0 %v1422
    %3583 = vmatprep.subr.mxu0 0.0
    %3584 = vmatpush1.msra.mxu0 %v1423
    %3585 = vmatprep.subr.mxu0 0.0
    %3586 = vmatpush1.msra.mxu0 %v1424
    %3587 = vmatprep.subr.mxu0 0.0
    %3588 = vmatpush1.msra.mxu0 %v1425
    %3589 = vmatprep.subr.mxu0 0.0
    %3590 = vmatpush1.msra.mxu0 %v1426
    %3591 = vmatprep.subr.mxu0 0.0
    %3592 = vmatpush1.msra.mxu0 %v1427
    %3593 = vmatprep.subr.mxu0 0.0
    %3594 = vmatpush1.msra.mxu0 %v1428
    %3595 = vmatprep.subr.mxu0 0.0
    %3596 = vmatpush1.msra.mxu0 %v1429
    %3597 = vmatprep.subr.mxu0 0.0
    %3598 = vmatpush1.msra.mxu0 %v1430
    %3599 = vmatprep.mubr.f32.mxu0 %v1984
    %3600 = vmatmul.mubr.f32.gmra.mrb[0].mxu0 %v1976
    %v3601 = vpop.f32.mrb[0].mxu0
    %v3602 = vadd.f32 %v3532, %v3601
    %v3603 = vpop.f32.mrb[0].mxu0
    %3604 = vdwg.mxu0
    %3605 = vmatprep.subr.mxu0 0.0
    %3606 = vmatpush1.msra.mxu0 %v1431
    %3607 = vmatprep.subr.mxu0 0.0
    %3608 = vmatpush1.msra.mxu0 %v1432
    %3609 = vmatprep.subr.mxu0 0.0
    %3610 = vmatpush1.msra.mxu0 %v1433
    %3611 = vmatprep.subr.mxu0 0.0
    %3612 = vmatpush1.msra.mxu0 %v1434
    %3613 = vmatprep.subr.mxu0 0.0
    %3614 = vmatpush1.msra.mxu0 %v1435
    %3615 = vmatprep.subr.mxu0 0.0
    %3616 = vmatpush1.msra.mxu0 %v1436
    %3617 = vmatprep.subr.mxu0 0.0
    %3618 = vmatpush1.msra.mxu0 %v1437
    %3619 = vmatprep.subr.mxu0 0.0
    %3620 = vmatpush1.msra.mxu0 %v1438
    %3621 = vmatprep.subr.mxu0 0.0
    %3622 = vmatpush1.msra.mxu0 %v1439
    %3623 = vmatprep.subr.mxu0 0.0
    %3624 = vmatpush1.msra.mxu0 %v1440
    %3625 = vmatprep.subr.mxu0 0.0
    %3626 = vmatpush1.msra.mxu0 %v1441
    %3627 = vmatprep.subr.mxu0 0.0
    %3628 = vmatpush1.msra.mxu0 %v1442
    %3629 = vmatprep.subr.mxu0 0.0
    %3630 = vmatpush1.msra.mxu0 %v1443
    %3631 = vmatprep.subr.mxu0 0.0
    %3632 = vmatpush1.msra.mxu0 %v1444
    %3633 = vmatprep.subr.mxu0 0.0
    %3634 = vmatpush1.msra.mxu0 %v1445
    %3635 = vmatprep.subr.mxu0 0.0
    %3636 = vmatpush1.msra.mxu0 %v1446
    %3637 = vmatprep.subr.mxu0 0.0
    %3638 = vmatpush1.msra.mxu0 %v1447
    %3639 = vmatprep.subr.mxu0 0.0
    %3640 = vmatpush1.msra.mxu0 %v1448
    %3641 = vmatprep.subr.mxu0 0.0
    %3642 = vmatpush1.msra.mxu0 %v1449
    %3643 = vmatprep.subr.mxu0 0.0
    %3644 = vmatpush1.msra.mxu0 %v1450
    %3645 = vmatprep.subr.mxu0 0.0
    %3646 = vmatpush1.msra.mxu0 %v1451
    %3647 = vmatprep.subr.mxu0 0.0
    %3648 = vmatpush1.msra.mxu0 %v1452
    %3649 = vmatprep.subr.mxu0 0.0
    %3650 = vmatpush1.msra.mxu0 %v1453
    %3651 = vmatprep.subr.mxu0 0.0
    %3652 = vmatpush1.msra.mxu0 %v1454
    %3653 = vmatprep.subr.mxu0 0.0
    %3654 = vmatpush1.msra.mxu0 %v1455
    %3655 = vmatprep.subr.mxu0 0.0
    %3656 = vmatpush1.msra.mxu0 %v1456
    %3657 = vmatprep.subr.mxu0 0.0
    %3658 = vmatpush1.msra.mxu0 %v1457
    %3659 = vmatprep.subr.mxu0 0.0
    %3660 = vmatpush1.msra.mxu0 %v1458
    %3661 = vmatprep.subr.mxu0 0.0
    %3662 = vmatpush1.msra.mxu0 %v1459
    %3663 = vmatprep.subr.mxu0 0.0
    %3664 = vmatpush1.msra.mxu0 %v1460
    %3665 = vmatprep.subr.mxu0 0.0
    %3666 = vmatpush1.msra.mxu0 %v1461
    %3667 = vmatprep.subr.mxu0 0.0
    %3668 = vmatpush1.msra.mxu0 %v1462
    %3669 = vmatprep.mubr.f32.mxu0 %v1985
    %3670 = vmatmul.mubr.f32.gmra.mrb[0].mxu0 %v1983
    %v3671 = vpop.f32.mrb[0].mxu0
    %v3672 = vadd.f32 %v3602, %v3671
    %v3673 = vpop.f32.mrb[0].mxu0
    %3674 = vdwg.mxu0
    %3675 = vmatprep.subr.mxu0 0.0
    %3676 = vmatpush1.msra.mxu0 %v1463
    %3677 = vmatprep.subr.mxu0 0.0
    %3678 = vmatpush1.msra.mxu0 %v1464
    %3679 = vmatprep.subr.mxu0 0.0
    %3680 = vmatpush1.msra.mxu0 %v1465
    %3681 = vmatprep.subr.mxu0 0.0
    %3682 = vmatpush1.msra.mxu0 %v1466
    %3683 = vmatprep.subr.mxu0 0.0
    %3684 = vmatpush1.msra.mxu0 %v1467
    %3685 = vmatprep.subr.mxu0 0.0
    %3686 = vmatpush1.msra.mxu0 %v1468
    %3687 = vmatprep.subr.mxu0 0.0
    %3688 = vmatpush1.msra.mxu0 %v1469
    %3689 = vmatprep.subr.mxu0 0.0
    %3690 = vmatpush1.msra.mxu0 %v1470
    %3691 = vmatprep.subr.mxu0 0.0
    %3692 = vmatpush1.msra.mxu0 %v1471
    %3693 = vmatprep.subr.mxu0 0.0
    %3694 = vmatpush1.msra.mxu0 %v1472
    %3695 = vmatprep.subr.mxu0 0.0
    %3696 = vmatpush1.msra.mxu0 %v1473
    %3697 = vmatprep.subr.mxu0 0.0
    %3698 = vmatpush1.msra.mxu0 %v1474
    %3699 = vmatprep.subr.mxu0 0.0
    %3700 = vmatpush1.msra.mxu0 %v1475
    %3701 = vmatprep.subr.mxu0 0.0
    %3702 = vmatpush1.msra.mxu0 %v1476
    %3703 = vmatprep.subr.mxu0 0.0
    %3704 = vmatpush1.msra.mxu0 %v1477
    %3705 = vmatprep.subr.mxu0 0.0
    %3706 = vmatpush1.msra.mxu0 %v1478
    %3707 = vmatprep.subr.mxu0 0.0
    %3708 = vmatpush1.msra.mxu0 %v1479
    %3709 = vmatprep.subr.mxu0 0.0
    %3710 = vmatpush1.msra.mxu0 %v1480
    %3711 = vmatprep.subr.mxu0 0.0
    %3712 = vmatpush1.msra.mxu0 %v1481
    %3713 = vmatprep.subr.mxu0 0.0
    %3714 = vmatpush1.msra.mxu0 %v1482
    %3715 = vmatprep.subr.mxu0 0.0
    %3716 = vmatpush1.msra.mxu0 %v1483
    %3717 = vmatprep.subr.mxu0 0.0
    %3718 = vmatpush1.msra.mxu0 %v1484
    %3719 = vmatprep.subr.mxu0 0.0
    %3720 = vmatpush1.msra.mxu0 %v1485
    %3721 = vmatprep.subr.mxu0 0.0
    %3722 = vmatpush1.msra.mxu0 %v1486
    %3723 = vmatprep.subr.mxu0 0.0
    %3724 = vmatpush1.msra.mxu0 %v1487
    %3725 = vmatprep.subr.mxu0 0.0
    %3726 = vmatpush1.msra.mxu0 %v1488
    %3727 = vmatprep.subr.mxu0 0.0
    %3728 = vmatpush1.msra.mxu0 %v1489
    %3729 = vmatprep.subr.mxu0 0.0
    %3730 = vmatpush1.msra.mxu0 %v1490
    %3731 = vmatprep.subr.mxu0 0.0
    %3732 = vmatpush1.msra.mxu0 %v1491
    %3733 = vmatprep.subr.mxu0 0.0
    %3734 = vmatpush1.msra.mxu0 %v1492
    %3735 = vmatprep.subr.mxu0 0.0
    %3736 = vmatpush1.msra.mxu0 %v1493
    %3737 = vmatprep.subr.mxu0 0.0
    %3738 = vmatpush1.msra.mxu0 %v1494
    %3739 = vmatprep.mubr.f32.mxu0 %v2001
    %3740 = vmatmul.mubr.f32.gmra.mrb[0].mxu0 %v1993
    %v3741 = vpop.f32.mrb[0].mxu0
    %v3742 = vadd.f32 %v3672, %v3741
    %v3743 = vpop.f32.mrb[0].mxu0
    %3744 = vdwg.mxu0
    %3745 = vmatprep.subr.mxu0 0.0
    %3746 = vmatpush1.msra.mxu0 %v1495
    %3747 = vmatprep.subr.mxu0 0.0
    %3748 = vmatpush1.msra.mxu0 %v1496
    %3749 = vmatprep.subr.mxu0 0.0
    %3750 = vmatpush1.msra.mxu0 %v1497
    %3751 = vmatprep.subr.mxu0 0.0
    %3752 = vmatpush1.msra.mxu0 %v1498
    %3753 = vmatprep.subr.mxu0 0.0
    %3754 = vmatpush1.msra.mxu0 %v1499
    %3755 = vmatprep.subr.mxu0 0.0
    %3756 = vmatpush1.msra.mxu0 %v1500
    %3757 = vmatprep.subr.mxu0 0.0
    %3758 = vmatpush1.msra.mxu0 %v1501
    %3759 = vmatprep.subr.mxu0 0.0
    %3760 = vmatpush1.msra.mxu0 %v1502
    %3761 = vmatprep.subr.mxu0 0.0
    %3762 = vmatpush1.msra.mxu0 %v1503
    %3763 = vmatprep.subr.mxu0 0.0
    %3764 = vmatpush1.msra.mxu0 %v1504
    %3765 = vmatprep.subr.mxu0 0.0
    %3766 = vmatpush1.msra.mxu0 %v1505
    %3767 = vmatprep.subr.mxu0 0.0
    %3768 = vmatpush1.msra.mxu0 %v1506
    %3769 = vmatprep.subr.mxu0 0.0
    %3770 = vmatpush1.msra.mxu0 %v1507
    %3771 = vmatprep.subr.mxu0 0.0
    %3772 = vmatpush1.msra.mxu0 %v1508
    %3773 = vmatprep.subr.mxu0 0.0
    %3774 = vmatpush1.msra.mxu0 %v1509
    %3775 = vmatprep.subr.mxu0 0.0
    %3776 = vmatpush1.msra.mxu0 %v1510
    %3777 = vmatprep.subr.mxu0 0.0
    %3778 = vmatpush1.msra.mxu0 %v1511
    %3779 = vmatprep.subr.mxu0 0.0
    %3780 = vmatpush1.msra.mxu0 %v1512
    %3781 = vmatprep.subr.mxu0 0.0
    %3782 = vmatpush1.msra.mxu0 %v1513
    %3783 = vmatprep.subr.mxu0 0.0
    %3784 = vmatpush1.msra.mxu0 %v1514
    %3785 = vmatprep.subr.mxu0 0.0
    %3786 = vmatpush1.msra.mxu0 %v1515
    %3787 = vmatprep.subr.mxu0 0.0
    %3788 = vmatpush1.msra.mxu0 %v1516
    %3789 = vmatprep.subr.mxu0 0.0
    %3790 = vmatpush1.msra.mxu0 %v1517
    %3791 = vmatprep.subr.mxu0 0.0
    %3792 = vmatpush1.msra.mxu0 %v1518
    %3793 = vmatprep.subr.mxu0 0.0
    %3794 = vmatpush1.msra.mxu0 %v1519
    %3795 = vmatprep.subr.mxu0 0.0
    %3796 = vmatpush1.msra.mxu0 %v1520
    %3797 = vmatprep.subr.mxu0 0.0
    %3798 = vmatpush1.msra.mxu0 %v1521
    %3799 = vmatprep.subr.mxu0 0.0
    %3800 = vmatpush1.msra.mxu0 %v1522
    %3801 = vmatprep.subr.mxu0 0.0
    %3802 = vmatpush1.msra.mxu0 %v1523
    %3803 = vmatprep.subr.mxu0 0.0
    %3804 = vmatpush1.msra.mxu0 %v1524
    %3805 = vmatprep.subr.mxu0 0.0
    %3806 = vmatpush1.msra.mxu0 %v1525
    %3807 = vmatprep.subr.mxu0 0.0
    %3808 = vmatpush1.msra.mxu0 %v1526
    %3809 = vmatprep.mubr.f32.mxu0 %v2002
    %3810 = vmatmul.mubr.f32.gmra.mrb[0].mxu0 %v2000
    %v3811 = vpop.f32.mrb[0].mxu0
    %v3812 = vadd.f32 %v3742, %v3811
    %v3813 = vpop.f32.mrb[0].mxu0
    %3814 = vdwg.mxu0
    %3815 = vmatprep.subr.mxu0 0.0
    %3816 = vmatpush1.msra.mxu0 %v1527
    %3817 = vmatprep.subr.mxu0 0.0
    %3818 = vmatpush1.msra.mxu0 %v1528
    %3819 = vmatprep.subr.mxu0 0.0
    %3820 = vmatpush1.msra.mxu0 %v1529
    %3821 = vmatprep.subr.mxu0 0.0
    %3822 = vmatpush1.msra.mxu0 %v1530
    %3823 = vmatprep.subr.mxu0 0.0
    %3824 = vmatpush1.msra.mxu0 %v1531
    %3825 = vmatprep.subr.mxu0 0.0
    %3826 = vmatpush1.msra.mxu0 %v1532
    %3827 = vmatprep.subr.mxu0 0.0
    %3828 = vmatpush1.msra.mxu0 %v1533
    %3829 = vmatprep.subr.mxu0 0.0
    %3830 = vmatpush1.msra.mxu0 %v1534
    %3831 = vmatprep.subr.mxu0 0.0
    %3832 = vmatpush1.msra.mxu0 %v1535
    %3833 = vmatprep.subr.mxu0 0.0
    %3834 = vmatpush1.msra.mxu0 %v1536
    %3835 = vmatprep.subr.mxu0 0.0
    %3836 = vmatpush1.msra.mxu0 %v1537
    %3837 = vmatprep.subr.mxu0 0.0
    %3838 = vmatpush1.msra.mxu0 %v1538
    %3839 = vmatprep.subr.mxu0 0.0
    %3840 = vmatpush1.msra.mxu0 %v1539
    %3841 = vmatprep.subr.mxu0 0.0
    %3842 = vmatpush1.msra.mxu0 %v1540
    %3843 = vmatprep.subr.mxu0 0.0
    %3844 = vmatpush1.msra.mxu0 %v1541
    %3845 = vmatprep.subr.mxu0 0.0
    %3846 = vmatpush1.msra.mxu0 %v1542
    %3847 = vmatprep.subr.mxu0 0.0
    %3848 = vmatpush1.msra.mxu0 %v1543
    %3849 = vmatprep.subr.mxu0 0.0
    %3850 = vmatpush1.msra.mxu0 %v1544
    %3851 = vmatprep.subr.mxu0 0.0
    %3852 = vmatpush1.msra.mxu0 %v1545
    %3853 = vmatprep.subr.mxu0 0.0
    %3854 = vmatpush1.msra.mxu0 %v1546
    %3855 = vmatprep.subr.mxu0 0.0
    %3856 = vmatpush1.msra.mxu0 %v1547
    %3857 = vmatprep.subr.mxu0 0.0
    %3858 = vmatpush1.msra.mxu0 %v1548
    %3859 = vmatprep.subr.mxu0 0.0
    %3860 = vmatpush1.msra.mxu0 %v1549
    %3861 = vmatprep.subr.mxu0 0.0
    %3862 = vmatpush1.msra.mxu0 %v1550
    %3863 = vmatprep.subr.mxu0 0.0
    %3864 = vmatpush1.msra.mxu0 %v1551
    %3865 = vmatprep.subr.mxu0 0.0
    %3866 = vmatpush1.msra.mxu0 %v1552
    %3867 = vmatprep.subr.mxu0 0.0
    %3868 = vmatpush1.msra.mxu0 %v1553
    %3869 = vmatprep.subr.mxu0 0.0
    %3870 = vmatpush1.msra.mxu0 %v1554
    %3871 = vmatprep.subr.mxu0 0.0
    %3872 = vmatpush1.msra.mxu0 %v1555
    %3873 = vmatprep.subr.mxu0 0.0
    %3874 = vmatpush1.msra.mxu0 %v1556
    %3875 = vmatprep.subr.mxu0 0.0
    %3876 = vmatpush1.msra.mxu0 %v1557
    %3877 = vmatprep.subr.mxu0 0.0
    %3878 = vmatpush1.msra.mxu0 %v1558
    %3879 = vmatprep.mubr.f32.mxu0 %v2018
    %3880 = vmatmul.mubr.f32.gmra.mrb[0].mxu0 %v2010
    %v3881 = vpop.f32.mrb[0].mxu0
    %v3882 = vadd.f32 %v3812, %v3881
    %v3883 = vpop.f32.mrb[0].mxu0
    %3884 = vdwg.mxu0
    %3885 = vmatprep.subr.mxu0 0.0
    %3886 = vmatpush1.msra.mxu0 %v1559
    %3887 = vmatprep.subr.mxu0 0.0
    %3888 = vmatpush1.msra.mxu0 %v1560
    %3889 = vmatprep.subr.mxu0 0.0
    %3890 = vmatpush1.msra.mxu0 %v1561
    %3891 = vmatprep.subr.mxu0 0.0
    %3892 = vmatpush1.msra.mxu0 %v1562
    %3893 = vmatprep.subr.mxu0 0.0
    %3894 = vmatpush1.msra.mxu0 %v1563
    %3895 = vmatprep.subr.mxu0 0.0
    %3896 = vmatpush1.msra.mxu0 %v1564
    %3897 = vmatprep.subr.mxu0 0.0
    %3898 = vmatpush1.msra.mxu0 %v1565
    %3899 = vmatprep.subr.mxu0 0.0
    %3900 = vmatpush1.msra.mxu0 %v1566
    %3901 = vmatprep.subr.mxu0 0.0
    %3902 = vmatpush1.msra.mxu0 %v1567
    %3903 = vmatprep.subr.mxu0 0.0
    %3904 = vmatpush1.msra.mxu0 %v1568
    %3905 = vmatprep.subr.mxu0 0.0
    %3906 = vmatpush1.msra.mxu0 %v1569
    %3907 = vmatprep.subr.mxu0 0.0
    %3908 = vmatpush1.msra.mxu0 %v1570
    %3909 = vmatprep.subr.mxu0 0.0
    %3910 = vmatpush1.msra.mxu0 %v1571
    %3911 = vmatprep.subr.mxu0 0.0
    %3912 = vmatpush1.msra.mxu0 %v1572
    %3913 = vmatprep.subr.mxu0 0.0
    %3914 = vmatpush1.msra.mxu0 %v1573
    %3915 = vmatprep.subr.mxu0 0.0
    %3916 = vmatpush1.msra.mxu0 %v1574
    %3917 = vmatprep.subr.mxu0 0.0
    %3918 = vmatpush1.msra.mxu0 %v1575
    %3919 = vmatprep.subr.mxu0 0.0
    %3920 = vmatpush1.msra.mxu0 %v1576
    %3921 = vmatprep.subr.mxu0 0.0
    %3922 = vmatpush1.msra.mxu0 %v1577
    %3923 = vmatprep.subr.mxu0 0.0
    %3924 = vmatpush1.msra.mxu0 %v1578
    %3925 = vmatprep.subr.mxu0 0.0
    %3926 = vmatpush1.msra.mxu0 %v1579
    %3927 = vmatprep.subr.mxu0 0.0
    %3928 = vmatpush1.msra.mxu0 %v1580
    %3929 = vmatprep.subr.mxu0 0.0
    %3930 = vmatpush1.msra.mxu0 %v1581
    %3931 = vmatprep.subr.mxu0 0.0
    %3932 = vmatpush1.msra.mxu0 %v1582
    %3933 = vmatprep.subr.mxu0 0.0
    %3934 = vmatpush1.msra.mxu0 %v1583
    %3935 = vmatprep.subr.mxu0 0.0
    %3936 = vmatpush1.msra.mxu0 %v1584
    %3937 = vmatprep.subr.mxu0 0.0
    %3938 = vmatpush1.msra.mxu0 %v1585
    %3939 = vmatprep.subr.mxu0 0.0
    %3940 = vmatpush1.msra.mxu0 %v1586
    %3941 = vmatprep.subr.mxu0 0.0
    %3942 = vmatpush1.msra.mxu0 %v1587
    %3943 = vmatprep.subr.mxu0 0.0
    %3944 = vmatpush1.msra.mxu0 %v1588
    %3945 = vmatprep.subr.mxu0 0.0
    %3946 = vmatpush1.msra.mxu0 %v1589
    %3947 = vmatprep.subr.mxu0 0.0
    %3948 = vmatpush1.msra.mxu0 %v1590
    %3949 = vmatprep.mubr.f32.mxu0 %v2019
    %3950 = vmatmul.mubr.f32.gmra.mrb[0].mxu0 %v2017
    %v3951 = vpop.f32.mrb[0].mxu0
    %v3952 = vadd.f32 %v3882, %v3951
    %v3953 = vpop.f32.mrb[0].mxu0
    %3954 = vdwg.mxu0
    %3955 = vmatprep.subr.mxu0 0.0
    %3956 = vmatpush1.msra.mxu0 %v1591
    %3957 = vmatprep.subr.mxu0 0.0
    %3958 = vmatpush1.msra.mxu0 %v1592
    %3959 = vmatprep.subr.mxu0 0.0
    %3960 = vmatpush1.msra.mxu0 %v1593
    %3961 = vmatprep.subr.mxu0 0.0
    %3962 = vmatpush1.msra.mxu0 %v1594
    %3963 = vmatprep.subr.mxu0 0.0
    %3964 = vmatpush1.msra.mxu0 %v1595
    %3965 = vmatprep.subr.mxu0 0.0
    %3966 = vmatpush1.msra.mxu0 %v1596
    %3967 = vmatprep.subr.mxu0 0.0
    %3968 = vmatpush1.msra.mxu0 %v1597
    %3969 = vmatprep.subr.mxu0 0.0
    %3970 = vmatpush1.msra.mxu0 %v1598
    %3971 = vmatprep.subr.mxu0 0.0
    %3972 = vmatpush1.msra.mxu0 %v1599
    %3973 = vmatprep.subr.mxu0 0.0
    %3974 = vmatpush1.msra.mxu0 %v1600
    %3975 = vmatprep.subr.mxu0 0.0
    %3976 = vmatpush1.msra.mxu0 %v1601
    %3977 = vmatprep.subr.mxu0 0.0
    %3978 = vmatpush1.msra.mxu0 %v1602
    %3979 = vmatprep.subr.mxu0 0.0
    %3980 = vmatpush1.msra.mxu0 %v1603
    %3981 = vmatprep.subr.mxu0 0.0
    %3982 = vmatpush1.msra.mxu0 %v1604
    %3983 = vmatprep.subr.mxu0 0.0
    %3984 = vmatpush1.msra.mxu0 %v1605
    %3985 = vmatprep.subr.mxu0 0.0
    %3986 = vmatpush1.msra.mxu0 %v1606
    %3987 = vmatprep.subr.mxu0 0.0
    %3988 = vmatpush1.msra.mxu0 %v1607
    %3989 = vmatprep.subr.mxu0 0.0
    %3990 = vmatpush1.msra.mxu0 %v1608
    %3991 = vmatprep.subr.mxu0 0.0
    %3992 = vmatpush1.msra.mxu0 %v1609
    %3993 = vmatprep.subr.mxu0 0.0
    %3994 = vmatpush1.msra.mxu0 %v1610
    %3995 = vmatprep.subr.mxu0 0.0
    %3996 = vmatpush1.msra.mxu0 %v1611
    %3997 = vmatprep.subr.mxu0 0.0
    %3998 = vmatpush1.msra.mxu0 %v1612
    %3999 = vmatprep.subr.mxu0 0.0
    %4000 = vmatpush1.msra.mxu0 %v1613
    %4001 = vmatprep.subr.mxu0 0.0
    %4002 = vmatpush1.msra.mxu0 %v1614
    %4003 = vmatprep.subr.mxu0 0.0
    %4004 = vmatpush1.msra.mxu0 %v1615
    %4005 = vmatprep.subr.mxu0 0.0
    %4006 = vmatpush1.msra.mxu0 %v1616
    %4007 = vmatprep.subr.mxu0 0.0
    %4008 = vmatpush1.msra.mxu0 %v1617
    %4009 = vmatprep.subr.mxu0 0.0
    %4010 = vmatpush1.msra.mxu0 %v1618
    %4011 = vmatprep.subr.mxu0 0.0
    %4012 = vmatpush1.msra.mxu0 %v1619
    %4013 = vmatprep.subr.mxu0 0.0
    %4014 = vmatpush1.msra.mxu0 %v1620
    %4015 = vmatprep.subr.mxu0 0.0
    %4016 = vmatpush1.msra.mxu0 %v1621
    %4017 = vmatprep.subr.mxu0 0.0
    %4018 = vmatpush1.msra.mxu0 %v1622
    %4019 = vmatprep.mubr.f32.mxu0 %v2035
    %4020 = vmatmul.mubr.f32.gmra.mrb[0].mxu0 %v2027
    %v4021 = vpop.f32.mrb[0].mxu0
    %v4022 = vadd.f32 %v3952, %v4021
    %v4023 = vpop.f32.mrb[0].mxu0
    %4024 = vdwg.mxu0
    %4025 = vmatprep.subr.mxu0 0.0
    %4026 = vmatpush1.msra.mxu0 %v1623
    %4027 = vmatprep.subr.mxu0 0.0
    %4028 = vmatpush1.msra.mxu0 %v1624
    %4029 = vmatprep.subr.mxu0 0.0
    %4030 = vmatpush1.msra.mxu0 %v1625
    %4031 = vmatprep.subr.mxu0 0.0
    %4032 = vmatpush1.msra.mxu0 %v1626
    %4033 = vmatprep.subr.mxu0 0.0
    %4034 = vmatpush1.msra.mxu0 %v1627
    %4035 = vmatprep.subr.mxu0 0.0
    %4036 = vmatpush1.msra.mxu0 %v1628
    %4037 = vmatprep.subr.mxu0 0.0
    %4038 = vmatpush1.msra.mxu0 %v1629
    %4039 = vmatprep.subr.mxu0 0.0
    %4040 = vmatpush1.msra.mxu0 %v1630
    %4041 = vmatprep.subr.mxu0 0.0
    %4042 = vmatpush1.msra.mxu0 %v1631
    %4043 = vmatprep.subr.mxu0 0.0
    %4044 = vmatpush1.msra.mxu0 %v1632
    %4045 = vmatprep.subr.mxu0 0.0
    %4046 = vmatpush1.msra.mxu0 %v1633
    %4047 = vmatprep.subr.mxu0 0.0
    %4048 = vmatpush1.msra.mxu0 %v1634
    %4049 = vmatprep.subr.mxu0 0.0
    %4050 = vmatpush1.msra.mxu0 %v1635
    %4051 = vmatprep.subr.mxu0 0.0
    %4052 = vmatpush1.msra.mxu0 %v1636
    %4053 = vmatprep.subr.mxu0 0.0
    %4054 = vmatpush1.msra.mxu0 %v1637
    %4055 = vmatprep.subr.mxu0 0.0
    %4056 = vmatpush1.msra.mxu0 %v1638
    %4057 = vmatprep.subr.mxu0 0.0
    %4058 = vmatpush1.msra.mxu0 %v1639
    %4059 = vmatprep.subr.mxu0 0.0
    %4060 = vmatpush1.msra.mxu0 %v1640
    %4061 = vmatprep.subr.mxu0 0.0
    %4062 = vmatpush1.msra.mxu0 %v1641
    %4063 = vmatprep.subr.mxu0 0.0
    %4064 = vmatpush1.msra.mxu0 %v1642
    %4065 = vmatprep.subr.mxu0 0.0
    %4066 = vmatpush1.msra.mxu0 %v1643
    %4067 = vmatprep.subr.mxu0 0.0
    %4068 = vmatpush1.msra.mxu0 %v1644
    %4069 = vmatprep.subr.mxu0 0.0
    %4070 = vmatpush1.msra.mxu0 %v1645
    %4071 = vmatprep.subr.mxu0 0.0
    %4072 = vmatpush1.msra.mxu0 %v1646
    %4073 = vmatprep.subr.mxu0 0.0
    %4074 = vmatpush1.msra.mxu0 %v1647
    %4075 = vmatprep.subr.mxu0 0.0
    %4076 = vmatpush1.msra.mxu0 %v1648
    %4077 = vmatprep.subr.mxu0 0.0
    %4078 = vmatpush1.msra.mxu0 %v1649
    %4079 = vmatprep.subr.mxu0 0.0
    %4080 = vmatpush1.msra.mxu0 %v1650
    %4081 = vmatprep.subr.mxu0 0.0
    %4082 = vmatpush1.msra.mxu0 %v1651
    %4083 = vmatprep.subr.mxu0 0.0
    %4084 = vmatpush1.msra.mxu0 %v1652
    %4085 = vmatprep.subr.mxu0 0.0
    %4086 = vmatpush1.msra.mxu0 %v1653
    %4087 = vmatprep.subr.mxu0 0.0
    %4088 = vmatpush1.msra.mxu0 %v1654
    %4089 = vmatprep.mubr.f32.mxu0 %v2036
    %4090 = vmatmul.mubr.f32.gmra.mrb[0].mxu0 %v2034
    %v4091 = vpop.f32.mrb[0].mxu0
    %v4092 = vadd.f32 %v4022, %v4091
    %v4093 = vpop.f32.mrb[0].mxu0
    %4094 = vdwg.mxu0
    %4095 = vmatprep.subr.mxu0 0.0
    %4096 = vmatpush1.msra.mxu0 %v1655
    %4097 = vmatprep.subr.mxu0 0.0
    %4098 = vmatpush1.msra.mxu0 %v1656
    %4099 = vmatprep.subr.mxu0 0.0
    %4100 = vmatpush1.msra.mxu0 %v1657
    %4101 = vmatprep.subr.mxu0 0.0
    %4102 = vmatpush1.msra.mxu0 %v1658
    %4103 = vmatprep.subr.mxu0 0.0
    %4104 = vmatpush1.msra.mxu0 %v1659
    %4105 = vmatprep.subr.mxu0 0.0
    %4106 = vmatpush1.msra.mxu0 %v1660
    %4107 = vmatprep.subr.mxu0 0.0
    %4108 = vmatpush1.msra.mxu0 %v1661
    %4109 = vmatprep.subr.mxu0 0.0
    %4110 = vmatpush1.msra.mxu0 %v1662
    %4111 = vmatprep.subr.mxu0 0.0
    %4112 = vmatpush1.msra.mxu0 %v1663
    %4113 = vmatprep.subr.mxu0 0.0
    %4114 = vmatpush1.msra.mxu0 %v1664
    %4115 = vmatprep.subr.mxu0 0.0
    %4116 = vmatpush1.msra.mxu0 %v1665
    %4117 = vmatprep.subr.mxu0 0.0
    %4118 = vmatpush1.msra.mxu0 %v1666
    %4119 = vmatprep.subr.mxu0 0.0
    %4120 = vmatpush1.msra.mxu0 %v1667
    %4121 = vmatprep.subr.mxu0 0.0
    %4122 = vmatpush1.msra.mxu0 %v1668
    %4123 = vmatprep.subr.mxu0 0.0
    %4124 = vmatpush1.msra.mxu0 %v1669
    %4125 = vmatprep.subr.mxu0 0.0
    %4126 = vmatpush1.msra.mxu0 %v1670
    %4127 = vmatprep.subr.mxu0 0.0
    %4128 = vmatpush1.msra.mxu0 %v1671
    %4129 = vmatprep.subr.mxu0 0.0
    %4130 = vmatpush1.msra.mxu0 %v1672
    %4131 = vmatprep.subr.mxu0 0.0
    %4132 = vmatpush1.msra.mxu0 %v1673
    %4133 = vmatprep.subr.mxu0 0.0
    %4134 = vmatpush1.msra.mxu0 %v1674
    %4135 = vmatprep.subr.mxu0 0.0
    %4136 = vmatpush1.msra.mxu0 %v1675
    %4137 = vmatprep.subr.mxu0 0.0
    %4138 = vmatpush1.msra.mxu0 %v1676
    %4139 = vmatprep.subr.mxu0 0.0
    %4140 = vmatpush1.msra.mxu0 %v1677
    %4141 = vmatprep.subr.mxu0 0.0
    %4142 = vmatpush1.msra.mxu0 %v1678
    %4143 = vmatprep.subr.mxu0 0.0
    %4144 = vmatpush1.msra.mxu0 %v1679
    %4145 = vmatprep.subr.mxu0 0.0
    %4146 = vmatpush1.msra.mxu0 %v1680
    %4147 = vmatprep.subr.mxu0 0.0
    %4148 = vmatpush1.msra.mxu0 %v1681
    %4149 = vmatprep.subr.mxu0 0.0
    %4150 = vmatpush1.msra.mxu0 %v1682
    %4151 = vmatprep.subr.mxu0 0.0
    %4152 = vmatpush1.msra.mxu0 %v1683
    %4153 = vmatprep.subr.mxu0 0.0
    %4154 = vmatpush1.msra.mxu0 %v1684
    %4155 = vmatprep.subr.mxu0 0.0
    %4156 = vmatpush1.msra.mxu0 %v1685
    %4157 = vmatprep.subr.mxu0 0.0
    %4158 = vmatpush1.msra.mxu0 %v1686
    %4159 = vmatprep.mubr.f32.mxu0 %v2052
    %4160 = vmatmul.mubr.f32.gmra.mrb[0].mxu0 %v2044
    %v4161 = vpop.f32.mrb[0].mxu0
    %v4162 = vadd.f32 %v4092, %v4161
    %v4163 = vpop.f32.mrb[0].mxu0
    %4164 = vdwg.mxu0
    %4165 = vmatprep.subr.mxu0 0.0
    %4166 = vmatpush1.msra.mxu0 %v1687
    %4167 = vmatprep.subr.mxu0 0.0
    %4168 = vmatpush1.msra.mxu0 %v1688
    %4169 = vmatprep.subr.mxu0 0.0
    %4170 = vmatpush1.msra.mxu0 %v1689
    %4171 = vmatprep.subr.mxu0 0.0
    %4172 = vmatpush1.msra.mxu0 %v1690
    %4173 = vmatprep.subr.mxu0 0.0
    %4174 = vmatpush1.msra.mxu0 %v1691
    %4175 = vmatprep.subr.mxu0 0.0
    %4176 = vmatpush1.msra.mxu0 %v1692
    %4177 = vmatprep.subr.mxu0 0.0
    %4178 = vmatpush1.msra.mxu0 %v1693
    %4179 = vmatprep.subr.mxu0 0.0
    %4180 = vmatpush1.msra.mxu0 %v1694
    %4181 = vmatprep.subr.mxu0 0.0
    %4182 = vmatpush1.msra.mxu0 %v1695
    %4183 = vmatprep.subr.mxu0 0.0
    %4184 = vmatpush1.msra.mxu0 %v1696
    %4185 = vmatprep.subr.mxu0 0.0
    %4186 = vmatpush1.msra.mxu0 %v1697
    %4187 = vmatprep.subr.mxu0 0.0
    %4188 = vmatpush1.msra.mxu0 %v1698
    %4189 = vmatprep.subr.mxu0 0.0
    %4190 = vmatpush1.msra.mxu0 %v1699
    %4191 = vmatprep.subr.mxu0 0.0
    %4192 = vmatpush1.msra.mxu0 %v1700
    %4193 = vmatprep.subr.mxu0 0.0
    %4194 = vmatpush1.msra.mxu0 %v1701
    %4195 = vmatprep.subr.mxu0 0.0
    %4196 = vmatpush1.msra.mxu0 %v1702
    %4197 = vmatprep.subr.mxu0 0.0
    %4198 = vmatpush1.msra.mxu0 %v1703
    %4199 = vmatprep.subr.mxu0 0.0
    %4200 = vmatpush1.msra.mxu0 %v1704
    %4201 = vmatprep.subr.mxu0 0.0
    %4202 = vmatpush1.msra.mxu0 %v1705
    %4203 = vmatprep.subr.mxu0 0.0
    %4204 = vmatpush1.msra.mxu0 %v1706
    %4205 = vmatprep.subr.mxu0 0.0
    %4206 = vmatpush1.msra.mxu0 %v1707
    %4207 = vmatprep.subr.mxu0 0.0
    %4208 = vmatpush1.msra.mxu0 %v1708
    %4209 = vmatprep.subr.mxu0 0.0
    %4210 = vmatpush1.msra.mxu0 %v1709
    %4211 = vmatprep.subr.mxu0 0.0
    %4212 = vmatpush1.msra.mxu0 %v1710
    %4213 = vmatprep.subr.mxu0 0.0
    %4214 = vmatpush1.msra.mxu0 %v1711
    %4215 = vmatprep.subr.mxu0 0.0
    %4216 = vmatpush1.msra.mxu0 %v1712
    %4217 = vmatprep.subr.mxu0 0.0
    %4218 = vmatpush1.msra.mxu0 %v1713
    %4219 = vmatprep.subr.mxu0 0.0
    %4220 = vmatpush1.msra.mxu0 %v1714
    %4221 = vmatprep.subr.mxu0 0.0
    %4222 = vmatpush1.msra.mxu0 %v1715
    %4223 = vmatprep.subr.mxu0 0.0
    %4224 = vmatpush1.msra.mxu0 %v1716
    %4225 = vmatprep.subr.mxu0 0.0
    %4226 = vmatpush1.msra.mxu0 %v1717
    %4227 = vmatprep.subr.mxu0 0.0
    %4228 = vmatpush1.msra.mxu0 %v1718
    %4229 = vmatprep.mubr.f32.mxu0 %v2053
    %4230 = vmatmul.mubr.f32.gmra.mrb[0].mxu0 %v2051
    %v4231 = vpop.f32.mrb[0].mxu0
    %v4232 = vadd.f32 %v4162, %v4231
    %v4233 = vpop.f32.mrb[0].mxu0
    %4234 = vdwg.mxu0
    %4235 = vmatprep.subr.mxu0 0.0
    %4236 = vmatpush1.msra.mxu0 %v1719
    %4237 = vmatprep.subr.mxu0 0.0
    %4238 = vmatpush1.msra.mxu0 %v1720
    %4239 = vmatprep.subr.mxu0 0.0
    %4240 = vmatpush1.msra.mxu0 %v1721
    %4241 = vmatprep.subr.mxu0 0.0
    %4242 = vmatpush1.msra.mxu0 %v1722
    %4243 = vmatprep.subr.mxu0 0.0
    %4244 = vmatpush1.msra.mxu0 %v1723
    %4245 = vmatprep.subr.mxu0 0.0
    %4246 = vmatpush1.msra.mxu0 %v1724
    %4247 = vmatprep.subr.mxu0 0.0
    %4248 = vmatpush1.msra.mxu0 %v1725
    %4249 = vmatprep.subr.mxu0 0.0
    %4250 = vmatpush1.msra.mxu0 %v1726
    %4251 = vmatprep.subr.mxu0 0.0
    %4252 = vmatpush1.msra.mxu0 %v1727
    %4253 = vmatprep.subr.mxu0 0.0
    %4254 = vmatpush1.msra.mxu0 %v1728
    %4255 = vmatprep.subr.mxu0 0.0
    %4256 = vmatpush1.msra.mxu0 %v1729
    %4257 = vmatprep.subr.mxu0 0.0
    %4258 = vmatpush1.msra.mxu0 %v1730
    %4259 = vmatprep.subr.mxu0 0.0
    %4260 = vmatpush1.msra.mxu0 %v1731
    %4261 = vmatprep.subr.mxu0 0.0
    %4262 = vmatpush1.msra.mxu0 %v1732
    %4263 = vmatprep.subr.mxu0 0.0
    %4264 = vmatpush1.msra.mxu0 %v1733
    %4265 = vmatprep.subr.mxu0 0.0
    %4266 = vmatpush1.msra.mxu0 %v1734
    %4267 = vmatprep.subr.mxu0 0.0
    %4268 = vmatpush1.msra.mxu0 %v1735
    %4269 = vmatprep.subr.mxu0 0.0
    %4270 = vmatpush1.msra.mxu0 %v1736
    %4271 = vmatprep.subr.mxu0 0.0
    %4272 = vmatpush1.msra.mxu0 %v1737
    %4273 = vmatprep.subr.mxu0 0.0
    %4274 = vmatpush1.msra.mxu0 %v1738
    %4275 = vmatprep.subr.mxu0 0.0
    %4276 = vmatpush1.msra.mxu0 %v1739
    %4277 = vmatprep.subr.mxu0 0.0
    %4278 = vmatpush1.msra.mxu0 %v1740
    %4279 = vmatprep.subr.mxu0 0.0
    %4280 = vmatpush1.msra.mxu0 %v1741
    %4281 = vmatprep.subr.mxu0 0.0
    %4282 = vmatpush1.msra.mxu0 %v1742
    %4283 = vmatprep.subr.mxu0 0.0
    %4284 = vmatpush1.msra.mxu0 %v1743
    %4285 = vmatprep.subr.mxu0 0.0
    %4286 = vmatpush1.msra.mxu0 %v1744
    %4287 = vmatprep.subr.mxu0 0.0
    %4288 = vmatpush1.msra.mxu0 %v1745
    %4289 = vmatprep.subr.mxu0 0.0
    %4290 = vmatpush1.msra.mxu0 %v1746
    %4291 = vmatprep.subr.mxu0 0.0
    %4292 = vmatpush1.msra.mxu0 %v1747
    %4293 = vmatprep.subr.mxu0 0.0
    %4294 = vmatpush1.msra.mxu0 %v1748
    %4295 = vmatprep.subr.mxu0 0.0
    %4296 = vmatpush1.msra.mxu0 %v1749
    %4297 = vmatprep.subr.mxu0 0.0
    %4298 = vmatpush1.msra.mxu0 %v1750
    %4299 = vmatprep.mubr.f32.mxu0 %v2069
    %4300 = vmatmul.mubr.f32.gmra.mrb[0].mxu0 %v2061
    %v4301 = vpop.f32.mrb[0].mxu0
    %v4302 = vadd.f32 %v4232, %v4301
    %v4303 = vpop.f32.mrb[0].mxu0
    %4304 = vdwg.mxu0
    %4305 = vmatprep.subr.mxu0 0.0
    %4306 = vmatpush1.msra.mxu0 %v1751
    %4307 = vmatprep.subr.mxu0 0.0
    %4308 = vmatpush1.msra.mxu0 %v1752
    %4309 = vmatprep.subr.mxu0 0.0
    %4310 = vmatpush1.msra.mxu0 %v1753
    %4311 = vmatprep.subr.mxu0 0.0
    %4312 = vmatpush1.msra.mxu0 %v1754
    %4313 = vmatprep.subr.mxu0 0.0
    %4314 = vmatpush1.msra.mxu0 %v1755
    %4315 = vmatprep.subr.mxu0 0.0
    %4316 = vmatpush1.msra.mxu0 %v1756
    %4317 = vmatprep.subr.mxu0 0.0
    %4318 = vmatpush1.msra.mxu0 %v1757
    %4319 = vmatprep.subr.mxu0 0.0
    %4320 = vmatpush1.msra.mxu0 %v1758
    %4321 = vmatprep.subr.mxu0 0.0
    %4322 = vmatpush1.msra.mxu0 %v1759
    %4323 = vmatprep.subr.mxu0 0.0
    %4324 = vmatpush1.msra.mxu0 %v1760
    %4325 = vmatprep.subr.mxu0 0.0
    %4326 = vmatpush1.msra.mxu0 %v1761
    %4327 = vmatprep.subr.mxu0 0.0
    %4328 = vmatpush1.msra.mxu0 %v1762
    %4329 = vmatprep.subr.mxu0 0.0
    %4330 = vmatpush1.msra.mxu0 %v1763
    %4331 = vmatprep.subr.mxu0 0.0
    %4332 = vmatpush1.msra.mxu0 %v1764
    %4333 = vmatprep.subr.mxu0 0.0
    %4334 = vmatpush1.msra.mxu0 %v1765
    %4335 = vmatprep.subr.mxu0 0.0
    %4336 = vmatpush1.msra.mxu0 %v1766
    %4337 = vmatprep.subr.mxu0 0.0
    %4338 = vmatpush1.msra.mxu0 %v1767
    %4339 = vmatprep.subr.mxu0 0.0
    %4340 = vmatpush1.msra.mxu0 %v1768
    %4341 = vmatprep.subr.mxu0 0.0
    %4342 = vmatpush1.msra.mxu0 %v1769
    %4343 = vmatprep.subr.mxu0 0.0
    %4344 = vmatpush1.msra.mxu0 %v1770
    %4345 = vmatprep.subr.mxu0 0.0
    %4346 = vmatpush1.msra.mxu0 %v1771
    %4347 = vmatprep.subr.mxu0 0.0
    %4348 = vmatpush1.msra.mxu0 %v1772
    %4349 = vmatprep.subr.mxu0 0.0
    %4350 = vmatpush1.msra.mxu0 %v1773
    %4351 = vmatprep.subr.mxu0 0.0
    %4352 = vmatpush1.msra.mxu0 %v1774
    %4353 = vmatprep.subr.mxu0 0.0
    %4354 = vmatpush1.msra.mxu0 %v1775
    %4355 = vmatprep.subr.mxu0 0.0
    %4356 = vmatpush1.msra.mxu0 %v1776
    %4357 = vmatprep.subr.mxu0 0.0
    %4358 = vmatpush1.msra.mxu0 %v1777
    %4359 = vmatprep.subr.mxu0 0.0
    %4360 = vmatpush1.msra.mxu0 %v1778
    %4361 = vmatprep.subr.mxu0 0.0
    %4362 = vmatpush1.msra.mxu0 %v1779
    %4363 = vmatprep.subr.mxu0 0.0
    %4364 = vmatpush1.msra.mxu0 %v1780
    %4365 = vmatprep.subr.mxu0 0.0
    %4366 = vmatpush1.msra.mxu0 %v1781
    %4367 = vmatprep.subr.mxu0 0.0
    %4368 = vmatpush1.msra.mxu0 %v1782
    %4369 = vmatprep.mubr.f32.mxu0 %v2070
    %4370 = vmatmul.mubr.f32.gmra.mrb[0].mxu0 %v2068
    %v4371 = vpop.f32.mrb[0].mxu0
    %v4372 = vadd.f32 %v4302, %v4371
    %v4373 = vpop.f32.mrb[0].mxu0
    %4374 = vdwg.mxu0
    %4375 = vst [vmem:[#allocation16] sm:$0x3] %v4372
    %4377 = vrot.lane.b32.xlu0 %v4372, 96
    %v4378 = vpop.permute.xlu0 %4377
    %v4380 = vadd.f32 %v4372, %v4378
    %4381 = vrot.lane.b32.xlu0 %v4372, 64
    %v4382 = vpop.permute.xlu0 %4381
    %v4384 = vadd.f32 %v4380, %v4382
    %4385 = vrot.lane.b32.xlu0 %v4372, 32
    %v4386 = vpop.permute.xlu0 %4385
    %v4388 = vadd.f32 %v4384, %v4386
    %v4389 = vmul.f32 %v4388, 0.25
    %v4390 = vld [vmem:[#allocation12] sm:$0xff]
    %v4391 = vld [vmem:[#allocation12 + $0x8] sm:$0xff]
    %v4392 = vld [vmem:[#allocation12 + $0x10] sm:$0xff]
    %v4393 = vld [vmem:[#allocation12 + $0x18] sm:$0xff]
    %v4394 = vld [vmem:[#allocation13] sm:$0x1]
    %v4396 = vlaneseq
    %v4397 = vshrl.u32 %v4396, 7
    %v4398 = vsub.s32 0, %v4397
    %v4399 = vrot.slane %v4394, %v4398
    %vm4401 = vcmask 261120
    %v4403 = vsel %vm4401, %v4389, 0
    %4405 = vmatprep.subr.mxu0 0.0
    %4406 = vmatpush1.msra.mxu0 %v4390
    %4407 = vmatprep.subr.mxu0 0.0
    %4408 = vmatpush1.msra.mxu0 %v4391
    %4409 = vmatprep.subr.mxu0 0.0
    %4410 = vmatpush1.msra.mxu0 %v4392
    %4411 = vmatprep.subr.mxu0 0.0
    %4412 = vmatpush1.msra.mxu0 %v4393
    %4413 = vmatprep.subr.mxu0 0.0
    %4414 = vmatpush1.msra.mxu0 0.0
    %4415 = vmatprep.subr.mxu0 0.0
    %4416 = vmatpush1.msra.mxu0 0.0
    %4417 = vmatprep.subr.mxu0 0.0
    %4418 = vmatpush1.msra.mxu0 0.0
    %4419 = vmatprep.subr.mxu0 0.0
    %4420 = vmatpush1.msra.mxu0 0.0
    %4421 = vmatprep.subr.mxu0 0.0
    %4422 = vmatpush1.msra.mxu0 0.0
    %4423 = vmatprep.subr.mxu0 0.0
    %4424 = vmatpush1.msra.mxu0 0.0
    %4425 = vmatprep.subr.mxu0 0.0
    %4426 = vmatpush1.msra.mxu0 0.0
    %4427 = vmatprep.subr.mxu0 0.0
    %4428 = vmatpush1.msra.mxu0 0.0
    %4429 = vmatprep.subr.mxu0 0.0
    %4430 = vmatpush1.msra.mxu0 0.0
    %4431 = vmatprep.subr.mxu0 0.0
    %4432 = vmatpush1.msra.mxu0 0.0
    %4433 = vmatprep.subr.mxu0 0.0
    %4434 = vmatpush1.msra.mxu0 0.0
    %4435 = vmatprep.subr.mxu0 0.0
    %4436 = vmatpush1.msra.mxu0 0.0
    %4437 = vmatprep.subr.mxu0 0.0
    %4438 = vmatpush1.msra.mxu0 0.0
    %4439 = vmatprep.subr.mxu0 0.0
    %4440 = vmatpush1.msra.mxu0 0.0
    %4441 = vmatprep.subr.mxu0 0.0
    %4442 = vmatpush1.msra.mxu0 0.0
    %4443 = vmatprep.subr.mxu0 0.0
    %4444 = vmatpush1.msra.mxu0 0.0
    %4445 = vmatprep.subr.mxu0 0.0
    %4446 = vmatpush1.msra.mxu0 0.0
    %4447 = vmatprep.subr.mxu0 0.0
    %4448 = vmatpush1.msra.mxu0 0.0
    %4449 = vmatprep.subr.mxu0 0.0
    %4450 = vmatpush1.msra.mxu0 0.0
    %4451 = vmatprep.subr.mxu0 0.0
    %4452 = vmatpush1.msra.mxu0 0.0
    %4453 = vmatprep.subr.mxu0 0.0
    %4454 = vmatpush1.msra.mxu0 0.0
    %4455 = vmatprep.subr.mxu0 0.0
    %4456 = vmatpush1.msra.mxu0 0.0
    %4457 = vmatprep.subr.mxu0 0.0
    %4458 = vmatpush1.msra.mxu0 0.0
    %4459 = vmatprep.subr.mxu0 0.0
    %4460 = vmatpush1.msra.mxu0 0.0
    %4461 = vmatprep.subr.mxu0 0.0
    %4462 = vmatpush1.msra.mxu0 0.0
    %4463 = vmatprep.subr.mxu0 0.0
    %4464 = vmatpush1.msra.mxu0 0.0
    %4465 = vmatprep.subr.mxu0 0.0
    %4466 = vmatpush1.msra.mxu0 0.0
    %4467 = vmatprep.subr.mxu0 0.0
    %4468 = vmatpush1.msra.mxu0 0.0
    %4469 = vmatprep.mubr.f32.mxu0 0.0
    %4470 = vmatmul.mubr.f32.gmra.mrb[0].mxu0 %v4403
    %v4471 = vpop.f32.mrb[0].mxu0
    %v4472 = vadd.f32 %v4399, %v4471
    %v4473 = vpop.f32.mrb[0].mxu0
    %4474 = vdwg.mxu0
    %v4475 = vlaneseq
    %v4476 = vand.u32 %v4475, 127
    %vm4477 = vcmp.ge.s32.totalorder %v4476, 5
    %vm4478 = vcmp.lt.s32.totalorder %v4476, 21
    %vm4479 = vmand %vm4477, %vm4478
    %v4480 = vtanh.pop %v4472
    %v4481 = vsel %vm4479, %v4480, %v4472
    %4482 = vst [vmem:[#allocation15] sm:$0x3] %v4481
    // Predicated region
    $region50: #{tpu_custom_call.1} parent=1 // pred_check
      _
    $region51: #{tpu_custom_call.1} parent=1 // pred_check_branch
      %4484 = sbr.rel (0) target = $region53
    $region52: #{tpu_custom_call.1} parent=1 // pred_region
      %s4486 = ssub.s32 32, 32
      %4487 = vsyncadd [#allocation5], %s4486
      %s4489 = sshll.u32 [#allocation15], 4
      %s4490 = int_to_ptr.vmem [resolvable:$true] %s4489
      %4492 = dma.vmem_to_hbm [thread:$0]  %s4490, 32, %s6, [#allocation5]
    $region53: #{tpu_custom_call.1} parent=1 // pred_fallthru
      _
    // Predicated region
    $region54: #{tpu_custom_call.1} parent=1 // pred_check
      _
    $region55: #{tpu_custom_call.1} parent=1 // pred_check_branch
      %4494 = sbr.rel (0) target = $region57
    $region56: #{tpu_custom_call.1} parent=1 // pred_region
      %s4496 = ssub.s32 32, 32
      %4497 = vsyncadd [#allocation17], %s4496
      %s4499 = sshll.u32 [#allocation16], 4
      %s4500 = int_to_ptr.vmem [resolvable:$true] %s4499
      %4502 = dma.vmem_to_hbm [thread:$0]  %s4500, 32, %s7, [#allocation17]
    $region57: #{tpu_custom_call.1} parent=1 // pred_fallthru
      _
    // Predicated region
    $region58: #{tpu_custom_call.1} parent=1 // pred_check
      _
    $region59: #{tpu_custom_call.1} parent=1 // pred_check_branch
      %4504 = sbr.rel (0) target = $region61
    $region60: #{tpu_custom_call.1} parent=1 // pred_region
      %4505 = dma.done [#allocation5], 32
    $region61: #{tpu_custom_call.1} parent=1 // pred_fallthru
      _
    // Predicated region
    $region62: #{tpu_custom_call.1} parent=1 // pred_check
      _
    $region63: #{tpu_custom_call.1} parent=1 // pred_check_branch
      %4507 = sbr.rel (0) target = $region65
    $region64: #{tpu_custom_call.1} parent=1 // pred_region
      %4508 = dma.done [#allocation17], 32
    $region65: #{tpu_custom_call.1} parent=1 // pred_fallthru
      _
    %4509 = vsyncpa [#allocation4], 1
    %4510 = vsyncpa [#allocation11], 1
    %4511 = vsyncpa [#allocation14], 1
    %4512 = vsyncpa [#allocation5], 1
    %4513 = vsyncpa [#allocation17], 1
    %4514 = vsyncpa [#allocation6], 1
    %4515 = vsyncpa [#allocation8], 1

</llo_original>
